<compile_context>
chip_gen: v5e
topology: v5e:2x2
jax: 0.10.0
libtpu: 0.0.40
codegen_flags: <defaults>
</compile_context>

<pallas_src>
import functools

import jax
import jax.numpy as jnp
from jax.experimental import pallas as pl
from jax.experimental.pallas import tpu as pltpu

LANES = 128
SUB = 8


def _align8(n):
    return ((n + SUB - 1) // SUB) * SUB


def _slab_layout(n_features, n_input, hidden):
    """Row offsets of every operand inside the packed (rows, 128) weight slab.
    Every block starts on a sublane (8-row) boundary so in-kernel row slices are aligned."""
    off = 0
    lay = {}

    def take(name, rows):
        nonlocal off
        lay[name] = off
        off = _align8(off + rows)

    take("cw", n_features)   # compression weight (F, n_input)
    take("cb", 1)            # compression bias
    take("wi0", n_input)     # layer-0 input weights (I, 3H)
    take("bi0", 1)           # combined r|z|n input+hidden biases (b_hn excluded)
    take("wh0", hidden)      # layer-0 recurrent weights (H, 3H)
    take("wi1", hidden)
    take("bi1", 1)
    take("wh1", hidden)
    take("wi2", hidden)
    take("bi2", 1)
    take("wh2", hidden)
    take("bhn", 3)           # b_hn of layers 0,1,2 (one row each)
    take("rw", hidden)       # reconstruction weight (H, F), lane-padded to 128
    take("rb", 1)            # reconstruction bias, lane-padded to 128
    lay["rows"] = off
    return lay


# ------------------------------ Fused kernel -------------------------------
def _fused_rnn_kernel(T, Bp, F, n_input, H, lay, x_ref, w_ref, o_ref):
    f32 = jnp.float32
    H3 = 3 * H

    def wrow(name, rows):
        s = lay[name]
        return w_ref[s:s + rows, :]          # aligned row slice, full 128 lanes

    # ---------------- upfront work (off the recurrent critical path) --------
    # compression Linear: (T*Bp, F) @ (F, n_input) + b
    cw = wrow("cw", F)[:, :n_input]
    cb = wrow("cb", 1)[:, :n_input]
    comp = jnp.dot(x_ref[...], cw, preferred_element_type=f32) + cb      # (T*Bp, I)

    # layer-0 input projection hoisted for ALL timesteps: (T*Bp, 128), cols >= 3H are 0.
    g_in0 = (jnp.dot(comp, wrow("wi0", n_input), preferred_element_type=f32)
             + wrow("bi0", 1))

    # hoisted bias broadcasts (broadcast_in_dim is not CSE'd by JAX)
    bi1_b = jnp.broadcast_to(wrow("bi1", 1), (Bp, LANES))
    bi2_b = jnp.broadcast_to(wrow("bi2", 1), (Bp, LANES))
    bhn = wrow("bhn", 3)[:, :H]
    bhn_b = [jnp.broadcast_to(bhn[l:l + 1, :], (Bp, H)) for l in range(3)]
    rb_b = jnp.broadcast_to(wrow("rb", 1), (Bp, LANES))

    def cell(gx, gh, bhn_l, h_prev):
        # gx already contains b_ir+b_hr | b_iz+b_hz | b_in ; gh has no biases.
        rz = jax.nn.sigmoid(gx[:, :2 * H] + gh[:, :2 * H])   # fused r|z sigmoid
        r, z = rz[:, :H], rz[:, H:2 * H]
        n = jnp.tanh(gx[:, 2 * H:H3] + r * (gh[:, 2 * H:H3] + bhn_l))
        return (1.0 - z) * n + z * h_prev

    h0 = jnp.zeros((Bp, H), f32)
    h1 = jnp.zeros((Bp, H), f32)
    h2 = jnp.zeros((Bp, H), f32)

    # ---------------- wavefront over the 3 stacked GRU layers ---------------
    # Super-step s: layer l processes timestep t = s - l.  Serial depth is T+2.
    for s in range(T + 2):
        act0 = s < T
        act1 = 1 <= s <= T
        act2 = 2 <= s <= T + 1

        # All matmuls of this super-step depend only on last super-step's states
        # and are mutually independent -> the scheduler can interleave the MXU pushes.
        if act0:
            gh0 = jnp.dot(h0, wrow("wh0", H), preferred_element_type=f32)
        if act1:
            gx1 = jnp.dot(h0, wrow("wi1", H), preferred_element_type=f32)
            gh1 = jnp.dot(h1, wrow("wh1", H), preferred_element_type=f32)
        if act2:
            gx2 = jnp.dot(h1, wrow("wi2", H), preferred_element_type=f32)
            gh2 = jnp.dot(h2, wrow("wh2", H), preferred_element_type=f32)

        n0, n1, n2 = h0, h1, h2
        if act0:
            n0 = cell(g_in0[s * Bp:(s + 1) * Bp, :], gh0, bhn_b[0], h0)
        if act1:
            n1 = cell(gx1 + bi1_b, gh1, bhn_b[1], h1)
        if act2:
            n2 = cell(gx2 + bi2_b, gh2, bhn_b[2], h2)
            t = s - 2
            # reconstruction Linear applied per finished timestep; lane-dense
            # aligned (Bp, 128) store, nothing downstream depends on it.
            o_ref[t * Bp:(t + 1) * Bp, :] = (
                jnp.dot(n2, wrow("rw", H), preferred_element_type=f32) + rb_b)
        h0, h1, h2 = n0, n1, n2


# ------------------------------ Wrapper -------------------------------------
def simple_rnn_forward(x, params):
    """x: (T, B, n_features) f32 -> (T, B, n_features) f32."""
    T, B, F = x.shape
    comp_w, comp_b = params["compression"]
    rec_w, rec_b = params["reconstruction"]
    n_input = comp_w.shape[1]
    H = params["gru_layers"][0]["w_hr"].shape[0]
    H3 = 3 * H
    Bp = _align8(B)                       # pad batch to one full sublane group
    lay = _slab_layout(F, n_input, H)

    # ---- pack ALL weights/biases into one lane-padded slab (single DMA) ----
    W = jnp.zeros((lay["rows"], LANES), jnp.float32)
    W = W.at[lay["cw"]:lay["cw"] + F, :n_input].set(comp_w)
    W = W.at[lay["cb"], :n_input].set(comp_b)
    for l, p in enumerate(params["gru_layers"]):
        wi = jnp.concatenate([p["w_ir"], p["w_iz"], p["w_in"]], axis=1)   # (I, 3H)
        wh = jnp.concatenate([p["w_hr"], p["w_hz"], p["w_hn"]], axis=1)   # (H, 3H)
        bi = jnp.concatenate([p["b_ir"] + p["b_hr"],
                              p["b_iz"] + p["b_hz"],
                              p["b_in"]])                                 # (3H,)
        I = wi.shape[0]
        W = W.at[lay[f"wi{l}"]:lay[f"wi{l}"] + I, :H3].set(wi)
        W = W.at[lay[f"bi{l}"], :H3].set(bi)
        W = W.at[lay[f"wh{l}"]:lay[f"wh{l}"] + H, :H3].set(wh)
        W = W.at[lay["bhn"] + l, :H].set(p["b_hn"])
    W = W.at[lay["rw"]:lay["rw"] + H, :F].set(rec_w)
    W = W.at[lay["rb"], :F].set(rec_b)

    # batch pad + flatten time-major: each timestep occupies 8 aligned sublanes
    xp = jnp.zeros((T, Bp, F), jnp.float32).at[:, :B, :].set(x)
    xp = xp.reshape(T * Bp, F)

    kernel = functools.partial(_fused_rnn_kernel, T, Bp, F, n_input, H, lay)
    out = pl.pallas_call(
        kernel,
        out_shape=jax.ShapeDtypeStruct((T * Bp, LANES), jnp.float32),
        grid=(1,),
        in_specs=[
            pl.BlockSpec((T * Bp, F), lambda i: (0, 0)),
            pl.BlockSpec((lay["rows"], LANES), lambda i: (0, 0)),
        ],
        out_specs=pl.BlockSpec((T * Bp, LANES), lambda i: (0, 0)),
        compiler_params=pltpu.CompilerParams(
            dimension_semantics=("arbitrary",)),
    )(xp, W)
    # drop batch padding and lane padding
    return out.reshape(T, Bp, LANES)[:, :B, :F]


# ------------------------------ Parameter init ------------------------------
def init_linear_params(key, in_dim, out_dim):
    k1, k2 = jax.random.split(key)
    bound = 1.0 / jnp.sqrt(in_dim)
    w = jax.random.uniform(k1, (in_dim, out_dim), jnp.float32, -bound, bound)
    b = jax.random.uniform(k2, (out_dim,), jnp.float32, -bound, bound)
    return w, b


def init_gru_layer_params(key, in_dim, hidden):
    keys = jax.random.split(key, 12)
    bound = 1.0 / jnp.sqrt(hidden)

    def u(k, shape):
        return jax.random.uniform(k, shape, jnp.float32, -bound, bound)

    return {
        "w_ir": u(keys[0], (in_dim, hidden)),
        "w_iz": u(keys[1], (in_dim, hidden)),
        "w_in": u(keys[2], (in_dim, hidden)),
        "w_hr": u(keys[3], (hidden, hidden)),
        "w_hz": u(keys[4], (hidden, hidden)),
        "w_hn": u(keys[5], (hidden, hidden)),
        "b_ir": u(keys[6], (hidden,)),
        "b_iz": u(keys[7], (hidden,)),
        "b_in": u(keys[8], (hidden,)),
        "b_hr": u(keys[9], (hidden,)),
        "b_hz": u(keys[10], (hidden,)),
        "b_hn": u(keys[11], (hidden,)),
    }


# ------------------------------ Pure-JAX reference --------------------------
def ref_forward(x, params):
    T, B, F = x.shape
    comp_w, comp_b = params["compression"]
    h = x @ comp_w + comp_b
    for p in params["gru_layers"]:
        H = p["w_hr"].shape[0]
        hs = []
        ht = jnp.zeros((B, H), jnp.float32)
        for t in range(T):
            xt = h[t]
            r = jax.nn.sigmoid(xt @ p["w_ir"] + p["b_ir"] + ht @ p["w_hr"] + p["b_hr"])
            z = jax.nn.sigmoid(xt @ p["w_iz"] + p["b_iz"] + ht @ p["w_hz"] + p["b_hz"])
            n = jnp.tanh(xt @ p["w_in"] + p["b_in"] + r * (ht @ p["w_hn"] + p["b_hn"]))
            ht = (1.0 - z) * n + z * ht
            hs.append(ht)
        h = jnp.stack(hs, axis=0)
    rec_w, rec_b = params["reconstruction"]
    return h @ rec_w + rec_b


if __name__ == "__main__":
    # config-equivalent: n_features=16, compression_factor=2 -> n_input=8, n_hidden=32
    T, B = 8, 2
    n_features = 16
    n_input = 8
    n_hidden = 32

    key = jax.random.PRNGKey(0)
    k_x, k_c, k_g0, k_g1, k_g2, k_r = jax.random.split(key, 6)

    x = jax.random.normal(k_x, (T, B, n_features), jnp.float32)

    params = {
        "compression": init_linear_params(k_c, n_features, n_input),
        "gru_layers": [
            init_gru_layer_params(k_g0, n_input, n_hidden),
            init_gru_layer_params(k_g1, n_hidden, n_hidden),
            init_gru_layer_params(k_g2, n_hidden, n_hidden),
        ],
        "reconstruction": init_linear_params(k_r, n_hidden, n_features),
    }

    out = simple_rnn_forward(x, params)
    out = jax.block_until_ready(out)

    ref = ref_forward(x, params)
    assert out.shape == (T, B, n_features)
    assert float(jnp.max(jnp.abs(out - ref))) < 5e-4, "mismatch vs pure-JAX reference"

    print("KERNEL_OK")
</pallas_src>

<mosaic_0001>
module attributes {stable_mosaic.version = 11 : i64} {
  func.func @_fused_rnn_kernel(%arg0: i32, %arg1: memref<64x16xf32, #tpu.memory_space<vmem>>, %arg2: memref<264x128xf32, #tpu.memory_space<vmem>>, %arg3: memref<64x128xf32, #tpu.memory_space<vmem>>) attributes {dimension_semantics = [#tpu.dimension_semantics<arbitrary>], iteration_bounds = array<i64: 1>, scalar_prefetch = 0 : i64, scratch_operands = 0 : i64, tpu.core_type = #tpu.core_type<tc>, window_params = [{pipeline_mode = #tpu.pipeline_mode<synchronous>, transform_indices = @transform_0, window_bounds = array<i64: 64, 16>}, {pipeline_mode = #tpu.pipeline_mode<synchronous>, transform_indices = @transform_1, window_bounds = array<i64: 264, 128>}, {pipeline_mode = #tpu.pipeline_mode<synchronous>, transform_indices = @transform_2, window_bounds = array<i64: 64, 128>}]} {
    %c0 = arith.constant 0 : index
    %c0_0 = arith.constant 0 : index
    %0 = vector.load %arg2[%c0, %c0_0] : memref<264x128xf32, #tpu.memory_space<vmem>>, vector<16x128xf32>
    %1 = vector.extract_strided_slice %0 {offsets = [0, 0], sizes = [16, 8], strides = [1, 1]} : vector<16x128xf32> to vector<16x8xf32>
    %c16 = arith.constant 16 : index
    %c0_1 = arith.constant 0 : index
    %2 = vector.load %arg2[%c16, %c0_1] : memref<264x128xf32, #tpu.memory_space<vmem>>, vector<1x128xf32>
    %3 = vector.extract_strided_slice %2 {offsets = [0, 0], sizes = [1, 8], strides = [1, 1]} : vector<1x128xf32> to vector<1x8xf32>
    %c0_2 = arith.constant 0 : index
    %c0_3 = arith.constant 0 : index
    %4 = vector.load %arg1[%c0_2, %c0_3] : memref<64x16xf32, #tpu.memory_space<vmem>>, vector<64x16xf32>
    %cst = arith.constant dense<0.000000e+00> : vector<64x8xf32>
    %5 = tpu.matmul %4, %1, %cst {dimension_numbers = #tpu.dot_dimension_numbers<[1], [0], [0], [1], [0, 0, 1, 1], [], []>} : vector<64x16xf32>, vector<16x8xf32>, vector<64x8xf32> -> vector<64x8xf32>
    %6 = vector.broadcast %3 : vector<1x8xf32> to vector<64x8xf32>
    %7 = arith.addf %5, %6 : vector<64x8xf32>
    %c24 = arith.constant 24 : index
    %c0_4 = arith.constant 0 : index
    %8 = vector.load %arg2[%c24, %c0_4] : memref<264x128xf32, #tpu.memory_space<vmem>>, vector<8x128xf32>
    %cst_5 = arith.constant dense<0.000000e+00> : vector<64x128xf32>
    %9 = tpu.matmul %7, %8, %cst_5 {dimension_numbers = #tpu.dot_dimension_numbers<[1], [0], [0], [1], [0, 0, 1, 1], [], []>} : vector<64x8xf32>, vector<8x128xf32>, vector<64x128xf32> -> vector<64x128xf32>
    %c32 = arith.constant 32 : index
    %c0_6 = arith.constant 0 : index
    %10 = vector.load %arg2[%c32, %c0_6] : memref<264x128xf32, #tpu.memory_space<vmem>>, vector<1x128xf32>
    %11 = vector.broadcast %10 : vector<1x128xf32> to vector<64x128xf32>
    %12 = arith.addf %9, %11 : vector<64x128xf32>
    %c104 = arith.constant 104 : index
    %c0_7 = arith.constant 0 : index
    %13 = vector.load %arg2[%c104, %c0_7] : memref<264x128xf32, #tpu.memory_space<vmem>>, vector<1x128xf32>
    %14 = vector.shape_cast %13 : vector<1x128xf32> to vector<1x128xf32>
    %15 = vector.broadcast %14 : vector<1x128xf32> to vector<8x128xf32>
    %c176 = arith.constant 176 : index
    %c0_8 = arith.constant 0 : index
    %16 = vector.load %arg2[%c176, %c0_8] : memref<264x128xf32, #tpu.memory_space<vmem>>, vector<1x128xf32>
    %17 = vector.shape_cast %16 : vector<1x128xf32> to vector<1x128xf32>
    %18 = vector.broadcast %17 : vector<1x128xf32> to vector<8x128xf32>
    %c216 = arith.constant 216 : index
    %c0_9 = arith.constant 0 : index
    %19 = vector.load %arg2[%c216, %c0_9] : memref<264x128xf32, #tpu.memory_space<vmem>>, vector<3x128xf32>
    %20 = vector.extract_strided_slice %19 {offsets = [0, 0], sizes = [3, 32], strides = [1, 1]} : vector<3x128xf32> to vector<3x32xf32>
    %21 = vector.extract_strided_slice %20 {offsets = [0, 0], sizes = [1, 32], strides = [1, 1]} : vector<3x32xf32> to vector<1x32xf32>
    %22 = vector.shape_cast %21 : vector<1x32xf32> to vector<1x32xf32>
    %23 = vector.broadcast %22 : vector<1x32xf32> to vector<8x32xf32>
    %24 = vector.extract_strided_slice %20 {offsets = [1, 0], sizes = [1, 32], strides = [1, 1]} : vector<3x32xf32> to vector<1x32xf32>
    %25 = vector.shape_cast %24 : vector<1x32xf32> to vector<1x32xf32>
    %26 = vector.broadcast %25 : vector<1x32xf32> to vector<8x32xf32>
    %27 = vector.extract_strided_slice %20 {offsets = [2, 0], sizes = [1, 32], strides = [1, 1]} : vector<3x32xf32> to vector<1x32xf32>
    %28 = vector.shape_cast %27 : vector<1x32xf32> to vector<1x32xf32>
    %29 = vector.broadcast %28 : vector<1x32xf32> to vector<8x32xf32>
    %c256 = arith.constant 256 : index
    %c0_10 = arith.constant 0 : index
    %30 = vector.load %arg2[%c256, %c0_10] : memref<264x128xf32, #tpu.memory_space<vmem>>, vector<1x128xf32>
    %31 = vector.shape_cast %30 : vector<1x128xf32> to vector<1x128xf32>
    %32 = vector.broadcast %31 : vector<1x128xf32> to vector<8x128xf32>
    %cst_11 = arith.constant 0.000000e+00 : f32
    %33 = vector.broadcast %cst_11 : f32 to vector<8x32xf32>
    %cst_12 = arith.constant 0.000000e+00 : f32
    %34 = vector.broadcast %cst_12 : f32 to vector<8x32xf32>
    %cst_13 = arith.constant 0.000000e+00 : f32
    %35 = vector.broadcast %cst_13 : f32 to vector<8x32xf32>
    %c40 = arith.constant 40 : index
    %c0_14 = arith.constant 0 : index
    %36 = vector.load %arg2[%c40, %c0_14] : memref<264x128xf32, #tpu.memory_space<vmem>>, vector<32x128xf32>
    %cst_15 = arith.constant dense<0.000000e+00> : vector<8x128xf32>
    %37 = tpu.matmul %33, %36, %cst_15 {dimension_numbers = #tpu.dot_dimension_numbers<[1], [0], [0], [1], [0, 0, 1, 1], [], []>} : vector<8x32xf32>, vector<32x128xf32>, vector<8x128xf32> -> vector<8x128xf32>
    %38 = vector.extract_strided_slice %12 {offsets = [0, 0], sizes = [8, 128], strides = [1, 1]} : vector<64x128xf32> to vector<8x128xf32>
    %39 = vector.extract_strided_slice %38 {offsets = [0, 0], sizes = [8, 64], strides = [1, 1]} : vector<8x128xf32> to vector<8x64xf32>
    %40 = vector.extract_strided_slice %37 {offsets = [0, 0], sizes = [8, 64], strides = [1, 1]} : vector<8x128xf32> to vector<8x64xf32>
    %41 = arith.addf %39, %40 : vector<8x64xf32>
    %42 = arith.negf %41 : vector<8x64xf32>
    %43 = math.exp %42 : vector<8x64xf32>
    %cst_16 = arith.constant 1.000000e+00 : f32
    %44 = vector.broadcast %cst_16 : f32 to vector<8x64xf32>
    %45 = arith.addf %44, %43 : vector<8x64xf32>
    %46 = arith.divf %44, %45 : vector<8x64xf32>
    %47 = vector.extract_strided_slice %46 {offsets = [0, 0], sizes = [8, 32], strides = [1, 1]} : vector<8x64xf32> to vector<8x32xf32>
    %48 = vector.extract_strided_slice %46 {offsets = [0, 32], sizes = [8, 32], strides = [1, 1]} : vector<8x64xf32> to vector<8x32xf32>
    %49 = vector.extract_strided_slice %38 {offsets = [0, 64], sizes = [8, 32], strides = [1, 1]} : vector<8x128xf32> to vector<8x32xf32>
    %50 = vector.extract_strided_slice %37 {offsets = [0, 64], sizes = [8, 32], strides = [1, 1]} : vector<8x128xf32> to vector<8x32xf32>
    %51 = arith.addf %50, %23 : vector<8x32xf32>
    %52 = arith.mulf %47, %51 : vector<8x32xf32>
    %53 = arith.addf %49, %52 : vector<8x32xf32>
    %54 = math.tanh %53 : vector<8x32xf32>
    %cst_17 = arith.constant 1.000000e+00 : f32
    %55 = vector.broadcast %cst_17 : f32 to vector<8x32xf32>
    %56 = arith.subf %55, %48 : vector<8x32xf32>
    %57 = arith.mulf %56, %54 : vector<8x32xf32>
    %58 = arith.mulf %48, %33 : vector<8x32xf32>
    %59 = arith.addf %57, %58 : vector<8x32xf32>
    %c40_18 = arith.constant 40 : index
    %c0_19 = arith.constant 0 : index
    %60 = vector.load %arg2[%c40_18, %c0_19] : memref<264x128xf32, #tpu.memory_space<vmem>>, vector<32x128xf32>
    %cst_20 = arith.constant dense<0.000000e+00> : vector<8x128xf32>
    %61 = tpu.matmul %59, %60, %cst_20 {dimension_numbers = #tpu.dot_dimension_numbers<[1], [0], [0], [1], [0, 0, 1, 1], [], []>} : vector<8x32xf32>, vector<32x128xf32>, vector<8x128xf32> -> vector<8x128xf32>
    %c72 = arith.constant 72 : index
    %c0_21 = arith.constant 0 : index
    %62 = vector.load %arg2[%c72, %c0_21] : memref<264x128xf32, #tpu.memory_space<vmem>>, vector<32x128xf32>
    %cst_22 = arith.constant dense<0.000000e+00> : vector<8x128xf32>
    %63 = tpu.matmul %59, %62, %cst_22 {dimension_numbers = #tpu.dot_dimension_numbers<[1], [0], [0], [1], [0, 0, 1, 1], [], []>} : vector<8x32xf32>, vector<32x128xf32>, vector<8x128xf32> -> vector<8x128xf32>
    %c112 = arith.constant 112 : index
    %c0_23 = arith.constant 0 : index
    %64 = vector.load %arg2[%c112, %c0_23] : memref<264x128xf32, #tpu.memory_space<vmem>>, vector<32x128xf32>
    %cst_24 = arith.constant dense<0.000000e+00> : vector<8x128xf32>
    %65 = tpu.matmul %34, %64, %cst_24 {dimension_numbers = #tpu.dot_dimension_numbers<[1], [0], [0], [1], [0, 0, 1, 1], [], []>} : vector<8x32xf32>, vector<32x128xf32>, vector<8x128xf32> -> vector<8x128xf32>
    %66 = vector.extract_strided_slice %12 {offsets = [8, 0], sizes = [8, 128], strides = [1, 1]} : vector<64x128xf32> to vector<8x128xf32>
    %67 = vector.extract_strided_slice %66 {offsets = [0, 0], sizes = [8, 64], strides = [1, 1]} : vector<8x128xf32> to vector<8x64xf32>
    %68 = vector.extract_strided_slice %61 {offsets = [0, 0], sizes = [8, 64], strides = [1, 1]} : vector<8x128xf32> to vector<8x64xf32>
    %69 = arith.addf %67, %68 : vector<8x64xf32>
    %70 = arith.negf %69 : vector<8x64xf32>
    %71 = math.exp %70 : vector<8x64xf32>
    %cst_25 = arith.constant 1.000000e+00 : f32
    %72 = vector.broadcast %cst_25 : f32 to vector<8x64xf32>
    %73 = arith.addf %72, %71 : vector<8x64xf32>
    %74 = arith.divf %72, %73 : vector<8x64xf32>
    %75 = vector.extract_strided_slice %74 {offsets = [0, 0], sizes = [8, 32], strides = [1, 1]} : vector<8x64xf32> to vector<8x32xf32>
    %76 = vector.extract_strided_slice %74 {offsets = [0, 32], sizes = [8, 32], strides = [1, 1]} : vector<8x64xf32> to vector<8x32xf32>
    %77 = vector.extract_strided_slice %66 {offsets = [0, 64], sizes = [8, 32], strides = [1, 1]} : vector<8x128xf32> to vector<8x32xf32>
    %78 = vector.extract_strided_slice %61 {offsets = [0, 64], sizes = [8, 32], strides = [1, 1]} : vector<8x128xf32> to vector<8x32xf32>
    %79 = arith.addf %78, %23 : vector<8x32xf32>
    %80 = arith.mulf %75, %79 : vector<8x32xf32>
    %81 = arith.addf %77, %80 : vector<8x32xf32>
    %82 = math.tanh %81 : vector<8x32xf32>
    %cst_26 = arith.constant 1.000000e+00 : f32
    %83 = vector.broadcast %cst_26 : f32 to vector<8x32xf32>
    %84 = arith.subf %83, %76 : vector<8x32xf32>
    %85 = arith.mulf %84, %82 : vector<8x32xf32>
    %86 = arith.mulf %76, %59 : vector<8x32xf32>
    %87 = arith.addf %85, %86 : vector<8x32xf32>
    %88 = arith.addf %63, %15 : vector<8x128xf32>
    %89 = vector.extract_strided_slice %88 {offsets = [0, 0], sizes = [8, 64], strides = [1, 1]} : vector<8x128xf32> to vector<8x64xf32>
    %90 = vector.extract_strided_slice %65 {offsets = [0, 0], sizes = [8, 64], strides = [1, 1]} : vector<8x128xf32> to vector<8x64xf32>
    %91 = arith.addf %89, %90 : vector<8x64xf32>
    %92 = arith.negf %91 : vector<8x64xf32>
    %93 = math.exp %92 : vector<8x64xf32>
    %cst_27 = arith.constant 1.000000e+00 : f32
    %94 = vector.broadcast %cst_27 : f32 to vector<8x64xf32>
    %95 = arith.addf %94, %93 : vector<8x64xf32>
    %96 = arith.divf %94, %95 : vector<8x64xf32>
    %97 = vector.extract_strided_slice %96 {offsets = [0, 0], sizes = [8, 32], strides = [1, 1]} : vector<8x64xf32> to vector<8x32xf32>
    %98 = vector.extract_strided_slice %96 {offsets = [0, 32], sizes = [8, 32], strides = [1, 1]} : vector<8x64xf32> to vector<8x32xf32>
    %99 = vector.extract_strided_slice %88 {offsets = [0, 64], sizes = [8, 32], strides = [1, 1]} : vector<8x128xf32> to vector<8x32xf32>
    %100 = vector.extract_strided_slice %65 {offsets = [0, 64], sizes = [8, 32], strides = [1, 1]} : vector<8x128xf32> to vector<8x32xf32>
    %101 = arith.addf %100, %26 : vector<8x32xf32>
    %102 = arith.mulf %97, %101 : vector<8x32xf32>
    %103 = arith.addf %99, %102 : vector<8x32xf32>
    %104 = math.tanh %103 : vector<8x32xf32>
    %cst_28 = arith.constant 1.000000e+00 : f32
    %105 = vector.broadcast %cst_28 : f32 to vector<8x32xf32>
    %106 = arith.subf %105, %98 : vector<8x32xf32>
    %107 = arith.mulf %106, %104 : vector<8x32xf32>
    %108 = arith.mulf %98, %34 : vector<8x32xf32>
    %109 = arith.addf %107, %108 : vector<8x32xf32>
    %c40_29 = arith.constant 40 : index
    %c0_30 = arith.constant 0 : index
    %110 = vector.load %arg2[%c40_29, %c0_30] : memref<264x128xf32, #tpu.memory_space<vmem>>, vector<32x128xf32>
    %cst_31 = arith.constant dense<0.000000e+00> : vector<8x128xf32>
    %111 = tpu.matmul %87, %110, %cst_31 {dimension_numbers = #tpu.dot_dimension_numbers<[1], [0], [0], [1], [0, 0, 1, 1], [], []>} : vector<8x32xf32>, vector<32x128xf32>, vector<8x128xf32> -> vector<8x128xf32>
    %c72_32 = arith.constant 72 : index
    %c0_33 = arith.constant 0 : index
    %112 = vector.load %arg2[%c72_32, %c0_33] : memref<264x128xf32, #tpu.memory_space<vmem>>, vector<32x128xf32>
    %cst_34 = arith.constant dense<0.000000e+00> : vector<8x128xf32>
    %113 = tpu.matmul %87, %112, %cst_34 {dimension_numbers = #tpu.dot_dimension_numbers<[1], [0], [0], [1], [0, 0, 1, 1], [], []>} : vector<8x32xf32>, vector<32x128xf32>, vector<8x128xf32> -> vector<8x128xf32>
    %c112_35 = arith.constant 112 : index
    %c0_36 = arith.constant 0 : index
    %114 = vector.load %arg2[%c112_35, %c0_36] : memref<264x128xf32, #tpu.memory_space<vmem>>, vector<32x128xf32>
    %cst_37 = arith.constant dense<0.000000e+00> : vector<8x128xf32>
    %115 = tpu.matmul %109, %114, %cst_37 {dimension_numbers = #tpu.dot_dimension_numbers<[1], [0], [0], [1], [0, 0, 1, 1], [], []>} : vector<8x32xf32>, vector<32x128xf32>, vector<8x128xf32> -> vector<8x128xf32>
    %c144 = arith.constant 144 : index
    %c0_38 = arith.constant 0 : index
    %116 = vector.load %arg2[%c144, %c0_38] : memref<264x128xf32, #tpu.memory_space<vmem>>, vector<32x128xf32>
    %cst_39 = arith.constant dense<0.000000e+00> : vector<8x128xf32>
    %117 = tpu.matmul %109, %116, %cst_39 {dimension_numbers = #tpu.dot_dimension_numbers<[1], [0], [0], [1], [0, 0, 1, 1], [], []>} : vector<8x32xf32>, vector<32x128xf32>, vector<8x128xf32> -> vector<8x128xf32>
    %c184 = arith.constant 184 : index
    %c0_40 = arith.constant 0 : index
    %118 = vector.load %arg2[%c184, %c0_40] : memref<264x128xf32, #tpu.memory_space<vmem>>, vector<32x128xf32>
    %cst_41 = arith.constant dense<0.000000e+00> : vector<8x128xf32>
    %119 = tpu.matmul %35, %118, %cst_41 {dimension_numbers = #tpu.dot_dimension_numbers<[1], [0], [0], [1], [0, 0, 1, 1], [], []>} : vector<8x32xf32>, vector<32x128xf32>, vector<8x128xf32> -> vector<8x128xf32>
    %120 = vector.extract_strided_slice %12 {offsets = [16, 0], sizes = [8, 128], strides = [1, 1]} : vector<64x128xf32> to vector<8x128xf32>
    %121 = vector.extract_strided_slice %120 {offsets = [0, 0], sizes = [8, 64], strides = [1, 1]} : vector<8x128xf32> to vector<8x64xf32>
    %122 = vector.extract_strided_slice %111 {offsets = [0, 0], sizes = [8, 64], strides = [1, 1]} : vector<8x128xf32> to vector<8x64xf32>
    %123 = arith.addf %121, %122 : vector<8x64xf32>
    %124 = arith.negf %123 : vector<8x64xf32>
    %125 = math.exp %124 : vector<8x64xf32>
    %cst_42 = arith.constant 1.000000e+00 : f32
    %126 = vector.broadcast %cst_42 : f32 to vector<8x64xf32>
    %127 = arith.addf %126, %125 : vector<8x64xf32>
    %128 = arith.divf %126, %127 : vector<8x64xf32>
    %129 = vector.extract_strided_slice %128 {offsets = [0, 0], sizes = [8, 32], strides = [1, 1]} : vector<8x64xf32> to vector<8x32xf32>
    %130 = vector.extract_strided_slice %128 {offsets = [0, 32], sizes = [8, 32], strides = [1, 1]} : vector<8x64xf32> to vector<8x32xf32>
    %131 = vector.extract_strided_slice %120 {offsets = [0, 64], sizes = [8, 32], strides = [1, 1]} : vector<8x128xf32> to vector<8x32xf32>
    %132 = vector.extract_strided_slice %111 {offsets = [0, 64], sizes = [8, 32], strides = [1, 1]} : vector<8x128xf32> to vector<8x32xf32>
    %133 = arith.addf %132, %23 : vector<8x32xf32>
    %134 = arith.mulf %129, %133 : vector<8x32xf32>
    %135 = arith.addf %131, %134 : vector<8x32xf32>
    %136 = math.tanh %135 : vector<8x32xf32>
    %cst_43 = arith.constant 1.000000e+00 : f32
    %137 = vector.broadcast %cst_43 : f32 to vector<8x32xf32>
    %138 = arith.subf %137, %130 : vector<8x32xf32>
    %139 = arith.mulf %138, %136 : vector<8x32xf32>
    %140 = arith.mulf %130, %87 : vector<8x32xf32>
    %141 = arith.addf %139, %140 : vector<8x32xf32>
    %142 = arith.addf %113, %15 : vector<8x128xf32>
    %143 = vector.extract_strided_slice %142 {offsets = [0, 0], sizes = [8, 64], strides = [1, 1]} : vector<8x128xf32> to vector<8x64xf32>
    %144 = vector.extract_strided_slice %115 {offsets = [0, 0], sizes = [8, 64], strides = [1, 1]} : vector<8x128xf32> to vector<8x64xf32>
    %145 = arith.addf %143, %144 : vector<8x64xf32>
    %146 = arith.negf %145 : vector<8x64xf32>
    %147 = math.exp %146 : vector<8x64xf32>
    %cst_44 = arith.constant 1.000000e+00 : f32
    %148 = vector.broadcast %cst_44 : f32 to vector<8x64xf32>
    %149 = arith.addf %148, %147 : vector<8x64xf32>
    %150 = arith.divf %148, %149 : vector<8x64xf32>
    %151 = vector.extract_strided_slice %150 {offsets = [0, 0], sizes = [8, 32], strides = [1, 1]} : vector<8x64xf32> to vector<8x32xf32>
    %152 = vector.extract_strided_slice %150 {offsets = [0, 32], sizes = [8, 32], strides = [1, 1]} : vector<8x64xf32> to vector<8x32xf32>
    %153 = vector.extract_strided_slice %142 {offsets = [0, 64], sizes = [8, 32], strides = [1, 1]} : vector<8x128xf32> to vector<8x32xf32>
    %154 = vector.extract_strided_slice %115 {offsets = [0, 64], sizes = [8, 32], strides = [1, 1]} : vector<8x128xf32> to vector<8x32xf32>
    %155 = arith.addf %154, %26 : vector<8x32xf32>
    %156 = arith.mulf %151, %155 : vector<8x32xf32>
    %157 = arith.addf %153, %156 : vector<8x32xf32>
    %158 = math.tanh %157 : vector<8x32xf32>
    %cst_45 = arith.constant 1.000000e+00 : f32
    %159 = vector.broadcast %cst_45 : f32 to vector<8x32xf32>
    %160 = arith.subf %159, %152 : vector<8x32xf32>
    %161 = arith.mulf %160, %158 : vector<8x32xf32>
    %162 = arith.mulf %152, %109 : vector<8x32xf32>
    %163 = arith.addf %161, %162 : vector<8x32xf32>
    %164 = arith.addf %117, %18 : vector<8x128xf32>
    %165 = vector.extract_strided_slice %164 {offsets = [0, 0], sizes = [8, 64], strides = [1, 1]} : vector<8x128xf32> to vector<8x64xf32>
    %166 = vector.extract_strided_slice %119 {offsets = [0, 0], sizes = [8, 64], strides = [1, 1]} : vector<8x128xf32> to vector<8x64xf32>
    %167 = arith.addf %165, %166 : vector<8x64xf32>
    %168 = arith.negf %167 : vector<8x64xf32>
    %169 = math.exp %168 : vector<8x64xf32>
    %cst_46 = arith.constant 1.000000e+00 : f32
    %170 = vector.broadcast %cst_46 : f32 to vector<8x64xf32>
    %171 = arith.addf %170, %169 : vector<8x64xf32>
    %172 = arith.divf %170, %171 : vector<8x64xf32>
    %173 = vector.extract_strided_slice %172 {offsets = [0, 0], sizes = [8, 32], strides = [1, 1]} : vector<8x64xf32> to vector<8x32xf32>
    %174 = vector.extract_strided_slice %172 {offsets = [0, 32], sizes = [8, 32], strides = [1, 1]} : vector<8x64xf32> to vector<8x32xf32>
    %175 = vector.extract_strided_slice %164 {offsets = [0, 64], sizes = [8, 32], strides = [1, 1]} : vector<8x128xf32> to vector<8x32xf32>
    %176 = vector.extract_strided_slice %119 {offsets = [0, 64], sizes = [8, 32], strides = [1, 1]} : vector<8x128xf32> to vector<8x32xf32>
    %177 = arith.addf %176, %29 : vector<8x32xf32>
    %178 = arith.mulf %173, %177 : vector<8x32xf32>
    %179 = arith.addf %175, %178 : vector<8x32xf32>
    %180 = math.tanh %179 : vector<8x32xf32>
    %cst_47 = arith.constant 1.000000e+00 : f32
    %181 = vector.broadcast %cst_47 : f32 to vector<8x32xf32>
    %182 = arith.subf %181, %174 : vector<8x32xf32>
    %183 = arith.mulf %182, %180 : vector<8x32xf32>
    %184 = arith.mulf %174, %35 : vector<8x32xf32>
    %185 = arith.addf %183, %184 : vector<8x32xf32>
    %c224 = arith.constant 224 : index
    %c0_48 = arith.constant 0 : index
    %186 = vector.load %arg2[%c224, %c0_48] : memref<264x128xf32, #tpu.memory_space<vmem>>, vector<32x128xf32>
    %cst_49 = arith.constant dense<0.000000e+00> : vector<8x128xf32>
    %187 = tpu.matmul %185, %186, %cst_49 {dimension_numbers = #tpu.dot_dimension_numbers<[1], [0], [0], [1], [0, 0, 1, 1], [], []>} : vector<8x32xf32>, vector<32x128xf32>, vector<8x128xf32> -> vector<8x128xf32>
    %188 = arith.addf %187, %32 : vector<8x128xf32>
    %c0_50 = arith.constant 0 : index
    %c0_51 = arith.constant 0 : index
    %189 = vector.load %arg3[%c0_50, %c0_51] : memref<64x128xf32, #tpu.memory_space<vmem>>, vector<8x128xf32>
    tpu.vector_store %arg3[%c0_50, %c0_51], %188 {strides = array<i32>} : memref<64x128xf32, #tpu.memory_space<vmem>>, vector<8x128xf32>,
    %c40_52 = arith.constant 40 : index
    %c0_53 = arith.constant 0 : index
    %190 = vector.load %arg2[%c40_52, %c0_53] : memref<264x128xf32, #tpu.memory_space<vmem>>, vector<32x128xf32>
    %cst_54 = arith.constant dense<0.000000e+00> : vector<8x128xf32>
    %191 = tpu.matmul %141, %190, %cst_54 {dimension_numbers = #tpu.dot_dimension_numbers<[1], [0], [0], [1], [0, 0, 1, 1], [], []>} : vector<8x32xf32>, vector<32x128xf32>, vector<8x128xf32> -> vector<8x128xf32>
    %c72_55 = arith.constant 72 : index
    %c0_56 = arith.constant 0 : index
    %192 = vector.load %arg2[%c72_55, %c0_56] : memref<264x128xf32, #tpu.memory_space<vmem>>, vector<32x128xf32>
    %cst_57 = arith.constant dense<0.000000e+00> : vector<8x128xf32>
    %193 = tpu.matmul %141, %192, %cst_57 {dimension_numbers = #tpu.dot_dimension_numbers<[1], [0], [0], [1], [0, 0, 1, 1], [], []>} : vector<8x32xf32>, vector<32x128xf32>, vector<8x128xf32> -> vector<8x128xf32>
    %c112_58 = arith.constant 112 : index
    %c0_59 = arith.constant 0 : index
    %194 = vector.load %arg2[%c112_58, %c0_59] : memref<264x128xf32, #tpu.memory_space<vmem>>, vector<32x128xf32>
    %cst_60 = arith.constant dense<0.000000e+00> : vector<8x128xf32>
    %195 = tpu.matmul %163, %194, %cst_60 {dimension_numbers = #tpu.dot_dimension_numbers<[1], [0], [0], [1], [0, 0, 1, 1], [], []>} : vector<8x32xf32>, vector<32x128xf32>, vector<8x128xf32> -> vector<8x128xf32>
    %c144_61 = arith.constant 144 : index
    %c0_62 = arith.constant 0 : index
    %196 = vector.load %arg2[%c144_61, %c0_62] : memref<264x128xf32, #tpu.memory_space<vmem>>, vector<32x128xf32>
    %cst_63 = arith.constant dense<0.000000e+00> : vector<8x128xf32>
    %197 = tpu.matmul %163, %196, %cst_63 {dimension_numbers = #tpu.dot_dimension_numbers<[1], [0], [0], [1], [0, 0, 1, 1], [], []>} : vector<8x32xf32>, vector<32x128xf32>, vector<8x128xf32> -> vector<8x128xf32>
    %c184_64 = arith.constant 184 : index
    %c0_65 = arith.constant 0 : index
    %198 = vector.load %arg2[%c184_64, %c0_65] : memref<264x128xf32, #tpu.memory_space<vmem>>, vector<32x128xf32>
    %cst_66 = arith.constant dense<0.000000e+00> : vector<8x128xf32>
    %199 = tpu.matmul %185, %198, %cst_66 {dimension_numbers = #tpu.dot_dimension_numbers<[1], [0], [0], [1], [0, 0, 1, 1], [], []>} : vector<8x32xf32>, vector<32x128xf32>, vector<8x128xf32> -> vector<8x128xf32>
    %200 = vector.extract_strided_slice %12 {offsets = [24, 0], sizes = [8, 128], strides = [1, 1]} : vector<64x128xf32> to vector<8x128xf32>
    %201 = vector.extract_strided_slice %200 {offsets = [0, 0], sizes = [8, 64], strides = [1, 1]} : vector<8x128xf32> to vector<8x64xf32>
    %202 = vector.extract_strided_slice %191 {offsets = [0, 0], sizes = [8, 64], strides = [1, 1]} : vector<8x128xf32> to vector<8x64xf32>
    %203 = arith.addf %201, %202 : vector<8x64xf32>
    %204 = arith.negf %203 : vector<8x64xf32>
    %205 = math.exp %204 : vector<8x64xf32>
    %cst_67 = arith.constant 1.000000e+00 : f32
    %206 = vector.broadcast %cst_67 : f32 to vector<8x64xf32>
    %207 = arith.addf %206, %205 : vector<8x64xf32>
    %208 = arith.divf %206, %207 : vector<8x64xf32>
    %209 = vector.extract_strided_slice %208 {offsets = [0, 0], sizes = [8, 32], strides = [1, 1]} : vector<8x64xf32> to vector<8x32xf32>
    %210 = vector.extract_strided_slice %208 {offsets = [0, 32], sizes = [8, 32], strides = [1, 1]} : vector<8x64xf32> to vector<8x32xf32>
    %211 = vector.extract_strided_slice %200 {offsets = [0, 64], sizes = [8, 32], strides = [1, 1]} : vector<8x128xf32> to vector<8x32xf32>
    %212 = vector.extract_strided_slice %191 {offsets = [0, 64], sizes = [8, 32], strides = [1, 1]} : vector<8x128xf32> to vector<8x32xf32>
    %213 = arith.addf %212, %23 : vector<8x32xf32>
    %214 = arith.mulf %209, %213 : vector<8x32xf32>
    %215 = arith.addf %211, %214 : vector<8x32xf32>
    %216 = math.tanh %215 : vector<8x32xf32>
    %cst_68 = arith.constant 1.000000e+00 : f32
    %217 = vector.broadcast %cst_68 : f32 to vector<8x32xf32>
    %218 = arith.subf %217, %210 : vector<8x32xf32>
    %219 = arith.mulf %218, %216 : vector<8x32xf32>
    %220 = arith.mulf %210, %141 : vector<8x32xf32>
    %221 = arith.addf %219, %220 : vector<8x32xf32>
    %222 = arith.addf %193, %15 : vector<8x128xf32>
    %223 = vector.extract_strided_slice %222 {offsets = [0, 0], sizes = [8, 64], strides = [1, 1]} : vector<8x128xf32> to vector<8x64xf32>
    %224 = vector.extract_strided_slice %195 {offsets = [0, 0], sizes = [8, 64], strides = [1, 1]} : vector<8x128xf32> to vector<8x64xf32>
    %225 = arith.addf %223, %224 : vector<8x64xf32>
    %226 = arith.negf %225 : vector<8x64xf32>
    %227 = math.exp %226 : vector<8x64xf32>
    %cst_69 = arith.constant 1.000000e+00 : f32
    %228 = vector.broadcast %cst_69 : f32 to vector<8x64xf32>
    %229 = arith.addf %228, %227 : vector<8x64xf32>
    %230 = arith.divf %228, %229 : vector<8x64xf32>
    %231 = vector.extract_strided_slice %230 {offsets = [0, 0], sizes = [8, 32], strides = [1, 1]} : vector<8x64xf32> to vector<8x32xf32>
    %232 = vector.extract_strided_slice %230 {offsets = [0, 32], sizes = [8, 32], strides = [1, 1]} : vector<8x64xf32> to vector<8x32xf32>
    %233 = vector.extract_strided_slice %222 {offsets = [0, 64], sizes = [8, 32], strides = [1, 1]} : vector<8x128xf32> to vector<8x32xf32>
    %234 = vector.extract_strided_slice %195 {offsets = [0, 64], sizes = [8, 32], strides = [1, 1]} : vector<8x128xf32> to vector<8x32xf32>
    %235 = arith.addf %234, %26 : vector<8x32xf32>
    %236 = arith.mulf %231, %235 : vector<8x32xf32>
    %237 = arith.addf %233, %236 : vector<8x32xf32>
    %238 = math.tanh %237 : vector<8x32xf32>
    %cst_70 = arith.constant 1.000000e+00 : f32
    %239 = vector.broadcast %cst_70 : f32 to vector<8x32xf32>
    %240 = arith.subf %239, %232 : vector<8x32xf32>
    %241 = arith.mulf %240, %238 : vector<8x32xf32>
    %242 = arith.mulf %232, %163 : vector<8x32xf32>
    %243 = arith.addf %241, %242 : vector<8x32xf32>
    %244 = arith.addf %197, %18 : vector<8x128xf32>
    %245 = vector.extract_strided_slice %244 {offsets = [0, 0], sizes = [8, 64], strides = [1, 1]} : vector<8x128xf32> to vector<8x64xf32>
    %246 = vector.extract_strided_slice %199 {offsets = [0, 0], sizes = [8, 64], strides = [1, 1]} : vector<8x128xf32> to vector<8x64xf32>
    %247 = arith.addf %245, %246 : vector<8x64xf32>
    %248 = arith.negf %247 : vector<8x64xf32>
    %249 = math.exp %248 : vector<8x64xf32>
    %cst_71 = arith.constant 1.000000e+00 : f32
    %250 = vector.broadcast %cst_71 : f32 to vector<8x64xf32>
    %251 = arith.addf %250, %249 : vector<8x64xf32>
    %252 = arith.divf %250, %251 : vector<8x64xf32>
    %253 = vector.extract_strided_slice %252 {offsets = [0, 0], sizes = [8, 32], strides = [1, 1]} : vector<8x64xf32> to vector<8x32xf32>
    %254 = vector.extract_strided_slice %252 {offsets = [0, 32], sizes = [8, 32], strides = [1, 1]} : vector<8x64xf32> to vector<8x32xf32>
    %255 = vector.extract_strided_slice %244 {offsets = [0, 64], sizes = [8, 32], strides = [1, 1]} : vector<8x128xf32> to vector<8x32xf32>
    %256 = vector.extract_strided_slice %199 {offsets = [0, 64], sizes = [8, 32], strides = [1, 1]} : vector<8x128xf32> to vector<8x32xf32>
    %257 = arith.addf %256, %29 : vector<8x32xf32>
    %258 = arith.mulf %253, %257 : vector<8x32xf32>
    %259 = arith.addf %255, %258 : vector<8x32xf32>
    %260 = math.tanh %259 : vector<8x32xf32>
    %cst_72 = arith.constant 1.000000e+00 : f32
    %261 = vector.broadcast %cst_72 : f32 to vector<8x32xf32>
    %262 = arith.subf %261, %254 : vector<8x32xf32>
    %263 = arith.mulf %262, %260 : vector<8x32xf32>
    %264 = arith.mulf %254, %185 : vector<8x32xf32>
    %265 = arith.addf %263, %264 : vector<8x32xf32>
    %c224_73 = arith.constant 224 : index
    %c0_74 = arith.constant 0 : index
    %266 = vector.load %arg2[%c224_73, %c0_74] : memref<264x128xf32, #tpu.memory_space<vmem>>, vector<32x128xf32>
    %cst_75 = arith.constant dense<0.000000e+00> : vector<8x128xf32>
    %267 = tpu.matmul %265, %266, %cst_75 {dimension_numbers = #tpu.dot_dimension_numbers<[1], [0], [0], [1], [0, 0, 1, 1], [], []>} : vector<8x32xf32>, vector<32x128xf32>, vector<8x128xf32> -> vector<8x128xf32>
    %268 = arith.addf %267, %32 : vector<8x128xf32>
    %c8 = arith.constant 8 : index
    %c0_76 = arith.constant 0 : index
    %269 = vector.load %arg3[%c8, %c0_76] : memref<64x128xf32, #tpu.memory_space<vmem>>, vector<8x128xf32>
    tpu.vector_store %arg3[%c8, %c0_76], %268 {strides = array<i32>} : memref<64x128xf32, #tpu.memory_space<vmem>>, vector<8x128xf32>,
    %c40_77 = arith.constant 40 : index
    %c0_78 = arith.constant 0 : index
    %270 = vector.load %arg2[%c40_77, %c0_78] : memref<264x128xf32, #tpu.memory_space<vmem>>, vector<32x128xf32>
    %cst_79 = arith.constant dense<0.000000e+00> : vector<8x128xf32>
    %271 = tpu.matmul %221, %270, %cst_79 {dimension_numbers = #tpu.dot_dimension_numbers<[1], [0], [0], [1], [0, 0, 1, 1], [], []>} : vector<8x32xf32>, vector<32x128xf32>, vector<8x128xf32> -> vector<8x128xf32>
    %c72_80 = arith.constant 72 : index
    %c0_81 = arith.constant 0 : index
    %272 = vector.load %arg2[%c72_80, %c0_81] : memref<264x128xf32, #tpu.memory_space<vmem>>, vector<32x128xf32>
    %cst_82 = arith.constant dense<0.000000e+00> : vector<8x128xf32>
    %273 = tpu.matmul %221, %272, %cst_82 {dimension_numbers = #tpu.dot_dimension_numbers<[1], [0], [0], [1], [0, 0, 1, 1], [], []>} : vector<8x32xf32>, vector<32x128xf32>, vector<8x128xf32> -> vector<8x128xf32>
    %c112_83 = arith.constant 112 : index
    %c0_84 = arith.constant 0 : index
    %274 = vector.load %arg2[%c112_83, %c0_84] : memref<264x128xf32, #tpu.memory_space<vmem>>, vector<32x128xf32>
    %cst_85 = arith.constant dense<0.000000e+00> : vector<8x128xf32>
    %275 = tpu.matmul %243, %274, %cst_85 {dimension_numbers = #tpu.dot_dimension_numbers<[1], [0], [0], [1], [0, 0, 1, 1], [], []>} : vector<8x32xf32>, vector<32x128xf32>, vector<8x128xf32> -> vector<8x128xf32>
    %c144_86 = arith.constant 144 : index
    %c0_87 = arith.constant 0 : index
    %276 = vector.load %arg2[%c144_86, %c0_87] : memref<264x128xf32, #tpu.memory_space<vmem>>, vector<32x128xf32>
    %cst_88 = arith.constant dense<0.000000e+00> : vector<8x128xf32>
    %277 = tpu.matmul %243, %276, %cst_88 {dimension_numbers = #tpu.dot_dimension_numbers<[1], [0], [0], [1], [0, 0, 1, 1], [], []>} : vector<8x32xf32>, vector<32x128xf32>, vector<8x128xf32> -> vector<8x128xf32>
    %c184_89 = arith.constant 184 : index
    %c0_90 = arith.constant 0 : index
    %278 = vector.load %arg2[%c184_89, %c0_90] : memref<264x128xf32, #tpu.memory_space<vmem>>, vector<32x128xf32>
    %cst_91 = arith.constant dense<0.000000e+00> : vector<8x128xf32>
    %279 = tpu.matmul %265, %278, %cst_91 {dimension_numbers = #tpu.dot_dimension_numbers<[1], [0], [0], [1], [0, 0, 1, 1], [], []>} : vector<8x32xf32>, vector<32x128xf32>, vector<8x128xf32> -> vector<8x128xf32>
    %280 = vector.extract_strided_slice %12 {offsets = [32, 0], sizes = [8, 128], strides = [1, 1]} : vector<64x128xf32> to vector<8x128xf32>
    %281 = vector.extract_strided_slice %280 {offsets = [0, 0], sizes = [8, 64], strides = [1, 1]} : vector<8x128xf32> to vector<8x64xf32>
    %282 = vector.extract_strided_slice %271 {offsets = [0, 0], sizes = [8, 64], strides = [1, 1]} : vector<8x128xf32> to vector<8x64xf32>
    %283 = arith.addf %281, %282 : vector<8x64xf32>
    %284 = arith.negf %283 : vector<8x64xf32>
    %285 = math.exp %284 : vector<8x64xf32>
    %cst_92 = arith.constant 1.000000e+00 : f32
    %286 = vector.broadcast %cst_92 : f32 to vector<8x64xf32>
    %287 = arith.addf %286, %285 : vector<8x64xf32>
    %288 = arith.divf %286, %287 : vector<8x64xf32>
    %289 = vector.extract_strided_slice %288 {offsets = [0, 0], sizes = [8, 32], strides = [1, 1]} : vector<8x64xf32> to vector<8x32xf32>
    %290 = vector.extract_strided_slice %288 {offsets = [0, 32], sizes = [8, 32], strides = [1, 1]} : vector<8x64xf32> to vector<8x32xf32>
    %291 = vector.extract_strided_slice %280 {offsets = [0, 64], sizes = [8, 32], strides = [1, 1]} : vector<8x128xf32> to vector<8x32xf32>
    %292 = vector.extract_strided_slice %271 {offsets = [0, 64], sizes = [8, 32], strides = [1, 1]} : vector<8x128xf32> to vector<8x32xf32>
    %293 = arith.addf %292, %23 : vector<8x32xf32>
    %294 = arith.mulf %289, %293 : vector<8x32xf32>
    %295 = arith.addf %291, %294 : vector<8x32xf32>
    %296 = math.tanh %295 : vector<8x32xf32>
    %cst_93 = arith.constant 1.000000e+00 : f32
    %297 = vector.broadcast %cst_93 : f32 to vector<8x32xf32>
    %298 = arith.subf %297, %290 : vector<8x32xf32>
    %299 = arith.mulf %298, %296 : vector<8x32xf32>
    %300 = arith.mulf %290, %221 : vector<8x32xf32>
    %301 = arith.addf %299, %300 : vector<8x32xf32>
    %302 = arith.addf %273, %15 : vector<8x128xf32>
    %303 = vector.extract_strided_slice %302 {offsets = [0, 0], sizes = [8, 64], strides = [1, 1]} : vector<8x128xf32> to vector<8x64xf32>
    %304 = vector.extract_strided_slice %275 {offsets = [0, 0], sizes = [8, 64], strides = [1, 1]} : vector<8x128xf32> to vector<8x64xf32>
    %305 = arith.addf %303, %304 : vector<8x64xf32>
    %306 = arith.negf %305 : vector<8x64xf32>
    %307 = math.exp %306 : vector<8x64xf32>
    %cst_94 = arith.constant 1.000000e+00 : f32
    %308 = vector.broadcast %cst_94 : f32 to vector<8x64xf32>
    %309 = arith.addf %308, %307 : vector<8x64xf32>
    %310 = arith.divf %308, %309 : vector<8x64xf32>
    %311 = vector.extract_strided_slice %310 {offsets = [0, 0], sizes = [8, 32], strides = [1, 1]} : vector<8x64xf32> to vector<8x32xf32>
    %312 = vector.extract_strided_slice %310 {offsets = [0, 32], sizes = [8, 32], strides = [1, 1]} : vector<8x64xf32> to vector<8x32xf32>
    %313 = vector.extract_strided_slice %302 {offsets = [0, 64], sizes = [8, 32], strides = [1, 1]} : vector<8x128xf32> to vector<8x32xf32>
    %314 = vector.extract_strided_slice %275 {offsets = [0, 64], sizes = [8, 32], strides = [1, 1]} : vector<8x128xf32> to vector<8x32xf32>
    %315 = arith.addf %314, %26 : vector<8x32xf32>
    %316 = arith.mulf %311, %315 : vector<8x32xf32>
    %317 = arith.addf %313, %316 : vector<8x32xf32>
    %318 = math.tanh %317 : vector<8x32xf32>
    %cst_95 = arith.constant 1.000000e+00 : f32
    %319 = vector.broadcast %cst_95 : f32 to vector<8x32xf32>
    %320 = arith.subf %319, %312 : vector<8x32xf32>
    %321 = arith.mulf %320, %318 : vector<8x32xf32>
    %322 = arith.mulf %312, %243 : vector<8x32xf32>
    %323 = arith.addf %321, %322 : vector<8x32xf32>
    %324 = arith.addf %277, %18 : vector<8x128xf32>
    %325 = vector.extract_strided_slice %324 {offsets = [0, 0], sizes = [8, 64], strides = [1, 1]} : vector<8x128xf32> to vector<8x64xf32>
    %326 = vector.extract_strided_slice %279 {offsets = [0, 0], sizes = [8, 64], strides = [1, 1]} : vector<8x128xf32> to vector<8x64xf32>
    %327 = arith.addf %325, %326 : vector<8x64xf32>
    %328 = arith.negf %327 : vector<8x64xf32>
    %329 = math.exp %328 : vector<8x64xf32>
    %cst_96 = arith.constant 1.000000e+00 : f32
    %330 = vector.broadcast %cst_96 : f32 to vector<8x64xf32>
    %331 = arith.addf %330, %329 : vector<8x64xf32>
    %332 = arith.divf %330, %331 : vector<8x64xf32>
    %333 = vector.extract_strided_slice %332 {offsets = [0, 0], sizes = [8, 32], strides = [1, 1]} : vector<8x64xf32> to vector<8x32xf32>
    %334 = vector.extract_strided_slice %332 {offsets = [0, 32], sizes = [8, 32], strides = [1, 1]} : vector<8x64xf32> to vector<8x32xf32>
    %335 = vector.extract_strided_slice %324 {offsets = [0, 64], sizes = [8, 32], strides = [1, 1]} : vector<8x128xf32> to vector<8x32xf32>
    %336 = vector.extract_strided_slice %279 {offsets = [0, 64], sizes = [8, 32], strides = [1, 1]} : vector<8x128xf32> to vector<8x32xf32>
    %337 = arith.addf %336, %29 : vector<8x32xf32>
    %338 = arith.mulf %333, %337 : vector<8x32xf32>
    %339 = arith.addf %335, %338 : vector<8x32xf32>
    %340 = math.tanh %339 : vector<8x32xf32>
    %cst_97 = arith.constant 1.000000e+00 : f32
    %341 = vector.broadcast %cst_97 : f32 to vector<8x32xf32>
    %342 = arith.subf %341, %334 : vector<8x32xf32>
    %343 = arith.mulf %342, %340 : vector<8x32xf32>
    %344 = arith.mulf %334, %265 : vector<8x32xf32>
    %345 = arith.addf %343, %344 : vector<8x32xf32>
    %c224_98 = arith.constant 224 : index
    %c0_99 = arith.constant 0 : index
    %346 = vector.load %arg2[%c224_98, %c0_99] : memref<264x128xf32, #tpu.memory_space<vmem>>, vector<32x128xf32>
    %cst_100 = arith.constant dense<0.000000e+00> : vector<8x128xf32>
    %347 = tpu.matmul %345, %346, %cst_100 {dimension_numbers = #tpu.dot_dimension_numbers<[1], [0], [0], [1], [0, 0, 1, 1], [], []>} : vector<8x32xf32>, vector<32x128xf32>, vector<8x128xf32> -> vector<8x128xf32>
    %348 = arith.addf %347, %32 : vector<8x128xf32>
    %c16_101 = arith.constant 16 : index
    %c0_102 = arith.constant 0 : index
    %349 = vector.load %arg3[%c16_101, %c0_102] : memref<64x128xf32, #tpu.memory_space<vmem>>, vector<8x128xf32>
    tpu.vector_store %arg3[%c16_101, %c0_102], %348 {strides = array<i32>} : memref<64x128xf32, #tpu.memory_space<vmem>>, vector<8x128xf32>,
    %c40_103 = arith.constant 40 : index
    %c0_104 = arith.constant 0 : index
    %350 = vector.load %arg2[%c40_103, %c0_104] : memref<264x128xf32, #tpu.memory_space<vmem>>, vector<32x128xf32>
    %cst_105 = arith.constant dense<0.000000e+00> : vector<8x128xf32>
    %351 = tpu.matmul %301, %350, %cst_105 {dimension_numbers = #tpu.dot_dimension_numbers<[1], [0], [0], [1], [0, 0, 1, 1], [], []>} : vector<8x32xf32>, vector<32x128xf32>, vector<8x128xf32> -> vector<8x128xf32>
    %c72_106 = arith.constant 72 : index
    %c0_107 = arith.constant 0 : index
    %352 = vector.load %arg2[%c72_106, %c0_107] : memref<264x128xf32, #tpu.memory_space<vmem>>, vector<32x128xf32>
    %cst_108 = arith.constant dense<0.000000e+00> : vector<8x128xf32>
    %353 = tpu.matmul %301, %352, %cst_108 {dimension_numbers = #tpu.dot_dimension_numbers<[1], [0], [0], [1], [0, 0, 1, 1], [], []>} : vector<8x32xf32>, vector<32x128xf32>, vector<8x128xf32> -> vector<8x128xf32>
    %c112_109 = arith.constant 112 : index
    %c0_110 = arith.constant 0 : index
    %354 = vector.load %arg2[%c112_109, %c0_110] : memref<264x128xf32, #tpu.memory_space<vmem>>, vector<32x128xf32>
    %cst_111 = arith.constant dense<0.000000e+00> : vector<8x128xf32>
    %355 = tpu.matmul %323, %354, %cst_111 {dimension_numbers = #tpu.dot_dimension_numbers<[1], [0], [0], [1], [0, 0, 1, 1], [], []>} : vector<8x32xf32>, vector<32x128xf32>, vector<8x128xf32> -> vector<8x128xf32>
    %c144_112 = arith.constant 144 : index
    %c0_113 = arith.constant 0 : index
    %356 = vector.load %arg2[%c144_112, %c0_113] : memref<264x128xf32, #tpu.memory_space<vmem>>, vector<32x128xf32>
    %cst_114 = arith.constant dense<0.000000e+00> : vector<8x128xf32>
    %357 = tpu.matmul %323, %356, %cst_114 {dimension_numbers = #tpu.dot_dimension_numbers<[1], [0], [0], [1], [0, 0, 1, 1], [], []>} : vector<8x32xf32>, vector<32x128xf32>, vector<8x128xf32> -> vector<8x128xf32>
    %c184_115 = arith.constant 184 : index
    %c0_116 = arith.constant 0 : index
    %358 = vector.load %arg2[%c184_115, %c0_116] : memref<264x128xf32, #tpu.memory_space<vmem>>, vector<32x128xf32>
    %cst_117 = arith.constant dense<0.000000e+00> : vector<8x128xf32>
    %359 = tpu.matmul %345, %358, %cst_117 {dimension_numbers = #tpu.dot_dimension_numbers<[1], [0], [0], [1], [0, 0, 1, 1], [], []>} : vector<8x32xf32>, vector<32x128xf32>, vector<8x128xf32> -> vector<8x128xf32>
    %360 = vector.extract_strided_slice %12 {offsets = [40, 0], sizes = [8, 128], strides = [1, 1]} : vector<64x128xf32> to vector<8x128xf32>
    %361 = vector.extract_strided_slice %360 {offsets = [0, 0], sizes = [8, 64], strides = [1, 1]} : vector<8x128xf32> to vector<8x64xf32>
    %362 = vector.extract_strided_slice %351 {offsets = [0, 0], sizes = [8, 64], strides = [1, 1]} : vector<8x128xf32> to vector<8x64xf32>
    %363 = arith.addf %361, %362 : vector<8x64xf32>
    %364 = arith.negf %363 : vector<8x64xf32>
    %365 = math.exp %364 : vector<8x64xf32>
    %cst_118 = arith.constant 1.000000e+00 : f32
    %366 = vector.broadcast %cst_118 : f32 to vector<8x64xf32>
    %367 = arith.addf %366, %365 : vector<8x64xf32>
    %368 = arith.divf %366, %367 : vector<8x64xf32>
    %369 = vector.extract_strided_slice %368 {offsets = [0, 0], sizes = [8, 32], strides = [1, 1]} : vector<8x64xf32> to vector<8x32xf32>
    %370 = vector.extract_strided_slice %368 {offsets = [0, 32], sizes = [8, 32], strides = [1, 1]} : vector<8x64xf32> to vector<8x32xf32>
    %371 = vector.extract_strided_slice %360 {offsets = [0, 64], sizes = [8, 32], strides = [1, 1]} : vector<8x128xf32> to vector<8x32xf32>
    %372 = vector.extract_strided_slice %351 {offsets = [0, 64], sizes = [8, 32], strides = [1, 1]} : vector<8x128xf32> to vector<8x32xf32>
    %373 = arith.addf %372, %23 : vector<8x32xf32>
    %374 = arith.mulf %369, %373 : vector<8x32xf32>
    %375 = arith.addf %371, %374 : vector<8x32xf32>
    %376 = math.tanh %375 : vector<8x32xf32>
    %cst_119 = arith.constant 1.000000e+00 : f32
    %377 = vector.broadcast %cst_119 : f32 to vector<8x32xf32>
    %378 = arith.subf %377, %370 : vector<8x32xf32>
    %379 = arith.mulf %378, %376 : vector<8x32xf32>
    %380 = arith.mulf %370, %301 : vector<8x32xf32>
    %381 = arith.addf %379, %380 : vector<8x32xf32>
    %382 = arith.addf %353, %15 : vector<8x128xf32>
    %383 = vector.extract_strided_slice %382 {offsets = [0, 0], sizes = [8, 64], strides = [1, 1]} : vector<8x128xf32> to vector<8x64xf32>
    %384 = vector.extract_strided_slice %355 {offsets = [0, 0], sizes = [8, 64], strides = [1, 1]} : vector<8x128xf32> to vector<8x64xf32>
    %385 = arith.addf %383, %384 : vector<8x64xf32>
    %386 = arith.negf %385 : vector<8x64xf32>
    %387 = math.exp %386 : vector<8x64xf32>
    %cst_120 = arith.constant 1.000000e+00 : f32
    %388 = vector.broadcast %cst_120 : f32 to vector<8x64xf32>
    %389 = arith.addf %388, %387 : vector<8x64xf32>
    %390 = arith.divf %388, %389 : vector<8x64xf32>
    %391 = vector.extract_strided_slice %390 {offsets = [0, 0], sizes = [8, 32], strides = [1, 1]} : vector<8x64xf32> to vector<8x32xf32>
    %392 = vector.extract_strided_slice %390 {offsets = [0, 32], sizes = [8, 32], strides = [1, 1]} : vector<8x64xf32> to vector<8x32xf32>
    %393 = vector.extract_strided_slice %382 {offsets = [0, 64], sizes = [8, 32], strides = [1, 1]} : vector<8x128xf32> to vector<8x32xf32>
    %394 = vector.extract_strided_slice %355 {offsets = [0, 64], sizes = [8, 32], strides = [1, 1]} : vector<8x128xf32> to vector<8x32xf32>
    %395 = arith.addf %394, %26 : vector<8x32xf32>
    %396 = arith.mulf %391, %395 : vector<8x32xf32>
    %397 = arith.addf %393, %396 : vector<8x32xf32>
    %398 = math.tanh %397 : vector<8x32xf32>
    %cst_121 = arith.constant 1.000000e+00 : f32
    %399 = vector.broadcast %cst_121 : f32 to vector<8x32xf32>
    %400 = arith.subf %399, %392 : vector<8x32xf32>
    %401 = arith.mulf %400, %398 : vector<8x32xf32>
    %402 = arith.mulf %392, %323 : vector<8x32xf32>
    %403 = arith.addf %401, %402 : vector<8x32xf32>
    %404 = arith.addf %357, %18 : vector<8x128xf32>
    %405 = vector.extract_strided_slice %404 {offsets = [0, 0], sizes = [8, 64], strides = [1, 1]} : vector<8x128xf32> to vector<8x64xf32>
    %406 = vector.extract_strided_slice %359 {offsets = [0, 0], sizes = [8, 64], strides = [1, 1]} : vector<8x128xf32> to vector<8x64xf32>
    %407 = arith.addf %405, %406 : vector<8x64xf32>
    %408 = arith.negf %407 : vector<8x64xf32>
    %409 = math.exp %408 : vector<8x64xf32>
    %cst_122 = arith.constant 1.000000e+00 : f32
    %410 = vector.broadcast %cst_122 : f32 to vector<8x64xf32>
    %411 = arith.addf %410, %409 : vector<8x64xf32>
    %412 = arith.divf %410, %411 : vector<8x64xf32>
    %413 = vector.extract_strided_slice %412 {offsets = [0, 0], sizes = [8, 32], strides = [1, 1]} : vector<8x64xf32> to vector<8x32xf32>
    %414 = vector.extract_strided_slice %412 {offsets = [0, 32], sizes = [8, 32], strides = [1, 1]} : vector<8x64xf32> to vector<8x32xf32>
    %415 = vector.extract_strided_slice %404 {offsets = [0, 64], sizes = [8, 32], strides = [1, 1]} : vector<8x128xf32> to vector<8x32xf32>
    %416 = vector.extract_strided_slice %359 {offsets = [0, 64], sizes = [8, 32], strides = [1, 1]} : vector<8x128xf32> to vector<8x32xf32>
    %417 = arith.addf %416, %29 : vector<8x32xf32>
    %418 = arith.mulf %413, %417 : vector<8x32xf32>
    %419 = arith.addf %415, %418 : vector<8x32xf32>
    %420 = math.tanh %419 : vector<8x32xf32>
    %cst_123 = arith.constant 1.000000e+00 : f32
    %421 = vector.broadcast %cst_123 : f32 to vector<8x32xf32>
    %422 = arith.subf %421, %414 : vector<8x32xf32>
    %423 = arith.mulf %422, %420 : vector<8x32xf32>
    %424 = arith.mulf %414, %345 : vector<8x32xf32>
    %425 = arith.addf %423, %424 : vector<8x32xf32>
    %c224_124 = arith.constant 224 : index
    %c0_125 = arith.constant 0 : index
    %426 = vector.load %arg2[%c224_124, %c0_125] : memref<264x128xf32, #tpu.memory_space<vmem>>, vector<32x128xf32>
    %cst_126 = arith.constant dense<0.000000e+00> : vector<8x128xf32>
    %427 = tpu.matmul %425, %426, %cst_126 {dimension_numbers = #tpu.dot_dimension_numbers<[1], [0], [0], [1], [0, 0, 1, 1], [], []>} : vector<8x32xf32>, vector<32x128xf32>, vector<8x128xf32> -> vector<8x128xf32>
    %428 = arith.addf %427, %32 : vector<8x128xf32>
    %c24_127 = arith.constant 24 : index
    %c0_128 = arith.constant 0 : index
    %429 = vector.load %arg3[%c24_127, %c0_128] : memref<64x128xf32, #tpu.memory_space<vmem>>, vector<8x128xf32>
    tpu.vector_store %arg3[%c24_127, %c0_128], %428 {strides = array<i32>} : memref<64x128xf32, #tpu.memory_space<vmem>>, vector<8x128xf32>,
    %c40_129 = arith.constant 40 : index
    %c0_130 = arith.constant 0 : index
    %430 = vector.load %arg2[%c40_129, %c0_130] : memref<264x128xf32, #tpu.memory_space<vmem>>, vector<32x128xf32>
    %cst_131 = arith.constant dense<0.000000e+00> : vector<8x128xf32>
    %431 = tpu.matmul %381, %430, %cst_131 {dimension_numbers = #tpu.dot_dimension_numbers<[1], [0], [0], [1], [0, 0, 1, 1], [], []>} : vector<8x32xf32>, vector<32x128xf32>, vector<8x128xf32> -> vector<8x128xf32>
    %c72_132 = arith.constant 72 : index
    %c0_133 = arith.constant 0 : index
    %432 = vector.load %arg2[%c72_132, %c0_133] : memref<264x128xf32, #tpu.memory_space<vmem>>, vector<32x128xf32>
    %cst_134 = arith.constant dense<0.000000e+00> : vector<8x128xf32>
    %433 = tpu.matmul %381, %432, %cst_134 {dimension_numbers = #tpu.dot_dimension_numbers<[1], [0], [0], [1], [0, 0, 1, 1], [], []>} : vector<8x32xf32>, vector<32x128xf32>, vector<8x128xf32> -> vector<8x128xf32>
    %c112_135 = arith.constant 112 : index
    %c0_136 = arith.constant 0 : index
    %434 = vector.load %arg2[%c112_135, %c0_136] : memref<264x128xf32, #tpu.memory_space<vmem>>, vector<32x128xf32>
    %cst_137 = arith.constant dense<0.000000e+00> : vector<8x128xf32>
    %435 = tpu.matmul %403, %434, %cst_137 {dimension_numbers = #tpu.dot_dimension_numbers<[1], [0], [0], [1], [0, 0, 1, 1], [], []>} : vector<8x32xf32>, vector<32x128xf32>, vector<8x128xf32> -> vector<8x128xf32>
    %c144_138 = arith.constant 144 : index
    %c0_139 = arith.constant 0 : index
    %436 = vector.load %arg2[%c144_138, %c0_139] : memref<264x128xf32, #tpu.memory_space<vmem>>, vector<32x128xf32>
    %cst_140 = arith.constant dense<0.000000e+00> : vector<8x128xf32>
    %437 = tpu.matmul %403, %436, %cst_140 {dimension_numbers = #tpu.dot_dimension_numbers<[1], [0], [0], [1], [0, 0, 1, 1], [], []>} : vector<8x32xf32>, vector<32x128xf32>, vector<8x128xf32> -> vector<8x128xf32>
    %c184_141 = arith.constant 184 : index
    %c0_142 = arith.constant 0 : index
    %438 = vector.load %arg2[%c184_141, %c0_142] : memref<264x128xf32, #tpu.memory_space<vmem>>, vector<32x128xf32>
    %cst_143 = arith.constant dense<0.000000e+00> : vector<8x128xf32>
    %439 = tpu.matmul %425, %438, %cst_143 {dimension_numbers = #tpu.dot_dimension_numbers<[1], [0], [0], [1], [0, 0, 1, 1], [], []>} : vector<8x32xf32>, vector<32x128xf32>, vector<8x128xf32> -> vector<8x128xf32>
    %440 = vector.extract_strided_slice %12 {offsets = [48, 0], sizes = [8, 128], strides = [1, 1]} : vector<64x128xf32> to vector<8x128xf32>
    %441 = vector.extract_strided_slice %440 {offsets = [0, 0], sizes = [8, 64], strides = [1, 1]} : vector<8x128xf32> to vector<8x64xf32>
    %442 = vector.extract_strided_slice %431 {offsets = [0, 0], sizes = [8, 64], strides = [1, 1]} : vector<8x128xf32> to vector<8x64xf32>
    %443 = arith.addf %441, %442 : vector<8x64xf32>
    %444 = arith.negf %443 : vector<8x64xf32>
    %445 = math.exp %444 : vector<8x64xf32>
    %cst_144 = arith.constant 1.000000e+00 : f32
    %446 = vector.broadcast %cst_144 : f32 to vector<8x64xf32>
    %447 = arith.addf %446, %445 : vector<8x64xf32>
    %448 = arith.divf %446, %447 : vector<8x64xf32>
    %449 = vector.extract_strided_slice %448 {offsets = [0, 0], sizes = [8, 32], strides = [1, 1]} : vector<8x64xf32> to vector<8x32xf32>
    %450 = vector.extract_strided_slice %448 {offsets = [0, 32], sizes = [8, 32], strides = [1, 1]} : vector<8x64xf32> to vector<8x32xf32>
    %451 = vector.extract_strided_slice %440 {offsets = [0, 64], sizes = [8, 32], strides = [1, 1]} : vector<8x128xf32> to vector<8x32xf32>
    %452 = vector.extract_strided_slice %431 {offsets = [0, 64], sizes = [8, 32], strides = [1, 1]} : vector<8x128xf32> to vector<8x32xf32>
    %453 = arith.addf %452, %23 : vector<8x32xf32>
    %454 = arith.mulf %449, %453 : vector<8x32xf32>
    %455 = arith.addf %451, %454 : vector<8x32xf32>
    %456 = math.tanh %455 : vector<8x32xf32>
    %cst_145 = arith.constant 1.000000e+00 : f32
    %457 = vector.broadcast %cst_145 : f32 to vector<8x32xf32>
    %458 = arith.subf %457, %450 : vector<8x32xf32>
    %459 = arith.mulf %458, %456 : vector<8x32xf32>
    %460 = arith.mulf %450, %381 : vector<8x32xf32>
    %461 = arith.addf %459, %460 : vector<8x32xf32>
    %462 = arith.addf %433, %15 : vector<8x128xf32>
    %463 = vector.extract_strided_slice %462 {offsets = [0, 0], sizes = [8, 64], strides = [1, 1]} : vector<8x128xf32> to vector<8x64xf32>
    %464 = vector.extract_strided_slice %435 {offsets = [0, 0], sizes = [8, 64], strides = [1, 1]} : vector<8x128xf32> to vector<8x64xf32>
    %465 = arith.addf %463, %464 : vector<8x64xf32>
    %466 = arith.negf %465 : vector<8x64xf32>
    %467 = math.exp %466 : vector<8x64xf32>
    %cst_146 = arith.constant 1.000000e+00 : f32
    %468 = vector.broadcast %cst_146 : f32 to vector<8x64xf32>
    %469 = arith.addf %468, %467 : vector<8x64xf32>
    %470 = arith.divf %468, %469 : vector<8x64xf32>
    %471 = vector.extract_strided_slice %470 {offsets = [0, 0], sizes = [8, 32], strides = [1, 1]} : vector<8x64xf32> to vector<8x32xf32>
    %472 = vector.extract_strided_slice %470 {offsets = [0, 32], sizes = [8, 32], strides = [1, 1]} : vector<8x64xf32> to vector<8x32xf32>
    %473 = vector.extract_strided_slice %462 {offsets = [0, 64], sizes = [8, 32], strides = [1, 1]} : vector<8x128xf32> to vector<8x32xf32>
    %474 = vector.extract_strided_slice %435 {offsets = [0, 64], sizes = [8, 32], strides = [1, 1]} : vector<8x128xf32> to vector<8x32xf32>
    %475 = arith.addf %474, %26 : vector<8x32xf32>
    %476 = arith.mulf %471, %475 : vector<8x32xf32>
    %477 = arith.addf %473, %476 : vector<8x32xf32>
    %478 = math.tanh %477 : vector<8x32xf32>
    %cst_147 = arith.constant 1.000000e+00 : f32
    %479 = vector.broadcast %cst_147 : f32 to vector<8x32xf32>
    %480 = arith.subf %479, %472 : vector<8x32xf32>
    %481 = arith.mulf %480, %478 : vector<8x32xf32>
    %482 = arith.mulf %472, %403 : vector<8x32xf32>
    %483 = arith.addf %481, %482 : vector<8x32xf32>
    %484 = arith.addf %437, %18 : vector<8x128xf32>
    %485 = vector.extract_strided_slice %484 {offsets = [0, 0], sizes = [8, 64], strides = [1, 1]} : vector<8x128xf32> to vector<8x64xf32>
    %486 = vector.extract_strided_slice %439 {offsets = [0, 0], sizes = [8, 64], strides = [1, 1]} : vector<8x128xf32> to vector<8x64xf32>
    %487 = arith.addf %485, %486 : vector<8x64xf32>
    %488 = arith.negf %487 : vector<8x64xf32>
    %489 = math.exp %488 : vector<8x64xf32>
    %cst_148 = arith.constant 1.000000e+00 : f32
    %490 = vector.broadcast %cst_148 : f32 to vector<8x64xf32>
    %491 = arith.addf %490, %489 : vector<8x64xf32>
    %492 = arith.divf %490, %491 : vector<8x64xf32>
    %493 = vector.extract_strided_slice %492 {offsets = [0, 0], sizes = [8, 32], strides = [1, 1]} : vector<8x64xf32> to vector<8x32xf32>
    %494 = vector.extract_strided_slice %492 {offsets = [0, 32], sizes = [8, 32], strides = [1, 1]} : vector<8x64xf32> to vector<8x32xf32>
    %495 = vector.extract_strided_slice %484 {offsets = [0, 64], sizes = [8, 32], strides = [1, 1]} : vector<8x128xf32> to vector<8x32xf32>
    %496 = vector.extract_strided_slice %439 {offsets = [0, 64], sizes = [8, 32], strides = [1, 1]} : vector<8x128xf32> to vector<8x32xf32>
    %497 = arith.addf %496, %29 : vector<8x32xf32>
    %498 = arith.mulf %493, %497 : vector<8x32xf32>
    %499 = arith.addf %495, %498 : vector<8x32xf32>
    %500 = math.tanh %499 : vector<8x32xf32>
    %cst_149 = arith.constant 1.000000e+00 : f32
    %501 = vector.broadcast %cst_149 : f32 to vector<8x32xf32>
    %502 = arith.subf %501, %494 : vector<8x32xf32>
    %503 = arith.mulf %502, %500 : vector<8x32xf32>
    %504 = arith.mulf %494, %425 : vector<8x32xf32>
    %505 = arith.addf %503, %504 : vector<8x32xf32>
    %c224_150 = arith.constant 224 : index
    %c0_151 = arith.constant 0 : index
    %506 = vector.load %arg2[%c224_150, %c0_151] : memref<264x128xf32, #tpu.memory_space<vmem>>, vector<32x128xf32>
    %cst_152 = arith.constant dense<0.000000e+00> : vector<8x128xf32>
    %507 = tpu.matmul %505, %506, %cst_152 {dimension_numbers = #tpu.dot_dimension_numbers<[1], [0], [0], [1], [0, 0, 1, 1], [], []>} : vector<8x32xf32>, vector<32x128xf32>, vector<8x128xf32> -> vector<8x128xf32>
    %508 = arith.addf %507, %32 : vector<8x128xf32>
    %c32_153 = arith.constant 32 : index
    %c0_154 = arith.constant 0 : index
    %509 = vector.load %arg3[%c32_153, %c0_154] : memref<64x128xf32, #tpu.memory_space<vmem>>, vector<8x128xf32>
    tpu.vector_store %arg3[%c32_153, %c0_154], %508 {strides = array<i32>} : memref<64x128xf32, #tpu.memory_space<vmem>>, vector<8x128xf32>,
    %c40_155 = arith.constant 40 : index
    %c0_156 = arith.constant 0 : index
    %510 = vector.load %arg2[%c40_155, %c0_156] : memref<264x128xf32, #tpu.memory_space<vmem>>, vector<32x128xf32>
    %cst_157 = arith.constant dense<0.000000e+00> : vector<8x128xf32>
    %511 = tpu.matmul %461, %510, %cst_157 {dimension_numbers = #tpu.dot_dimension_numbers<[1], [0], [0], [1], [0, 0, 1, 1], [], []>} : vector<8x32xf32>, vector<32x128xf32>, vector<8x128xf32> -> vector<8x128xf32>
    %c72_158 = arith.constant 72 : index
    %c0_159 = arith.constant 0 : index
    %512 = vector.load %arg2[%c72_158, %c0_159] : memref<264x128xf32, #tpu.memory_space<vmem>>, vector<32x128xf32>
    %cst_160 = arith.constant dense<0.000000e+00> : vector<8x128xf32>
    %513 = tpu.matmul %461, %512, %cst_160 {dimension_numbers = #tpu.dot_dimension_numbers<[1], [0], [0], [1], [0, 0, 1, 1], [], []>} : vector<8x32xf32>, vector<32x128xf32>, vector<8x128xf32> -> vector<8x128xf32>
    %c112_161 = arith.constant 112 : index
    %c0_162 = arith.constant 0 : index
    %514 = vector.load %arg2[%c112_161, %c0_162] : memref<264x128xf32, #tpu.memory_space<vmem>>, vector<32x128xf32>
    %cst_163 = arith.constant dense<0.000000e+00> : vector<8x128xf32>
    %515 = tpu.matmul %483, %514, %cst_163 {dimension_numbers = #tpu.dot_dimension_numbers<[1], [0], [0], [1], [0, 0, 1, 1], [], []>} : vector<8x32xf32>, vector<32x128xf32>, vector<8x128xf32> -> vector<8x128xf32>
    %c144_164 = arith.constant 144 : index
    %c0_165 = arith.constant 0 : index
    %516 = vector.load %arg2[%c144_164, %c0_165] : memref<264x128xf32, #tpu.memory_space<vmem>>, vector<32x128xf32>
    %cst_166 = arith.constant dense<0.000000e+00> : vector<8x128xf32>
    %517 = tpu.matmul %483, %516, %cst_166 {dimension_numbers = #tpu.dot_dimension_numbers<[1], [0], [0], [1], [0, 0, 1, 1], [], []>} : vector<8x32xf32>, vector<32x128xf32>, vector<8x128xf32> -> vector<8x128xf32>
    %c184_167 = arith.constant 184 : index
    %c0_168 = arith.constant 0 : index
    %518 = vector.load %arg2[%c184_167, %c0_168] : memref<264x128xf32, #tpu.memory_space<vmem>>, vector<32x128xf32>
    %cst_169 = arith.constant dense<0.000000e+00> : vector<8x128xf32>
    %519 = tpu.matmul %505, %518, %cst_169 {dimension_numbers = #tpu.dot_dimension_numbers<[1], [0], [0], [1], [0, 0, 1, 1], [], []>} : vector<8x32xf32>, vector<32x128xf32>, vector<8x128xf32> -> vector<8x128xf32>
    %520 = vector.extract_strided_slice %12 {offsets = [56, 0], sizes = [8, 128], strides = [1, 1]} : vector<64x128xf32> to vector<8x128xf32>
    %521 = vector.extract_strided_slice %520 {offsets = [0, 0], sizes = [8, 64], strides = [1, 1]} : vector<8x128xf32> to vector<8x64xf32>
    %522 = vector.extract_strided_slice %511 {offsets = [0, 0], sizes = [8, 64], strides = [1, 1]} : vector<8x128xf32> to vector<8x64xf32>
    %523 = arith.addf %521, %522 : vector<8x64xf32>
    %524 = arith.negf %523 : vector<8x64xf32>
    %525 = math.exp %524 : vector<8x64xf32>
    %cst_170 = arith.constant 1.000000e+00 : f32
    %526 = vector.broadcast %cst_170 : f32 to vector<8x64xf32>
    %527 = arith.addf %526, %525 : vector<8x64xf32>
    %528 = arith.divf %526, %527 : vector<8x64xf32>
    %529 = vector.extract_strided_slice %528 {offsets = [0, 0], sizes = [8, 32], strides = [1, 1]} : vector<8x64xf32> to vector<8x32xf32>
    %530 = vector.extract_strided_slice %528 {offsets = [0, 32], sizes = [8, 32], strides = [1, 1]} : vector<8x64xf32> to vector<8x32xf32>
    %531 = vector.extract_strided_slice %520 {offsets = [0, 64], sizes = [8, 32], strides = [1, 1]} : vector<8x128xf32> to vector<8x32xf32>
    %532 = vector.extract_strided_slice %511 {offsets = [0, 64], sizes = [8, 32], strides = [1, 1]} : vector<8x128xf32> to vector<8x32xf32>
    %533 = arith.addf %532, %23 : vector<8x32xf32>
    %534 = arith.mulf %529, %533 : vector<8x32xf32>
    %535 = arith.addf %531, %534 : vector<8x32xf32>
    %536 = math.tanh %535 : vector<8x32xf32>
    %cst_171 = arith.constant 1.000000e+00 : f32
    %537 = vector.broadcast %cst_171 : f32 to vector<8x32xf32>
    %538 = arith.subf %537, %530 : vector<8x32xf32>
    %539 = arith.mulf %538, %536 : vector<8x32xf32>
    %540 = arith.mulf %530, %461 : vector<8x32xf32>
    %541 = arith.addf %539, %540 : vector<8x32xf32>
    %542 = arith.addf %513, %15 : vector<8x128xf32>
    %543 = vector.extract_strided_slice %542 {offsets = [0, 0], sizes = [8, 64], strides = [1, 1]} : vector<8x128xf32> to vector<8x64xf32>
    %544 = vector.extract_strided_slice %515 {offsets = [0, 0], sizes = [8, 64], strides = [1, 1]} : vector<8x128xf32> to vector<8x64xf32>
    %545 = arith.addf %543, %544 : vector<8x64xf32>
    %546 = arith.negf %545 : vector<8x64xf32>
    %547 = math.exp %546 : vector<8x64xf32>
    %cst_172 = arith.constant 1.000000e+00 : f32
    %548 = vector.broadcast %cst_172 : f32 to vector<8x64xf32>
    %549 = arith.addf %548, %547 : vector<8x64xf32>
    %550 = arith.divf %548, %549 : vector<8x64xf32>
    %551 = vector.extract_strided_slice %550 {offsets = [0, 0], sizes = [8, 32], strides = [1, 1]} : vector<8x64xf32> to vector<8x32xf32>
    %552 = vector.extract_strided_slice %550 {offsets = [0, 32], sizes = [8, 32], strides = [1, 1]} : vector<8x64xf32> to vector<8x32xf32>
    %553 = vector.extract_strided_slice %542 {offsets = [0, 64], sizes = [8, 32], strides = [1, 1]} : vector<8x128xf32> to vector<8x32xf32>
    %554 = vector.extract_strided_slice %515 {offsets = [0, 64], sizes = [8, 32], strides = [1, 1]} : vector<8x128xf32> to vector<8x32xf32>
    %555 = arith.addf %554, %26 : vector<8x32xf32>
    %556 = arith.mulf %551, %555 : vector<8x32xf32>
    %557 = arith.addf %553, %556 : vector<8x32xf32>
    %558 = math.tanh %557 : vector<8x32xf32>
    %cst_173 = arith.constant 1.000000e+00 : f32
    %559 = vector.broadcast %cst_173 : f32 to vector<8x32xf32>
    %560 = arith.subf %559, %552 : vector<8x32xf32>
    %561 = arith.mulf %560, %558 : vector<8x32xf32>
    %562 = arith.mulf %552, %483 : vector<8x32xf32>
    %563 = arith.addf %561, %562 : vector<8x32xf32>
    %564 = arith.addf %517, %18 : vector<8x128xf32>
    %565 = vector.extract_strided_slice %564 {offsets = [0, 0], sizes = [8, 64], strides = [1, 1]} : vector<8x128xf32> to vector<8x64xf32>
    %566 = vector.extract_strided_slice %519 {offsets = [0, 0], sizes = [8, 64], strides = [1, 1]} : vector<8x128xf32> to vector<8x64xf32>
    %567 = arith.addf %565, %566 : vector<8x64xf32>
    %568 = arith.negf %567 : vector<8x64xf32>
    %569 = math.exp %568 : vector<8x64xf32>
    %cst_174 = arith.constant 1.000000e+00 : f32
    %570 = vector.broadcast %cst_174 : f32 to vector<8x64xf32>
    %571 = arith.addf %570, %569 : vector<8x64xf32>
    %572 = arith.divf %570, %571 : vector<8x64xf32>
    %573 = vector.extract_strided_slice %572 {offsets = [0, 0], sizes = [8, 32], strides = [1, 1]} : vector<8x64xf32> to vector<8x32xf32>
    %574 = vector.extract_strided_slice %572 {offsets = [0, 32], sizes = [8, 32], strides = [1, 1]} : vector<8x64xf32> to vector<8x32xf32>
    %575 = vector.extract_strided_slice %564 {offsets = [0, 64], sizes = [8, 32], strides = [1, 1]} : vector<8x128xf32> to vector<8x32xf32>
    %576 = vector.extract_strided_slice %519 {offsets = [0, 64], sizes = [8, 32], strides = [1, 1]} : vector<8x128xf32> to vector<8x32xf32>
    %577 = arith.addf %576, %29 : vector<8x32xf32>
    %578 = arith.mulf %573, %577 : vector<8x32xf32>
    %579 = arith.addf %575, %578 : vector<8x32xf32>
    %580 = math.tanh %579 : vector<8x32xf32>
    %cst_175 = arith.constant 1.000000e+00 : f32
    %581 = vector.broadcast %cst_175 : f32 to vector<8x32xf32>
    %582 = arith.subf %581, %574 : vector<8x32xf32>
    %583 = arith.mulf %582, %580 : vector<8x32xf32>
    %584 = arith.mulf %574, %505 : vector<8x32xf32>
    %585 = arith.addf %583, %584 : vector<8x32xf32>
    %c224_176 = arith.constant 224 : index
    %c0_177 = arith.constant 0 : index
    %586 = vector.load %arg2[%c224_176, %c0_177] : memref<264x128xf32, #tpu.memory_space<vmem>>, vector<32x128xf32>
    %cst_178 = arith.constant dense<0.000000e+00> : vector<8x128xf32>
    %587 = tpu.matmul %585, %586, %cst_178 {dimension_numbers = #tpu.dot_dimension_numbers<[1], [0], [0], [1], [0, 0, 1, 1], [], []>} : vector<8x32xf32>, vector<32x128xf32>, vector<8x128xf32> -> vector<8x128xf32>
    %588 = arith.addf %587, %32 : vector<8x128xf32>
    %c40_179 = arith.constant 40 : index
    %c0_180 = arith.constant 0 : index
    %589 = vector.load %arg3[%c40_179, %c0_180] : memref<64x128xf32, #tpu.memory_space<vmem>>, vector<8x128xf32>
    tpu.vector_store %arg3[%c40_179, %c0_180], %588 {strides = array<i32>} : memref<64x128xf32, #tpu.memory_space<vmem>>, vector<8x128xf32>,
    %c72_181 = arith.constant 72 : index
    %c0_182 = arith.constant 0 : index
    %590 = vector.load %arg2[%c72_181, %c0_182] : memref<264x128xf32, #tpu.memory_space<vmem>>, vector<32x128xf32>
    %cst_183 = arith.constant dense<0.000000e+00> : vector<8x128xf32>
    %591 = tpu.matmul %541, %590, %cst_183 {dimension_numbers = #tpu.dot_dimension_numbers<[1], [0], [0], [1], [0, 0, 1, 1], [], []>} : vector<8x32xf32>, vector<32x128xf32>, vector<8x128xf32> -> vector<8x128xf32>
    %c112_184 = arith.constant 112 : index
    %c0_185 = arith.constant 0 : index
    %592 = vector.load %arg2[%c112_184, %c0_185] : memref<264x128xf32, #tpu.memory_space<vmem>>, vector<32x128xf32>
    %cst_186 = arith.constant dense<0.000000e+00> : vector<8x128xf32>
    %593 = tpu.matmul %563, %592, %cst_186 {dimension_numbers = #tpu.dot_dimension_numbers<[1], [0], [0], [1], [0, 0, 1, 1], [], []>} : vector<8x32xf32>, vector<32x128xf32>, vector<8x128xf32> -> vector<8x128xf32>
    %c144_187 = arith.constant 144 : index
    %c0_188 = arith.constant 0 : index
    %594 = vector.load %arg2[%c144_187, %c0_188] : memref<264x128xf32, #tpu.memory_space<vmem>>, vector<32x128xf32>
    %cst_189 = arith.constant dense<0.000000e+00> : vector<8x128xf32>
    %595 = tpu.matmul %563, %594, %cst_189 {dimension_numbers = #tpu.dot_dimension_numbers<[1], [0], [0], [1], [0, 0, 1, 1], [], []>} : vector<8x32xf32>, vector<32x128xf32>, vector<8x128xf32> -> vector<8x128xf32>
    %c184_190 = arith.constant 184 : index
    %c0_191 = arith.constant 0 : index
    %596 = vector.load %arg2[%c184_190, %c0_191] : memref<264x128xf32, #tpu.memory_space<vmem>>, vector<32x128xf32>
    %cst_192 = arith.constant dense<0.000000e+00> : vector<8x128xf32>
    %597 = tpu.matmul %585, %596, %cst_192 {dimension_numbers = #tpu.dot_dimension_numbers<[1], [0], [0], [1], [0, 0, 1, 1], [], []>} : vector<8x32xf32>, vector<32x128xf32>, vector<8x128xf32> -> vector<8x128xf32>
    %598 = arith.addf %591, %15 : vector<8x128xf32>
    %599 = vector.extract_strided_slice %598 {offsets = [0, 0], sizes = [8, 64], strides = [1, 1]} : vector<8x128xf32> to vector<8x64xf32>
    %600 = vector.extract_strided_slice %593 {offsets = [0, 0], sizes = [8, 64], strides = [1, 1]} : vector<8x128xf32> to vector<8x64xf32>
    %601 = arith.addf %599, %600 : vector<8x64xf32>
    %602 = arith.negf %601 : vector<8x64xf32>
    %603 = math.exp %602 : vector<8x64xf32>
    %cst_193 = arith.constant 1.000000e+00 : f32
    %604 = vector.broadcast %cst_193 : f32 to vector<8x64xf32>
    %605 = arith.addf %604, %603 : vector<8x64xf32>
    %606 = arith.divf %604, %605 : vector<8x64xf32>
    %607 = vector.extract_strided_slice %606 {offsets = [0, 0], sizes = [8, 32], strides = [1, 1]} : vector<8x64xf32> to vector<8x32xf32>
    %608 = vector.extract_strided_slice %606 {offsets = [0, 32], sizes = [8, 32], strides = [1, 1]} : vector<8x64xf32> to vector<8x32xf32>
    %609 = vector.extract_strided_slice %598 {offsets = [0, 64], sizes = [8, 32], strides = [1, 1]} : vector<8x128xf32> to vector<8x32xf32>
    %610 = vector.extract_strided_slice %593 {offsets = [0, 64], sizes = [8, 32], strides = [1, 1]} : vector<8x128xf32> to vector<8x32xf32>
    %611 = arith.addf %610, %26 : vector<8x32xf32>
    %612 = arith.mulf %607, %611 : vector<8x32xf32>
    %613 = arith.addf %609, %612 : vector<8x32xf32>
    %614 = math.tanh %613 : vector<8x32xf32>
    %cst_194 = arith.constant 1.000000e+00 : f32
    %615 = vector.broadcast %cst_194 : f32 to vector<8x32xf32>
    %616 = arith.subf %615, %608 : vector<8x32xf32>
    %617 = arith.mulf %616, %614 : vector<8x32xf32>
    %618 = arith.mulf %608, %563 : vector<8x32xf32>
    %619 = arith.addf %617, %618 : vector<8x32xf32>
    %620 = arith.addf %595, %18 : vector<8x128xf32>
    %621 = vector.extract_strided_slice %620 {offsets = [0, 0], sizes = [8, 64], strides = [1, 1]} : vector<8x128xf32> to vector<8x64xf32>
    %622 = vector.extract_strided_slice %597 {offsets = [0, 0], sizes = [8, 64], strides = [1, 1]} : vector<8x128xf32> to vector<8x64xf32>
    %623 = arith.addf %621, %622 : vector<8x64xf32>
    %624 = arith.negf %623 : vector<8x64xf32>
    %625 = math.exp %624 : vector<8x64xf32>
    %cst_195 = arith.constant 1.000000e+00 : f32
    %626 = vector.broadcast %cst_195 : f32 to vector<8x64xf32>
    %627 = arith.addf %626, %625 : vector<8x64xf32>
    %628 = arith.divf %626, %627 : vector<8x64xf32>
    %629 = vector.extract_strided_slice %628 {offsets = [0, 0], sizes = [8, 32], strides = [1, 1]} : vector<8x64xf32> to vector<8x32xf32>
    %630 = vector.extract_strided_slice %628 {offsets = [0, 32], sizes = [8, 32], strides = [1, 1]} : vector<8x64xf32> to vector<8x32xf32>
    %631 = vector.extract_strided_slice %620 {offsets = [0, 64], sizes = [8, 32], strides = [1, 1]} : vector<8x128xf32> to vector<8x32xf32>
    %632 = vector.extract_strided_slice %597 {offsets = [0, 64], sizes = [8, 32], strides = [1, 1]} : vector<8x128xf32> to vector<8x32xf32>
    %633 = arith.addf %632, %29 : vector<8x32xf32>
    %634 = arith.mulf %629, %633 : vector<8x32xf32>
    %635 = arith.addf %631, %634 : vector<8x32xf32>
    %636 = math.tanh %635 : vector<8x32xf32>
    %cst_196 = arith.constant 1.000000e+00 : f32
    %637 = vector.broadcast %cst_196 : f32 to vector<8x32xf32>
    %638 = arith.subf %637, %630 : vector<8x32xf32>
    %639 = arith.mulf %638, %636 : vector<8x32xf32>
    %640 = arith.mulf %630, %585 : vector<8x32xf32>
    %641 = arith.addf %639, %640 : vector<8x32xf32>
    %c224_197 = arith.constant 224 : index
    %c0_198 = arith.constant 0 : index
    %642 = vector.load %arg2[%c224_197, %c0_198] : memref<264x128xf32, #tpu.memory_space<vmem>>, vector<32x128xf32>
    %cst_199 = arith.constant dense<0.000000e+00> : vector<8x128xf32>
    %643 = tpu.matmul %641, %642, %cst_199 {dimension_numbers = #tpu.dot_dimension_numbers<[1], [0], [0], [1], [0, 0, 1, 1], [], []>} : vector<8x32xf32>, vector<32x128xf32>, vector<8x128xf32> -> vector<8x128xf32>
    %644 = arith.addf %643, %32 : vector<8x128xf32>
    %c48 = arith.constant 48 : index
    %c0_200 = arith.constant 0 : index
    %645 = vector.load %arg3[%c48, %c0_200] : memref<64x128xf32, #tpu.memory_space<vmem>>, vector<8x128xf32>
    tpu.vector_store %arg3[%c48, %c0_200], %644 {strides = array<i32>} : memref<64x128xf32, #tpu.memory_space<vmem>>, vector<8x128xf32>,
    %c144_201 = arith.constant 144 : index
    %c0_202 = arith.constant 0 : index
    %646 = vector.load %arg2[%c144_201, %c0_202] : memref<264x128xf32, #tpu.memory_space<vmem>>, vector<32x128xf32>
    %cst_203 = arith.constant dense<0.000000e+00> : vector<8x128xf32>
    %647 = tpu.matmul %619, %646, %cst_203 {dimension_numbers = #tpu.dot_dimension_numbers<[1], [0], [0], [1], [0, 0, 1, 1], [], []>} : vector<8x32xf32>, vector<32x128xf32>, vector<8x128xf32> -> vector<8x128xf32>
    %c184_204 = arith.constant 184 : index
    %c0_205 = arith.constant 0 : index
    %648 = vector.load %arg2[%c184_204, %c0_205] : memref<264x128xf32, #tpu.memory_space<vmem>>, vector<32x128xf32>
    %cst_206 = arith.constant dense<0.000000e+00> : vector<8x128xf32>
    %649 = tpu.matmul %641, %648, %cst_206 {dimension_numbers = #tpu.dot_dimension_numbers<[1], [0], [0], [1], [0, 0, 1, 1], [], []>} : vector<8x32xf32>, vector<32x128xf32>, vector<8x128xf32> -> vector<8x128xf32>
    %650 = arith.addf %647, %18 : vector<8x128xf32>
    %651 = vector.extract_strided_slice %650 {offsets = [0, 0], sizes = [8, 64], strides = [1, 1]} : vector<8x128xf32> to vector<8x64xf32>
    %652 = vector.extract_strided_slice %649 {offsets = [0, 0], sizes = [8, 64], strides = [1, 1]} : vector<8x128xf32> to vector<8x64xf32>
    %653 = arith.addf %651, %652 : vector<8x64xf32>
    %654 = arith.negf %653 : vector<8x64xf32>
    %655 = math.exp %654 : vector<8x64xf32>
    %cst_207 = arith.constant 1.000000e+00 : f32
    %656 = vector.broadcast %cst_207 : f32 to vector<8x64xf32>
    %657 = arith.addf %656, %655 : vector<8x64xf32>
    %658 = arith.divf %656, %657 : vector<8x64xf32>
    %659 = vector.extract_strided_slice %658 {offsets = [0, 0], sizes = [8, 32], strides = [1, 1]} : vector<8x64xf32> to vector<8x32xf32>
    %660 = vector.extract_strided_slice %658 {offsets = [0, 32], sizes = [8, 32], strides = [1, 1]} : vector<8x64xf32> to vector<8x32xf32>
    %661 = vector.extract_strided_slice %650 {offsets = [0, 64], sizes = [8, 32], strides = [1, 1]} : vector<8x128xf32> to vector<8x32xf32>
    %662 = vector.extract_strided_slice %649 {offsets = [0, 64], sizes = [8, 32], strides = [1, 1]} : vector<8x128xf32> to vector<8x32xf32>
    %663 = arith.addf %662, %29 : vector<8x32xf32>
    %664 = arith.mulf %659, %663 : vector<8x32xf32>
    %665 = arith.addf %661, %664 : vector<8x32xf32>
    %666 = math.tanh %665 : vector<8x32xf32>
    %cst_208 = arith.constant 1.000000e+00 : f32
    %667 = vector.broadcast %cst_208 : f32 to vector<8x32xf32>
    %668 = arith.subf %667, %660 : vector<8x32xf32>
    %669 = arith.mulf %668, %666 : vector<8x32xf32>
    %670 = arith.mulf %660, %641 : vector<8x32xf32>
    %671 = arith.addf %669, %670 : vector<8x32xf32>
    %c224_209 = arith.constant 224 : index
    %c0_210 = arith.constant 0 : index
    %672 = vector.load %arg2[%c224_209, %c0_210] : memref<264x128xf32, #tpu.memory_space<vmem>>, vector<32x128xf32>
    %cst_211 = arith.constant dense<0.000000e+00> : vector<8x128xf32>
    %673 = tpu.matmul %671, %672, %cst_211 {dimension_numbers = #tpu.dot_dimension_numbers<[1], [0], [0], [1], [0, 0, 1, 1], [], []>} : vector<8x32xf32>, vector<32x128xf32>, vector<8x128xf32> -> vector<8x128xf32>
    %674 = arith.addf %673, %32 : vector<8x128xf32>
    %c56 = arith.constant 56 : index
    %c0_212 = arith.constant 0 : index
    %675 = vector.load %arg3[%c56, %c0_212] : memref<64x128xf32, #tpu.memory_space<vmem>>, vector<8x128xf32>
    tpu.vector_store %arg3[%c56, %c0_212], %674 {strides = array<i32>} : memref<64x128xf32, #tpu.memory_space<vmem>>, vector<8x128xf32>,
    return
  }
  func.func @transform_0(%arg0: i32) -> (i32, i32) {
    %c0_i32 = arith.constant 0 : i32
    %c0_i32_0 = arith.constant 0 : i32
    %c0_i32_1 = arith.constant 0 : i32
    return %c0_i32, %c0_i32_0 : i32, i32
  }
  func.func @transform_1(%arg0: i32) -> (i32, i32) {
    %c0_i32 = arith.constant 0 : i32
    %c0_i32_0 = arith.constant 0 : i32
    %c0_i32_1 = arith.constant 0 : i32
    return %c0_i32, %c0_i32_0 : i32, i32
  }
  func.func @transform_2(%arg0: i32) -> (i32, i32) {
    %c0_i32 = arith.constant 0 : i32
    %c0_i32_0 = arith.constant 0 : i32
    %c0_i32_1 = arith.constant 0 : i32
    return %c0_i32, %c0_i32_0 : i32, i32
  }
}

</mosaic_0001>

<llo_original>
// kernel: tpu_custom_call.1
$region0: #{tpu_custom_call.1}
  #allocation0 [shape = 'u32[]', space=smem, size = 0x4, offset = 0x4, fixed_abs, tag = 'smem constant byte address 0x4 - core index']
  #allocation1 [shape = 'u32[72,128]{1,0:T(1,128)}', space=vmem, size = 0x9000, scoped, tag = 'internal scratch']
  %s0 = inlined_call_operand.vmem [shape: f32[64,16], index: 0, kind: input, shape index: {}]
  %s1 = inlined_call_operand.hbm [shape: f32[264,128], index: 1, kind: input, shape index: {}]
  %s2 = inlined_call_operand.hbm [shape: f32[64,128], index: 2, kind: output, shape index: {}]
  %s3 = sld [smem:[#allocation0]]
  $region22: #{tpu_custom_call.1} parent=0
    _
  %s5 = ssub.s32 1, %s3
  %s6 = scalar_select 0, %s5, %s3
  $region1: #{tpu_custom_call.1} parent=0
    #allocation2 [shape = 'u8[135168]{0}', space=vmem, size = 0x21000, scoped, tag = 'input window, operand 1, single buffered']
    #allocation3 [shape = 's32[1]{0}', space=sflag, size = 0x4, scoped, tag = 'scoped memory for tpu_custom_call.1']
    #allocation4 [shape = 's32[1]{0}', space=sflag, size = 0x4, scoped, tag = 'scoped memory for tpu_custom_call.1']
    #allocation5 [shape = 'u8[32768]{0}', space=vmem, size = 0x8000, scoped, tag = 'output window, operand 0, single buffered']
    %7 = vsyncpa [#allocation3], 0
    %8 = vsyncpa [#allocation4], 0
    // Predicated region
    $region2: #{tpu_custom_call.1} parent=1 // pred_check
      _
    $region3: #{tpu_custom_call.1} parent=1 // pred_check_branch
      %10 = sbr.rel (0) target = $region5
    $region4: #{tpu_custom_call.1} parent=1 // pred_region
      _
    $region5: #{tpu_custom_call.1} parent=1 // pred_fallthru
      _
    // Predicated region
    $region6: #{tpu_custom_call.1} parent=1 // pred_check
      _
    $region7: #{tpu_custom_call.1} parent=1 // pred_check_branch
      %12 = sbr.rel (0) target = $region9
    $region8: #{tpu_custom_call.1} parent=1 // pred_region
      %14 = vsyncadd [#allocation3], 0
      %s15 = sshll.u32 %s1, 4
      %s16 = int_to_ptr.hbm [resolvable:$true] %s15
      %s17 = sshll.u32 [#allocation2], 4
      %s18 = int_to_ptr.vmem [resolvable:$true] %s17
      %23 = dma.hbm_to_vmem [thread:$0]  %s16, 4224, %s18, [#allocation3], 128, 128, 8
    $region9: #{tpu_custom_call.1} parent=1 // pred_fallthru
      _
    // Predicated region
    $region10: #{tpu_custom_call.1} parent=1 // pred_check
      _
    $region11: #{tpu_custom_call.1} parent=1 // pred_check_branch
      %25 = sbr.rel (0) target = $region13
    $region12: #{tpu_custom_call.1} parent=1 // pred_region
      %27 = dma.done [#allocation3], 4224
    $region13: #{tpu_custom_call.1} parent=1 // pred_fallthru
      _
    %v28 = vld [vmem:[#allocation2] sm:$0xff]
    %v29 = vld [vmem:[#allocation2 + $0x8] sm:$0xff]
    %v30 = vld [vmem:[#allocation2 + $0x10] sm:$0x1]
    %v31 = vld [vmem:[%s0] sm:$0xff]
    %v32 = vld [vmem:[%s0 + $0x8] sm:$0xff]
    %v33 = vld [vmem:[%s0 + $0x10] sm:$0xff]
    %v34 = vld [vmem:[%s0 + $0x18] sm:$0xff]
    %v35 = vld [vmem:[%s0 + $0x20] sm:$0xff]
    %v36 = vld [vmem:[%s0 + $0x28] sm:$0xff]
    %v37 = vld [vmem:[%s0 + $0x30] sm:$0xff]
    %v38 = vld [vmem:[%s0 + $0x38] sm:$0xff]
    %v39 = vperm.slane %v30, 0
    %vm40 = vcmask 130048
    %v42 = vsel %vm40, %v31, 0
    %v45 = vsel %vm40, %v32, 0
    %v48 = vsel %vm40, %v33, 0
    %v51 = vsel %vm40, %v34, 0
    %v54 = vsel %vm40, %v35, 0
    %v57 = vsel %vm40, %v36, 0
    %v60 = vsel %vm40, %v37, 0
    %v63 = vsel %vm40, %v38, 0
    %65 = vmatpush.msra.mxu0 0.0
    %66 = vmatpush.msra.mxu0 0.0
    %67 = vmatpush.msra.mxu0 0.0
    %68 = vmatpush.msra.mxu0 0.0
    %69 = vmatpush.msra.mxu0 0.0
    %70 = vmatpush.msra.mxu0 0.0
    %71 = vmatpush.msra.mxu0 0.0
    %72 = vmatpush.msra.mxu0 0.0
    %73 = vmatpush.msra.mxu0 0.0
    %74 = vmatpush.msra.mxu0 0.0
    %75 = vmatpush.msra.mxu0 0.0
    %76 = vmatpush.msra.mxu0 0.0
    %77 = vmatpush.msra.mxu0 0.0
    %78 = vmatpush.msra.mxu0 0.0
    %79 = vmatpush.msra.mxu0 %v29
    %80 = vmatpush.msra.mxu0 %v28
    %81 = vmatmul.f32.gmra.mxu0 %v42
    %v82 = vpop.f32.mrf.mxu0
    %v83 = vadd.f32 %v39, %v82
    %84 = vmatmul.f32.gmra.mxu0 %v45
    %v85 = vpop.f32.mrf.mxu0
    %v86 = vadd.f32 %v39, %v85
    %87 = vmatmul.f32.gmra.mxu0 %v48
    %v88 = vpop.f32.mrf.mxu0
    %v89 = vadd.f32 %v39, %v88
    %90 = vmatmul.f32.gmra.mxu0 %v51
    %v91 = vpop.f32.mrf.mxu0
    %v92 = vadd.f32 %v39, %v91
    %93 = vmatmul.f32.gmra.mxu0 %v54
    %v94 = vpop.f32.mrf.mxu0
    %v95 = vadd.f32 %v39, %v94
    %96 = vmatmul.f32.gmra.mxu0 %v57
    %v97 = vpop.f32.mrf.mxu0
    %v98 = vadd.f32 %v39, %v97
    %99 = vmatmul.f32.gmra.mxu0 %v60
    %v100 = vpop.f32.mrf.mxu0
    %v101 = vadd.f32 %v39, %v100
    %102 = vmatmul.f32.gmra.mxu0 %v63
    %v103 = vpop.f32.mrf.mxu0
    %v104 = vadd.f32 %v39, %v103
    %105 = vdwg.mxu0
    %v106 = vld [vmem:[#allocation2 + $0x18] sm:$0xff]
    %v107 = vld [vmem:[#allocation2 + $0x20] sm:$0x1]
    %v108 = vperm.slane %v107, 0
    %vm109 = vcmask 64512
    %v111 = vsel %vm109, %v83, 0
    %v114 = vsel %vm109, %v86, 0
    %v117 = vsel %vm109, %v89, 0
    %v120 = vsel %vm109, %v92, 0
    %v123 = vsel %vm109, %v95, 0
    %v126 = vsel %vm109, %v98, 0
    %v129 = vsel %vm109, %v101, 0
    %v132 = vsel %vm109, %v104, 0
    %134 = vmatpush.msra.mxu0 0.0
    %135 = vmatpush.msra.mxu0 0.0
    %136 = vmatpush.msra.mxu0 0.0
    %137 = vmatpush.msra.mxu0 0.0
    %138 = vmatpush.msra.mxu0 0.0
    %139 = vmatpush.msra.mxu0 0.0
    %140 = vmatpush.msra.mxu0 0.0
    %141 = vmatpush.msra.mxu0 0.0
    %142 = vmatpush.msra.mxu0 0.0
    %143 = vmatpush.msra.mxu0 0.0
    %144 = vmatpush.msra.mxu0 0.0
    %145 = vmatpush.msra.mxu0 0.0
    %146 = vmatpush.msra.mxu0 0.0
    %147 = vmatpush.msra.mxu0 0.0
    %148 = vmatpush.msra.mxu0 0.0
    %149 = vmatpush.msra.mxu0 %v106
    %150 = vmatmul.f32.gmra.mxu0 %v111
    %v151 = vpop.f32.mrf.mxu0
    %v152 = vadd.f32 %v108, %v151
    %153 = vmatmul.f32.gmra.mxu0 %v114
    %v154 = vpop.f32.mrf.mxu0
    %v155 = vadd.f32 %v108, %v154
    %156 = vmatmul.f32.gmra.mxu0 %v117
    %v157 = vpop.f32.mrf.mxu0
    %v158 = vadd.f32 %v108, %v157
    %159 = vmatmul.f32.gmra.mxu0 %v120
    %v160 = vpop.f32.mrf.mxu0
    %v161 = vadd.f32 %v108, %v160
    %162 = vmatmul.f32.gmra.mxu0 %v123
    %v163 = vpop.f32.mrf.mxu0
    %v164 = vadd.f32 %v108, %v163
    %165 = vmatmul.f32.gmra.mxu0 %v126
    %v166 = vpop.f32.mrf.mxu0
    %v167 = vadd.f32 %v108, %v166
    %168 = vmatmul.f32.gmra.mxu0 %v129
    %v169 = vpop.f32.mrf.mxu0
    %v170 = vadd.f32 %v108, %v169
    %171 = vmatmul.f32.gmra.mxu0 %v132
    %v172 = vpop.f32.mrf.mxu0
    %v173 = vadd.f32 %v108, %v172
    %174 = vdwg.mxu0
    %v175 = vld [vmem:[#allocation2 + $0x68] sm:$0x1]
    %v176 = vperm.slane %v175, 0
    %v177 = vld [vmem:[#allocation2 + $0xb0] sm:$0x1]
    %v178 = vperm.slane %v177, 0
    %v179 = vld [vmem:[#allocation2 + $0xd8] sm:$0x7]
    %v180 = vperm.slane %v179, 0
    %v181 = vperm.slane %v179, 1
    %v182 = vperm.slane %v179, 2
    %v183 = vld [vmem:[#allocation2 + $0x100] sm:$0x1]
    %v184 = vperm.slane %v183, 0
    %v185 = vld [vmem:[#allocation2 + $0x28] sm:$0xff]
    %v186 = vld [vmem:[#allocation2 + $0x30] sm:$0xff]
    %v187 = vld [vmem:[#allocation2 + $0x38] sm:$0xff]
    %v188 = vld [vmem:[#allocation2 + $0x40] sm:$0xff]
    %vm189 = vcmask 261120
    %v191 = vsel %vm189, 0.0, 0
    %193 = vmatpush.msra.mxu0 0.0
    %194 = vmatpush.msra.mxu0 0.0
    %195 = vmatpush.msra.mxu0 0.0
    %196 = vmatpush.msra.mxu0 0.0
    %197 = vmatpush.msra.mxu0 0.0
    %198 = vmatpush.msra.mxu0 0.0
    %199 = vmatpush.msra.mxu0 0.0
    %200 = vmatpush.msra.mxu0 0.0
    %201 = vmatpush.msra.mxu0 0.0
    %202 = vmatpush.msra.mxu0 0.0
    %203 = vmatpush.msra.mxu0 0.0
    %204 = vmatpush.msra.mxu0 0.0
    %205 = vmatpush.msra.mxu0 %v188
    %206 = vmatpush.msra.mxu0 %v187
    %207 = vmatpush.msra.mxu0 %v186
    %208 = vmatpush.msra.mxu0 %v185
    %209 = vmatmul.f32.gmra.mxu0 %v191
    %v210 = vpop.f32.mrf.mxu0
    %v211 = vadd.f32 0.0, %v210
    %212 = vdwg.mxu0
    %v213 = vadd.f32 %v152, %v211
    %v214 = vxor.u32 %v213, 2147483648
    %v215 = vmul.f32 %v214, 1.442695
    %v216 = vpow.pop %v215
    %v217 = vadd.f32 %v216, 1.0
    %v218 = vrcp.pop %v217
    %v219 = vmul.f32 %v217, %v218
    %v220 = vsub.f32 1.0, %v219
    %v221 = vmul.f32 %v218, %v220
    %v222 = vadd.f32 %v218, %v221
    %vm223 = vweird.f32 %v217
    %vm224 = vweird.f32 %v218
    %vm225 = vmor %vm223, %vm224
    %v226 = vsel %vm225, %v218, %v222
    %v227 = vand.u32 2147483647, %v217
    %vm228 = vcmp.eq.f32.partialorder %v227, 8.507059e+37
    %v229 = vand.u32 %v217, 2147483648
    %v230 = vor.u32 1.1754944e-38, %v229
    %v231 = vsel %vm228, %v230, %v226
    %v232 = vmul.f32 1.0, %v231
    %234 = vrot.lane.b32.xlu0 %v180, 64
    %v235 = vpop.permute.xlu0 %234
    %v237 = vadd.f32 %v211, %v235
    %239 = vrot.lane.b32.xlu0 %v237, 64
    %v240 = vpop.permute.xlu0 %239
    %v242 = vmul.f32 %v232, %v240
    %244 = vrot.lane.b32.xlu0 %v242, 64
    %v245 = vpop.permute.xlu0 %244
    %v247 = vadd.f32 %v152, %v245
    %v248 = vtanh.pop %v247
    %v249 = vsub.f32 1.0, %v232
    %251 = vrot.lane.b32.xlu0 %v248, 96
    %v252 = vpop.permute.xlu0 %251
    %v254 = vmul.f32 %v249, %v252
    %v255 = vmul.f32 %v232, 0.0
    %v256 = vadd.f32 %v254, %v255
    %258 = vrot.lane.b32.xlu0 %v256, 96
    %v259 = vpop.permute.xlu0 %258
    %v260 = vsel %vm189, %v259, 0
    %262 = vmatpush.msra.mxu0 0.0
    %263 = vmatpush.msra.mxu0 0.0
    %264 = vmatpush.msra.mxu0 0.0
    %265 = vmatpush.msra.mxu0 0.0
    %266 = vmatpush.msra.mxu0 0.0
    %267 = vmatpush.msra.mxu0 0.0
    %268 = vmatpush.msra.mxu0 0.0
    %269 = vmatpush.msra.mxu0 0.0
    %270 = vmatpush.msra.mxu0 0.0
    %271 = vmatpush.msra.mxu0 0.0
    %272 = vmatpush.msra.mxu0 0.0
    %273 = vmatpush.msra.mxu0 0.0
    %274 = vmatpush.msra.mxu0 %v188
    %275 = vmatpush.msra.mxu0 %v187
    %276 = vmatpush.msra.mxu0 %v186
    %277 = vmatpush.msra.mxu0 %v185
    %278 = vmatmul.f32.gmra.mxu0 %v260
    %v279 = vpop.f32.mrf.mxu0
    %v280 = vadd.f32 0.0, %v279
    %281 = vdwg.mxu0
    %v282 = vld [vmem:[#allocation2 + $0x48] sm:$0xff]
    %v283 = vld [vmem:[#allocation2 + $0x50] sm:$0xff]
    %v284 = vld [vmem:[#allocation2 + $0x58] sm:$0xff]
    %v285 = vld [vmem:[#allocation2 + $0x60] sm:$0xff]
    %v286 = vld [vmem:[#allocation2 + $0x70] sm:$0xff]
    %v287 = vld [vmem:[#allocation2 + $0x78] sm:$0xff]
    %v288 = vld [vmem:[#allocation2 + $0x80] sm:$0xff]
    %v289 = vld [vmem:[#allocation2 + $0x88] sm:$0xff]
    %290 = vmatpush.msra.mxu0 0.0
    %291 = vmatpush.msra.mxu0 0.0
    %292 = vmatpush.msra.mxu0 0.0
    %293 = vmatpush.msra.mxu0 0.0
    %294 = vmatpush.msra.mxu0 0.0
    %295 = vmatpush.msra.mxu0 0.0
    %296 = vmatpush.msra.mxu0 0.0
    %297 = vmatpush.msra.mxu0 0.0
    %298 = vmatpush.msra.mxu0 0.0
    %299 = vmatpush.msra.mxu0 0.0
    %300 = vmatpush.msra.mxu0 0.0
    %301 = vmatpush.msra.mxu0 0.0
    %302 = vmatpush.msra.mxu0 %v289
    %303 = vmatpush.msra.mxu0 %v288
    %304 = vmatpush.msra.mxu0 %v287
    %305 = vmatpush.msra.mxu0 %v286
    %306 = vmatmul.f32.gmra.mxu0 %v191
    %v307 = vpop.f32.mrf.mxu0
    %v308 = vadd.f32 0.0, %v307
    %309 = vdwg.mxu0
    %v310 = vadd.f32 %v155, %v280
    %v311 = vxor.u32 %v310, 2147483648
    %v312 = vmul.f32 %v311, 1.442695
    %v313 = vpow.pop %v312
    %v314 = vadd.f32 %v313, 1.0
    %v315 = vrcp.pop %v314
    %v316 = vmul.f32 %v314, %v315
    %v317 = vsub.f32 1.0, %v316
    %v318 = vmul.f32 %v315, %v317
    %v319 = vadd.f32 %v315, %v318
    %vm320 = vweird.f32 %v314
    %vm321 = vweird.f32 %v315
    %vm322 = vmor %vm320, %vm321
    %v323 = vsel %vm322, %v315, %v319
    %v324 = vand.u32 2147483647, %v314
    %vm325 = vcmp.eq.f32.partialorder %v324, 8.507059e+37
    %v326 = vand.u32 %v314, 2147483648
    %v327 = vor.u32 1.1754944e-38, %v326
    %v328 = vsel %vm325, %v327, %v323
    %v329 = vmul.f32 1.0, %v328
    %v330 = vadd.f32 %v280, %v235
    %332 = vrot.lane.b32.xlu0 %v330, 64
    %v333 = vpop.permute.xlu0 %332
    %v335 = vmul.f32 %v329, %v333
    %337 = vrot.lane.b32.xlu0 %v335, 64
    %v338 = vpop.permute.xlu0 %337
    %v340 = vadd.f32 %v155, %v338
    %v341 = vtanh.pop %v340
    %v342 = vsub.f32 1.0, %v329
    %344 = vrot.lane.b32.xlu0 %v341, 96
    %v345 = vpop.permute.xlu0 %344
    %v347 = vmul.f32 %v342, %v345
    %v348 = vmul.f32 %v329, %v256
    %v349 = vadd.f32 %v347, %v348
    %350 = vmatpush.msra.mxu0 0.0
    %351 = vmatpush.msra.mxu0 0.0
    %352 = vmatpush.msra.mxu0 0.0
    %353 = vmatpush.msra.mxu0 0.0
    %354 = vmatpush.msra.mxu0 0.0
    %355 = vmatpush.msra.mxu0 0.0
    %356 = vmatpush.msra.mxu0 0.0
    %357 = vmatpush.msra.mxu0 0.0
    %358 = vmatpush.msra.mxu0 0.0
    %359 = vmatpush.msra.mxu0 0.0
    %360 = vmatpush.msra.mxu0 0.0
    %361 = vmatpush.msra.mxu0 0.0
    %362 = vmatpush.msra.mxu0 %v285
    %363 = vmatpush.msra.mxu0 %v284
    %364 = vmatpush.msra.mxu0 %v283
    %365 = vmatpush.msra.mxu0 %v282
    %366 = vmatmul.f32.gmra.mxu0 %v260
    %v367 = vpop.f32.mrf.mxu0
    %v368 = vadd.f32 %v176, %v367
    %369 = vdwg.mxu0
    %v370 = vadd.f32 %v368, %v308
    %v371 = vxor.u32 %v370, 2147483648
    %v372 = vmul.f32 %v371, 1.442695
    %v373 = vpow.pop %v372
    %v374 = vadd.f32 %v373, 1.0
    %v375 = vrcp.pop %v374
    %v376 = vmul.f32 %v374, %v375
    %v377 = vsub.f32 1.0, %v376
    %v378 = vmul.f32 %v375, %v377
    %v379 = vadd.f32 %v375, %v378
    %vm380 = vweird.f32 %v374
    %vm381 = vweird.f32 %v375
    %vm382 = vmor %vm380, %vm381
    %v383 = vsel %vm382, %v375, %v379
    %v384 = vand.u32 2147483647, %v374
    %vm385 = vcmp.eq.f32.partialorder %v384, 8.507059e+37
    %v386 = vand.u32 %v374, 2147483648
    %v387 = vor.u32 1.1754944e-38, %v386
    %v388 = vsel %vm385, %v387, %v383
    %v389 = vmul.f32 1.0, %v388
    %391 = vrot.lane.b32.xlu0 %v181, 64
    %v392 = vpop.permute.xlu0 %391
    %v394 = vadd.f32 %v308, %v392
    %396 = vrot.lane.b32.xlu0 %v394, 64
    %v397 = vpop.permute.xlu0 %396
    %v399 = vmul.f32 %v389, %v397
    %401 = vrot.lane.b32.xlu0 %v399, 64
    %v402 = vpop.permute.xlu0 %401
    %v404 = vadd.f32 %v368, %v402
    %v405 = vtanh.pop %v404
    %v406 = vsub.f32 1.0, %v389
    %408 = vrot.lane.b32.xlu0 %v405, 96
    %v409 = vpop.permute.xlu0 %408
    %v411 = vmul.f32 %v406, %v409
    %v412 = vmul.f32 %v389, 0.0
    %v413 = vadd.f32 %v411, %v412
    %415 = vrot.lane.b32.xlu0 %v349, 96
    %v416 = vpop.permute.xlu0 %415
    %v417 = vsel %vm189, %v416, 0
    %419 = vmatpush.msra.mxu0 0.0
    %420 = vmatpush.msra.mxu0 0.0
    %421 = vmatpush.msra.mxu0 0.0
    %422 = vmatpush.msra.mxu0 0.0
    %423 = vmatpush.msra.mxu0 0.0
    %424 = vmatpush.msra.mxu0 0.0
    %425 = vmatpush.msra.mxu0 0.0
    %426 = vmatpush.msra.mxu0 0.0
    %427 = vmatpush.msra.mxu0 0.0
    %428 = vmatpush.msra.mxu0 0.0
    %429 = vmatpush.msra.mxu0 0.0
    %430 = vmatpush.msra.mxu0 0.0
    %431 = vmatpush.msra.mxu0 %v188
    %432 = vmatpush.msra.mxu0 %v187
    %433 = vmatpush.msra.mxu0 %v186
    %434 = vmatpush.msra.mxu0 %v185
    %435 = vmatmul.f32.gmra.mxu0 %v417
    %v436 = vpop.f32.mrf.mxu0
    %v437 = vadd.f32 0.0, %v436
    %438 = vdwg.mxu0
    %440 = vrot.lane.b32.xlu0 %v413, 96
    %v441 = vpop.permute.xlu0 %440
    %v442 = vsel %vm189, %v441, 0
    %444 = vmatpush.msra.mxu0 0.0
    %445 = vmatpush.msra.mxu0 0.0
    %446 = vmatpush.msra.mxu0 0.0
    %447 = vmatpush.msra.mxu0 0.0
    %448 = vmatpush.msra.mxu0 0.0
    %449 = vmatpush.msra.mxu0 0.0
    %450 = vmatpush.msra.mxu0 0.0
    %451 = vmatpush.msra.mxu0 0.0
    %452 = vmatpush.msra.mxu0 0.0
    %453 = vmatpush.msra.mxu0 0.0
    %454 = vmatpush.msra.mxu0 0.0
    %455 = vmatpush.msra.mxu0 0.0
    %456 = vmatpush.msra.mxu0 %v289
    %457 = vmatpush.msra.mxu0 %v288
    %458 = vmatpush.msra.mxu0 %v287
    %459 = vmatpush.msra.mxu0 %v286
    %460 = vmatmul.f32.gmra.mxu0 %v442
    %v461 = vpop.f32.mrf.mxu0
    %v462 = vadd.f32 0.0, %v461
    %463 = vdwg.mxu0
    %v464 = vld [vmem:[#allocation2 + $0x90] sm:$0xff]
    %v465 = vld [vmem:[#allocation2 + $0x98] sm:$0xff]
    %v466 = vld [vmem:[#allocation2 + $0xa0] sm:$0xff]
    %v467 = vld [vmem:[#allocation2 + $0xa8] sm:$0xff]
    %v468 = vld [vmem:[#allocation2 + $0xb8] sm:$0xff]
    %v469 = vld [vmem:[#allocation2 + $0xc0] sm:$0xff]
    %v470 = vld [vmem:[#allocation2 + $0xc8] sm:$0xff]
    %v471 = vld [vmem:[#allocation2 + $0xd0] sm:$0xff]
    %472 = vmatpush.msra.mxu0 0.0
    %473 = vmatpush.msra.mxu0 0.0
    %474 = vmatpush.msra.mxu0 0.0
    %475 = vmatpush.msra.mxu0 0.0
    %476 = vmatpush.msra.mxu0 0.0
    %477 = vmatpush.msra.mxu0 0.0
    %478 = vmatpush.msra.mxu0 0.0
    %479 = vmatpush.msra.mxu0 0.0
    %480 = vmatpush.msra.mxu0 0.0
    %481 = vmatpush.msra.mxu0 0.0
    %482 = vmatpush.msra.mxu0 0.0
    %483 = vmatpush.msra.mxu0 0.0
    %484 = vmatpush.msra.mxu0 %v471
    %485 = vmatpush.msra.mxu0 %v470
    %486 = vmatpush.msra.mxu0 %v469
    %487 = vmatpush.msra.mxu0 %v468
    %488 = vmatmul.f32.gmra.mxu0 %v191
    %v489 = vpop.f32.mrf.mxu0
    %v490 = vadd.f32 0.0, %v489
    %491 = vdwg.mxu0
    %v492 = vadd.f32 %v158, %v437
    %v493 = vxor.u32 %v492, 2147483648
    %v494 = vmul.f32 %v493, 1.442695
    %v495 = vpow.pop %v494
    %v496 = vadd.f32 %v495, 1.0
    %v497 = vrcp.pop %v496
    %v498 = vmul.f32 %v496, %v497
    %v499 = vsub.f32 1.0, %v498
    %v500 = vmul.f32 %v497, %v499
    %v501 = vadd.f32 %v497, %v500
    %vm502 = vweird.f32 %v496
    %vm503 = vweird.f32 %v497
    %vm504 = vmor %vm502, %vm503
    %v505 = vsel %vm504, %v497, %v501
    %v506 = vand.u32 2147483647, %v496
    %vm507 = vcmp.eq.f32.partialorder %v506, 8.507059e+37
    %v508 = vand.u32 %v496, 2147483648
    %v509 = vor.u32 1.1754944e-38, %v508
    %v510 = vsel %vm507, %v509, %v505
    %v511 = vmul.f32 1.0, %v510
    %v512 = vadd.f32 %v437, %v235
    %514 = vrot.lane.b32.xlu0 %v512, 64
    %v515 = vpop.permute.xlu0 %514
    %v517 = vmul.f32 %v511, %v515
    %519 = vrot.lane.b32.xlu0 %v517, 64
    %v520 = vpop.permute.xlu0 %519
    %v522 = vadd.f32 %v158, %v520
    %v523 = vtanh.pop %v522
    %v524 = vsub.f32 1.0, %v511
    %526 = vrot.lane.b32.xlu0 %v523, 96
    %v527 = vpop.permute.xlu0 %526
    %v529 = vmul.f32 %v524, %v527
    %v530 = vmul.f32 %v511, %v349
    %v531 = vadd.f32 %v529, %v530
    %532 = vmatpush.msra.mxu0 0.0
    %533 = vmatpush.msra.mxu0 0.0
    %534 = vmatpush.msra.mxu0 0.0
    %535 = vmatpush.msra.mxu0 0.0
    %536 = vmatpush.msra.mxu0 0.0
    %537 = vmatpush.msra.mxu0 0.0
    %538 = vmatpush.msra.mxu0 0.0
    %539 = vmatpush.msra.mxu0 0.0
    %540 = vmatpush.msra.mxu0 0.0
    %541 = vmatpush.msra.mxu0 0.0
    %542 = vmatpush.msra.mxu0 0.0
    %543 = vmatpush.msra.mxu0 0.0
    %544 = vmatpush.msra.mxu0 %v285
    %545 = vmatpush.msra.mxu0 %v284
    %546 = vmatpush.msra.mxu0 %v283
    %547 = vmatpush.msra.mxu0 %v282
    %548 = vmatmul.f32.gmra.mxu0 %v417
    %v549 = vpop.f32.mrf.mxu0
    %v550 = vadd.f32 %v176, %v549
    %551 = vdwg.mxu0
    %v552 = vadd.f32 %v550, %v462
    %v553 = vxor.u32 %v552, 2147483648
    %v554 = vmul.f32 %v553, 1.442695
    %v555 = vpow.pop %v554
    %v556 = vadd.f32 %v555, 1.0
    %v557 = vrcp.pop %v556
    %v558 = vmul.f32 %v556, %v557
    %v559 = vsub.f32 1.0, %v558
    %v560 = vmul.f32 %v557, %v559
    %v561 = vadd.f32 %v557, %v560
    %vm562 = vweird.f32 %v556
    %vm563 = vweird.f32 %v557
    %vm564 = vmor %vm562, %vm563
    %v565 = vsel %vm564, %v557, %v561
    %v566 = vand.u32 2147483647, %v556
    %vm567 = vcmp.eq.f32.partialorder %v566, 8.507059e+37
    %v568 = vand.u32 %v556, 2147483648
    %v569 = vor.u32 1.1754944e-38, %v568
    %v570 = vsel %vm567, %v569, %v565
    %v571 = vmul.f32 1.0, %v570
    %v572 = vadd.f32 %v462, %v392
    %574 = vrot.lane.b32.xlu0 %v572, 64
    %v575 = vpop.permute.xlu0 %574
    %v577 = vmul.f32 %v571, %v575
    %579 = vrot.lane.b32.xlu0 %v577, 64
    %v580 = vpop.permute.xlu0 %579
    %v582 = vadd.f32 %v550, %v580
    %v583 = vtanh.pop %v582
    %v584 = vsub.f32 1.0, %v571
    %586 = vrot.lane.b32.xlu0 %v583, 96
    %v587 = vpop.permute.xlu0 %586
    %v589 = vmul.f32 %v584, %v587
    %v590 = vmul.f32 %v571, %v413
    %v591 = vadd.f32 %v589, %v590
    %592 = vmatpush.msra.mxu0 0.0
    %593 = vmatpush.msra.mxu0 0.0
    %594 = vmatpush.msra.mxu0 0.0
    %595 = vmatpush.msra.mxu0 0.0
    %596 = vmatpush.msra.mxu0 0.0
    %597 = vmatpush.msra.mxu0 0.0
    %598 = vmatpush.msra.mxu0 0.0
    %599 = vmatpush.msra.mxu0 0.0
    %600 = vmatpush.msra.mxu0 0.0
    %601 = vmatpush.msra.mxu0 0.0
    %602 = vmatpush.msra.mxu0 0.0
    %603 = vmatpush.msra.mxu0 0.0
    %604 = vmatpush.msra.mxu0 %v467
    %605 = vmatpush.msra.mxu0 %v466
    %606 = vmatpush.msra.mxu0 %v465
    %607 = vmatpush.msra.mxu0 %v464
    %608 = vmatmul.f32.gmra.mxu0 %v442
    %v609 = vpop.f32.mrf.mxu0
    %v610 = vadd.f32 %v178, %v609
    %611 = vdwg.mxu0
    %v612 = vadd.f32 %v610, %v490
    %v613 = vxor.u32 %v612, 2147483648
    %v614 = vmul.f32 %v613, 1.442695
    %v615 = vpow.pop %v614
    %v616 = vadd.f32 %v615, 1.0
    %v617 = vrcp.pop %v616
    %v618 = vmul.f32 %v616, %v617
    %v619 = vsub.f32 1.0, %v618
    %v620 = vmul.f32 %v617, %v619
    %v621 = vadd.f32 %v617, %v620
    %vm622 = vweird.f32 %v616
    %vm623 = vweird.f32 %v617
    %vm624 = vmor %vm622, %vm623
    %v625 = vsel %vm624, %v617, %v621
    %v626 = vand.u32 2147483647, %v616
    %vm627 = vcmp.eq.f32.partialorder %v626, 8.507059e+37
    %v628 = vand.u32 %v616, 2147483648
    %v629 = vor.u32 1.1754944e-38, %v628
    %v630 = vsel %vm627, %v629, %v625
    %v631 = vmul.f32 1.0, %v630
    %633 = vrot.lane.b32.xlu0 %v182, 64
    %v634 = vpop.permute.xlu0 %633
    %v636 = vadd.f32 %v490, %v634
    %638 = vrot.lane.b32.xlu0 %v636, 64
    %v639 = vpop.permute.xlu0 %638
    %v641 = vmul.f32 %v631, %v639
    %643 = vrot.lane.b32.xlu0 %v641, 64
    %v644 = vpop.permute.xlu0 %643
    %v646 = vadd.f32 %v610, %v644
    %v647 = vtanh.pop %v646
    %v648 = vsub.f32 1.0, %v631
    %650 = vrot.lane.b32.xlu0 %v647, 96
    %v651 = vpop.permute.xlu0 %650
    %v653 = vmul.f32 %v648, %v651
    %v654 = vmul.f32 %v631, 0.0
    %v655 = vadd.f32 %v653, %v654
    %v656 = vld [vmem:[#allocation2 + $0xe0] sm:$0xff]
    %v657 = vld [vmem:[#allocation2 + $0xe8] sm:$0xff]
    %v658 = vld [vmem:[#allocation2 + $0xf0] sm:$0xff]
    %v659 = vld [vmem:[#allocation2 + $0xf8] sm:$0xff]
    %661 = vrot.lane.b32.xlu0 %v655, 96
    %v662 = vpop.permute.xlu0 %661
    %v663 = vsel %vm189, %v662, 0
    %665 = vmatpush.msra.mxu0 0.0
    %666 = vmatpush.msra.mxu0 0.0
    %667 = vmatpush.msra.mxu0 0.0
    %668 = vmatpush.msra.mxu0 0.0
    %669 = vmatpush.msra.mxu0 0.0
    %670 = vmatpush.msra.mxu0 0.0
    %671 = vmatpush.msra.mxu0 0.0
    %672 = vmatpush.msra.mxu0 0.0
    %673 = vmatpush.msra.mxu0 0.0
    %674 = vmatpush.msra.mxu0 0.0
    %675 = vmatpush.msra.mxu0 0.0
    %676 = vmatpush.msra.mxu0 0.0
    %677 = vmatpush.msra.mxu0 %v659
    %678 = vmatpush.msra.mxu0 %v658
    %679 = vmatpush.msra.mxu0 %v657
    %680 = vmatpush.msra.mxu0 %v656
    %681 = vmatmul.f32.gmra.mxu0 %v663
    %v682 = vpop.f32.mrf.mxu0
    %v683 = vadd.f32 %v184, %v682
    %684 = vdwg.mxu0
    %685 = vst [vmem:[#allocation5] sm:$0xff] %v683
    %v686 = vld [vmem:[#allocation2 + $0x28] sm:$0xff]
    %v687 = vld [vmem:[#allocation2 + $0x30] sm:$0xff]
    %v688 = vld [vmem:[#allocation2 + $0x38] sm:$0xff]
    %v689 = vld [vmem:[#allocation2 + $0x40] sm:$0xff]
    %691 = vrot.lane.b32.xlu0 %v531, 96
    %v692 = vpop.permute.xlu0 %691
    %v693 = vsel %vm189, %v692, 0
    %695 = vmatpush.msra.mxu0 0.0
    %696 = vmatpush.msra.mxu0 0.0
    %697 = vmatpush.msra.mxu0 0.0
    %698 = vmatpush.msra.mxu0 0.0
    %699 = vmatpush.msra.mxu0 0.0
    %700 = vmatpush.msra.mxu0 0.0
    %701 = vmatpush.msra.mxu0 0.0
    %702 = vmatpush.msra.mxu0 0.0
    %703 = vmatpush.msra.mxu0 0.0
    %704 = vmatpush.msra.mxu0 0.0
    %705 = vmatpush.msra.mxu0 0.0
    %706 = vmatpush.msra.mxu0 0.0
    %707 = vmatpush.msra.mxu0 %v689
    %708 = vmatpush.msra.mxu0 %v688
    %709 = vmatpush.msra.mxu0 %v687
    %710 = vmatpush.msra.mxu0 %v686
    %711 = vmatmul.f32.gmra.mxu0 %v693
    %v712 = vpop.f32.mrf.mxu0
    %v713 = vadd.f32 0.0, %v712
    %714 = vdwg.mxu0
    %v715 = vld [vmem:[#allocation2 + $0x48] sm:$0xff]
    %v716 = vld [vmem:[#allocation2 + $0x50] sm:$0xff]
    %v717 = vld [vmem:[#allocation2 + $0x58] sm:$0xff]
    %v718 = vld [vmem:[#allocation2 + $0x60] sm:$0xff]
    %v719 = vld [vmem:[#allocation2 + $0x70] sm:$0xff]
    %v720 = vld [vmem:[#allocation2 + $0x78] sm:$0xff]
    %v721 = vld [vmem:[#allocation2 + $0x80] sm:$0xff]
    %v722 = vld [vmem:[#allocation2 + $0x88] sm:$0xff]
    %724 = vrot.lane.b32.xlu0 %v591, 96
    %v725 = vpop.permute.xlu0 %724
    %v726 = vsel %vm189, %v725, 0
    %728 = vmatpush.msra.mxu0 0.0
    %729 = vmatpush.msra.mxu0 0.0
    %730 = vmatpush.msra.mxu0 0.0
    %731 = vmatpush.msra.mxu0 0.0
    %732 = vmatpush.msra.mxu0 0.0
    %733 = vmatpush.msra.mxu0 0.0
    %734 = vmatpush.msra.mxu0 0.0
    %735 = vmatpush.msra.mxu0 0.0
    %736 = vmatpush.msra.mxu0 0.0
    %737 = vmatpush.msra.mxu0 0.0
    %738 = vmatpush.msra.mxu0 0.0
    %739 = vmatpush.msra.mxu0 0.0
    %740 = vmatpush.msra.mxu0 %v722
    %741 = vmatpush.msra.mxu0 %v721
    %742 = vmatpush.msra.mxu0 %v720
    %743 = vmatpush.msra.mxu0 %v719
    %744 = vmatmul.f32.gmra.mxu0 %v726
    %v745 = vpop.f32.mrf.mxu0
    %v746 = vadd.f32 0.0, %v745
    %747 = vdwg.mxu0
    %v748 = vld [vmem:[#allocation2 + $0x90] sm:$0xff]
    %v749 = vld [vmem:[#allocation2 + $0x98] sm:$0xff]
    %v750 = vld [vmem:[#allocation2 + $0xa0] sm:$0xff]
    %v751 = vld [vmem:[#allocation2 + $0xa8] sm:$0xff]
    %v752 = vld [vmem:[#allocation2 + $0xb8] sm:$0xff]
    %v753 = vld [vmem:[#allocation2 + $0xc0] sm:$0xff]
    %v754 = vld [vmem:[#allocation2 + $0xc8] sm:$0xff]
    %v755 = vld [vmem:[#allocation2 + $0xd0] sm:$0xff]
    %756 = vmatpush.msra.mxu0 0.0
    %757 = vmatpush.msra.mxu0 0.0
    %758 = vmatpush.msra.mxu0 0.0
    %759 = vmatpush.msra.mxu0 0.0
    %760 = vmatpush.msra.mxu0 0.0
    %761 = vmatpush.msra.mxu0 0.0
    %762 = vmatpush.msra.mxu0 0.0
    %763 = vmatpush.msra.mxu0 0.0
    %764 = vmatpush.msra.mxu0 0.0
    %765 = vmatpush.msra.mxu0 0.0
    %766 = vmatpush.msra.mxu0 0.0
    %767 = vmatpush.msra.mxu0 0.0
    %768 = vmatpush.msra.mxu0 %v755
    %769 = vmatpush.msra.mxu0 %v754
    %770 = vmatpush.msra.mxu0 %v753
    %771 = vmatpush.msra.mxu0 %v752
    %772 = vmatmul.f32.gmra.mxu0 %v663
    %v773 = vpop.f32.mrf.mxu0
    %v774 = vadd.f32 0.0, %v773
    %775 = vdwg.mxu0
    %v776 = vadd.f32 %v161, %v713
    %v777 = vxor.u32 %v776, 2147483648
    %v778 = vmul.f32 %v777, 1.442695
    %v779 = vpow.pop %v778
    %v780 = vadd.f32 %v779, 1.0
    %v781 = vrcp.pop %v780
    %v782 = vmul.f32 %v780, %v781
    %v783 = vsub.f32 1.0, %v782
    %v784 = vmul.f32 %v781, %v783
    %v785 = vadd.f32 %v781, %v784
    %vm786 = vweird.f32 %v780
    %vm787 = vweird.f32 %v781
    %vm788 = vmor %vm786, %vm787
    %v789 = vsel %vm788, %v781, %v785
    %v790 = vand.u32 2147483647, %v780
    %vm791 = vcmp.eq.f32.partialorder %v790, 8.507059e+37
    %v792 = vand.u32 %v780, 2147483648
    %v793 = vor.u32 1.1754944e-38, %v792
    %v794 = vsel %vm791, %v793, %v789
    %v795 = vmul.f32 1.0, %v794
    %v796 = vadd.f32 %v713, %v235
    %798 = vrot.lane.b32.xlu0 %v796, 64
    %v799 = vpop.permute.xlu0 %798
    %v801 = vmul.f32 %v795, %v799
    %803 = vrot.lane.b32.xlu0 %v801, 64
    %v804 = vpop.permute.xlu0 %803
    %v806 = vadd.f32 %v161, %v804
    %v807 = vtanh.pop %v806
    %v808 = vsub.f32 1.0, %v795
    %810 = vrot.lane.b32.xlu0 %v807, 96
    %v811 = vpop.permute.xlu0 %810
    %v813 = vmul.f32 %v808, %v811
    %v814 = vmul.f32 %v795, %v531
    %v815 = vadd.f32 %v813, %v814
    %816 = vmatpush.msra.mxu0 0.0
    %817 = vmatpush.msra.mxu0 0.0
    %818 = vmatpush.msra.mxu0 0.0
    %819 = vmatpush.msra.mxu0 0.0
    %820 = vmatpush.msra.mxu0 0.0
    %821 = vmatpush.msra.mxu0 0.0
    %822 = vmatpush.msra.mxu0 0.0
    %823 = vmatpush.msra.mxu0 0.0
    %824 = vmatpush.msra.mxu0 0.0
    %825 = vmatpush.msra.mxu0 0.0
    %826 = vmatpush.msra.mxu0 0.0
    %827 = vmatpush.msra.mxu0 0.0
    %828 = vmatpush.msra.mxu0 %v718
    %829 = vmatpush.msra.mxu0 %v717
    %830 = vmatpush.msra.mxu0 %v716
    %831 = vmatpush.msra.mxu0 %v715
    %832 = vmatmul.f32.gmra.mxu0 %v693
    %v833 = vpop.f32.mrf.mxu0
    %v834 = vadd.f32 %v176, %v833
    %835 = vdwg.mxu0
    %v836 = vadd.f32 %v834, %v746
    %v837 = vxor.u32 %v836, 2147483648
    %v838 = vmul.f32 %v837, 1.442695
    %v839 = vpow.pop %v838
    %v840 = vadd.f32 %v839, 1.0
    %v841 = vrcp.pop %v840
    %v842 = vmul.f32 %v840, %v841
    %v843 = vsub.f32 1.0, %v842
    %v844 = vmul.f32 %v841, %v843
    %v845 = vadd.f32 %v841, %v844
    %vm846 = vweird.f32 %v840
    %vm847 = vweird.f32 %v841
    %vm848 = vmor %vm846, %vm847
    %v849 = vsel %vm848, %v841, %v845
    %v850 = vand.u32 2147483647, %v840
    %vm851 = vcmp.eq.f32.partialorder %v850, 8.507059e+37
    %v852 = vand.u32 %v840, 2147483648
    %v853 = vor.u32 1.1754944e-38, %v852
    %v854 = vsel %vm851, %v853, %v849
    %v855 = vmul.f32 1.0, %v854
    %v856 = vadd.f32 %v746, %v392
    %858 = vrot.lane.b32.xlu0 %v856, 64
    %v859 = vpop.permute.xlu0 %858
    %v861 = vmul.f32 %v855, %v859
    %863 = vrot.lane.b32.xlu0 %v861, 64
    %v864 = vpop.permute.xlu0 %863
    %v866 = vadd.f32 %v834, %v864
    %v867 = vtanh.pop %v866
    %v868 = vsub.f32 1.0, %v855
    %870 = vrot.lane.b32.xlu0 %v867, 96
    %v871 = vpop.permute.xlu0 %870
    %v873 = vmul.f32 %v868, %v871
    %v874 = vmul.f32 %v855, %v591
    %v875 = vadd.f32 %v873, %v874
    %876 = vmatpush.msra.mxu0 0.0
    %877 = vmatpush.msra.mxu0 0.0
    %878 = vmatpush.msra.mxu0 0.0
    %879 = vmatpush.msra.mxu0 0.0
    %880 = vmatpush.msra.mxu0 0.0
    %881 = vmatpush.msra.mxu0 0.0
    %882 = vmatpush.msra.mxu0 0.0
    %883 = vmatpush.msra.mxu0 0.0
    %884 = vmatpush.msra.mxu0 0.0
    %885 = vmatpush.msra.mxu0 0.0
    %886 = vmatpush.msra.mxu0 0.0
    %887 = vmatpush.msra.mxu0 0.0
    %888 = vmatpush.msra.mxu0 %v751
    %889 = vmatpush.msra.mxu0 %v750
    %890 = vmatpush.msra.mxu0 %v749
    %891 = vmatpush.msra.mxu0 %v748
    %892 = vmatmul.f32.gmra.mxu0 %v726
    %v893 = vpop.f32.mrf.mxu0
    %v894 = vadd.f32 %v178, %v893
    %895 = vdwg.mxu0
    %v896 = vadd.f32 %v894, %v774
    %v897 = vxor.u32 %v896, 2147483648
    %v898 = vmul.f32 %v897, 1.442695
    %v899 = vpow.pop %v898
    %v900 = vadd.f32 %v899, 1.0
    %v901 = vrcp.pop %v900
    %v902 = vmul.f32 %v900, %v901
    %v903 = vsub.f32 1.0, %v902
    %v904 = vmul.f32 %v901, %v903
    %v905 = vadd.f32 %v901, %v904
    %vm906 = vweird.f32 %v900
    %vm907 = vweird.f32 %v901
    %vm908 = vmor %vm906, %vm907
    %v909 = vsel %vm908, %v901, %v905
    %v910 = vand.u32 2147483647, %v900
    %vm911 = vcmp.eq.f32.partialorder %v910, 8.507059e+37
    %v912 = vand.u32 %v900, 2147483648
    %v913 = vor.u32 1.1754944e-38, %v912
    %v914 = vsel %vm911, %v913, %v909
    %v915 = vmul.f32 1.0, %v914
    %v916 = vadd.f32 %v774, %v634
    %918 = vrot.lane.b32.xlu0 %v916, 64
    %v919 = vpop.permute.xlu0 %918
    %v921 = vmul.f32 %v915, %v919
    %923 = vrot.lane.b32.xlu0 %v921, 64
    %v924 = vpop.permute.xlu0 %923
    %v926 = vadd.f32 %v894, %v924
    %v927 = vtanh.pop %v926
    %v928 = vsub.f32 1.0, %v915
    %930 = vrot.lane.b32.xlu0 %v927, 96
    %v931 = vpop.permute.xlu0 %930
    %v933 = vmul.f32 %v928, %v931
    %v934 = vmul.f32 %v915, %v655
    %v935 = vadd.f32 %v933, %v934
    %v936 = vld [vmem:[#allocation2 + $0xe0] sm:$0xff]
    %v937 = vld [vmem:[#allocation2 + $0xe8] sm:$0xff]
    %v938 = vld [vmem:[#allocation2 + $0xf0] sm:$0xff]
    %v939 = vld [vmem:[#allocation2 + $0xf8] sm:$0xff]
    %941 = vrot.lane.b32.xlu0 %v935, 96
    %v942 = vpop.permute.xlu0 %941
    %v943 = vsel %vm189, %v942, 0
    %945 = vmatpush.msra.mxu0 0.0
    %946 = vmatpush.msra.mxu0 0.0
    %947 = vmatpush.msra.mxu0 0.0
    %948 = vmatpush.msra.mxu0 0.0
    %949 = vmatpush.msra.mxu0 0.0
    %950 = vmatpush.msra.mxu0 0.0
    %951 = vmatpush.msra.mxu0 0.0
    %952 = vmatpush.msra.mxu0 0.0
    %953 = vmatpush.msra.mxu0 0.0
    %954 = vmatpush.msra.mxu0 0.0
    %955 = vmatpush.msra.mxu0 0.0
    %956 = vmatpush.msra.mxu0 0.0
    %957 = vmatpush.msra.mxu0 %v939
    %958 = vmatpush.msra.mxu0 %v938
    %959 = vmatpush.msra.mxu0 %v937
    %960 = vmatpush.msra.mxu0 %v936
    %961 = vmatmul.f32.gmra.mxu0 %v943
    %v962 = vpop.f32.mrf.mxu0
    %v963 = vadd.f32 %v184, %v962
    %964 = vdwg.mxu0
    %965 = vst [vmem:[#allocation5 + $0x8] sm:$0xff] %v963
    %v966 = vld [vmem:[#allocation2 + $0x28] sm:$0xff]
    %v967 = vld [vmem:[#allocation2 + $0x30] sm:$0xff]
    %v968 = vld [vmem:[#allocation2 + $0x38] sm:$0xff]
    %v969 = vld [vmem:[#allocation2 + $0x40] sm:$0xff]
    %971 = vrot.lane.b32.xlu0 %v815, 96
    %v972 = vpop.permute.xlu0 %971
    %v973 = vsel %vm189, %v972, 0
    %975 = vmatpush.msra.mxu0 0.0
    %976 = vmatpush.msra.mxu0 0.0
    %977 = vmatpush.msra.mxu0 0.0
    %978 = vmatpush.msra.mxu0 0.0
    %979 = vmatpush.msra.mxu0 0.0
    %980 = vmatpush.msra.mxu0 0.0
    %981 = vmatpush.msra.mxu0 0.0
    %982 = vmatpush.msra.mxu0 0.0
    %983 = vmatpush.msra.mxu0 0.0
    %984 = vmatpush.msra.mxu0 0.0
    %985 = vmatpush.msra.mxu0 0.0
    %986 = vmatpush.msra.mxu0 0.0
    %987 = vmatpush.msra.mxu0 %v969
    %988 = vmatpush.msra.mxu0 %v968
    %989 = vmatpush.msra.mxu0 %v967
    %990 = vmatpush.msra.mxu0 %v966
    %991 = vmatmul.f32.gmra.mxu0 %v973
    %v992 = vpop.f32.mrf.mxu0
    %v993 = vadd.f32 0.0, %v992
    %994 = vdwg.mxu0
    %v995 = vld [vmem:[#allocation2 + $0x48] sm:$0xff]
    %v996 = vld [vmem:[#allocation2 + $0x50] sm:$0xff]
    %v997 = vld [vmem:[#allocation2 + $0x58] sm:$0xff]
    %v998 = vld [vmem:[#allocation2 + $0x60] sm:$0xff]
    %v999 = vld [vmem:[#allocation2 + $0x70] sm:$0xff]
    %v1000 = vld [vmem:[#allocation2 + $0x78] sm:$0xff]
    %v1001 = vld [vmem:[#allocation2 + $0x80] sm:$0xff]
    %v1002 = vld [vmem:[#allocation2 + $0x88] sm:$0xff]
    %1004 = vrot.lane.b32.xlu0 %v875, 96
    %v1005 = vpop.permute.xlu0 %1004
    %v1006 = vsel %vm189, %v1005, 0
    %1008 = vmatpush.msra.mxu0 0.0
    %1009 = vmatpush.msra.mxu0 0.0
    %1010 = vmatpush.msra.mxu0 0.0
    %1011 = vmatpush.msra.mxu0 0.0
    %1012 = vmatpush.msra.mxu0 0.0
    %1013 = vmatpush.msra.mxu0 0.0
    %1014 = vmatpush.msra.mxu0 0.0
    %1015 = vmatpush.msra.mxu0 0.0
    %1016 = vmatpush.msra.mxu0 0.0
    %1017 = vmatpush.msra.mxu0 0.0
    %1018 = vmatpush.msra.mxu0 0.0
    %1019 = vmatpush.msra.mxu0 0.0
    %1020 = vmatpush.msra.mxu0 %v1002
    %1021 = vmatpush.msra.mxu0 %v1001
    %1022 = vmatpush.msra.mxu0 %v1000
    %1023 = vmatpush.msra.mxu0 %v999
    %1024 = vmatmul.f32.gmra.mxu0 %v1006
    %v1025 = vpop.f32.mrf.mxu0
    %v1026 = vadd.f32 0.0, %v1025
    %1027 = vdwg.mxu0
    %v1028 = vld [vmem:[#allocation2 + $0x90] sm:$0xff]
    %v1029 = vld [vmem:[#allocation2 + $0x98] sm:$0xff]
    %v1030 = vld [vmem:[#allocation2 + $0xa0] sm:$0xff]
    %v1031 = vld [vmem:[#allocation2 + $0xa8] sm:$0xff]
    %v1032 = vld [vmem:[#allocation2 + $0xb8] sm:$0xff]
    %v1033 = vld [vmem:[#allocation2 + $0xc0] sm:$0xff]
    %v1034 = vld [vmem:[#allocation2 + $0xc8] sm:$0xff]
    %v1035 = vld [vmem:[#allocation2 + $0xd0] sm:$0xff]
    %1036 = vmatpush.msra.mxu0 0.0
    %1037 = vmatpush.msra.mxu0 0.0
    %1038 = vmatpush.msra.mxu0 0.0
    %1039 = vmatpush.msra.mxu0 0.0
    %1040 = vmatpush.msra.mxu0 0.0
    %1041 = vmatpush.msra.mxu0 0.0
    %1042 = vmatpush.msra.mxu0 0.0
    %1043 = vmatpush.msra.mxu0 0.0
    %1044 = vmatpush.msra.mxu0 0.0
    %1045 = vmatpush.msra.mxu0 0.0
    %1046 = vmatpush.msra.mxu0 0.0
    %1047 = vmatpush.msra.mxu0 0.0
    %1048 = vmatpush.msra.mxu0 %v1035
    %1049 = vmatpush.msra.mxu0 %v1034
    %1050 = vmatpush.msra.mxu0 %v1033
    %1051 = vmatpush.msra.mxu0 %v1032
    %1052 = vmatmul.f32.gmra.mxu0 %v943
    %v1053 = vpop.f32.mrf.mxu0
    %v1054 = vadd.f32 0.0, %v1053
    %1055 = vdwg.mxu0
    %v1056 = vadd.f32 %v164, %v993
    %v1057 = vxor.u32 %v1056, 2147483648
    %v1058 = vmul.f32 %v1057, 1.442695
    %v1059 = vpow.pop %v1058
    %v1060 = vadd.f32 %v1059, 1.0
    %v1061 = vrcp.pop %v1060
    %v1062 = vmul.f32 %v1060, %v1061
    %v1063 = vsub.f32 1.0, %v1062
    %v1064 = vmul.f32 %v1061, %v1063
    %v1065 = vadd.f32 %v1061, %v1064
    %vm1066 = vweird.f32 %v1060
    %vm1067 = vweird.f32 %v1061
    %vm1068 = vmor %vm1066, %vm1067
    %v1069 = vsel %vm1068, %v1061, %v1065
    %v1070 = vand.u32 2147483647, %v1060
    %vm1071 = vcmp.eq.f32.partialorder %v1070, 8.507059e+37
    %v1072 = vand.u32 %v1060, 2147483648
    %v1073 = vor.u32 1.1754944e-38, %v1072
    %v1074 = vsel %vm1071, %v1073, %v1069
    %v1075 = vmul.f32 1.0, %v1074
    %v1076 = vadd.f32 %v993, %v235
    %1078 = vrot.lane.b32.xlu0 %v1076, 64
    %v1079 = vpop.permute.xlu0 %1078
    %v1081 = vmul.f32 %v1075, %v1079
    %1083 = vrot.lane.b32.xlu0 %v1081, 64
    %v1084 = vpop.permute.xlu0 %1083
    %v1086 = vadd.f32 %v164, %v1084
    %v1087 = vtanh.pop %v1086
    %v1088 = vsub.f32 1.0, %v1075
    %1090 = vrot.lane.b32.xlu0 %v1087, 96
    %v1091 = vpop.permute.xlu0 %1090
    %v1093 = vmul.f32 %v1088, %v1091
    %v1094 = vmul.f32 %v1075, %v815
    %v1095 = vadd.f32 %v1093, %v1094
    %1096 = vmatpush.msra.mxu0 0.0
    %1097 = vmatpush.msra.mxu0 0.0
    %1098 = vmatpush.msra.mxu0 0.0
    %1099 = vmatpush.msra.mxu0 0.0
    %1100 = vmatpush.msra.mxu0 0.0
    %1101 = vmatpush.msra.mxu0 0.0
    %1102 = vmatpush.msra.mxu0 0.0
    %1103 = vmatpush.msra.mxu0 0.0
    %1104 = vmatpush.msra.mxu0 0.0
    %1105 = vmatpush.msra.mxu0 0.0
    %1106 = vmatpush.msra.mxu0 0.0
    %1107 = vmatpush.msra.mxu0 0.0
    %1108 = vmatpush.msra.mxu0 %v998
    %1109 = vmatpush.msra.mxu0 %v997
    %1110 = vmatpush.msra.mxu0 %v996
    %1111 = vmatpush.msra.mxu0 %v995
    %1112 = vmatmul.f32.gmra.mxu0 %v973
    %v1113 = vpop.f32.mrf.mxu0
    %v1114 = vadd.f32 %v176, %v1113
    %1115 = vdwg.mxu0
    %v1116 = vadd.f32 %v1114, %v1026
    %v1117 = vxor.u32 %v1116, 2147483648
    %v1118 = vmul.f32 %v1117, 1.442695
    %v1119 = vpow.pop %v1118
    %v1120 = vadd.f32 %v1119, 1.0
    %v1121 = vrcp.pop %v1120
    %v1122 = vmul.f32 %v1120, %v1121
    %v1123 = vsub.f32 1.0, %v1122
    %v1124 = vmul.f32 %v1121, %v1123
    %v1125 = vadd.f32 %v1121, %v1124
    %vm1126 = vweird.f32 %v1120
    %vm1127 = vweird.f32 %v1121
    %vm1128 = vmor %vm1126, %vm1127
    %v1129 = vsel %vm1128, %v1121, %v1125
    %v1130 = vand.u32 2147483647, %v1120
    %vm1131 = vcmp.eq.f32.partialorder %v1130, 8.507059e+37
    %v1132 = vand.u32 %v1120, 2147483648
    %v1133 = vor.u32 1.1754944e-38, %v1132
    %v1134 = vsel %vm1131, %v1133, %v1129
    %v1135 = vmul.f32 1.0, %v1134
    %v1136 = vadd.f32 %v1026, %v392
    %1138 = vrot.lane.b32.xlu0 %v1136, 64
    %v1139 = vpop.permute.xlu0 %1138
    %v1141 = vmul.f32 %v1135, %v1139
    %1143 = vrot.lane.b32.xlu0 %v1141, 64
    %v1144 = vpop.permute.xlu0 %1143
    %v1146 = vadd.f32 %v1114, %v1144
    %v1147 = vtanh.pop %v1146
    %v1148 = vsub.f32 1.0, %v1135
    %1150 = vrot.lane.b32.xlu0 %v1147, 96
    %v1151 = vpop.permute.xlu0 %1150
    %v1153 = vmul.f32 %v1148, %v1151
    %v1154 = vmul.f32 %v1135, %v875
    %v1155 = vadd.f32 %v1153, %v1154
    %1156 = vmatpush.msra.mxu0 0.0
    %1157 = vmatpush.msra.mxu0 0.0
    %1158 = vmatpush.msra.mxu0 0.0
    %1159 = vmatpush.msra.mxu0 0.0
    %1160 = vmatpush.msra.mxu0 0.0
    %1161 = vmatpush.msra.mxu0 0.0
    %1162 = vmatpush.msra.mxu0 0.0
    %1163 = vmatpush.msra.mxu0 0.0
    %1164 = vmatpush.msra.mxu0 0.0
    %1165 = vmatpush.msra.mxu0 0.0
    %1166 = vmatpush.msra.mxu0 0.0
    %1167 = vmatpush.msra.mxu0 0.0
    %1168 = vmatpush.msra.mxu0 %v1031
    %1169 = vmatpush.msra.mxu0 %v1030
    %1170 = vmatpush.msra.mxu0 %v1029
    %1171 = vmatpush.msra.mxu0 %v1028
    %1172 = vmatmul.f32.gmra.mxu0 %v1006
    %v1173 = vpop.f32.mrf.mxu0
    %v1174 = vadd.f32 %v178, %v1173
    %1175 = vdwg.mxu0
    %v1176 = vadd.f32 %v1174, %v1054
    %v1177 = vxor.u32 %v1176, 2147483648
    %v1178 = vmul.f32 %v1177, 1.442695
    %v1179 = vpow.pop %v1178
    %v1180 = vadd.f32 %v1179, 1.0
    %v1181 = vrcp.pop %v1180
    %v1182 = vmul.f32 %v1180, %v1181
    %v1183 = vsub.f32 1.0, %v1182
    %v1184 = vmul.f32 %v1181, %v1183
    %v1185 = vadd.f32 %v1181, %v1184
    %vm1186 = vweird.f32 %v1180
    %vm1187 = vweird.f32 %v1181
    %vm1188 = vmor %vm1186, %vm1187
    %v1189 = vsel %vm1188, %v1181, %v1185
    %v1190 = vand.u32 2147483647, %v1180
    %vm1191 = vcmp.eq.f32.partialorder %v1190, 8.507059e+37
    %v1192 = vand.u32 %v1180, 2147483648
    %v1193 = vor.u32 1.1754944e-38, %v1192
    %v1194 = vsel %vm1191, %v1193, %v1189
    %v1195 = vmul.f32 1.0, %v1194
    %v1196 = vadd.f32 %v1054, %v634
    %1198 = vrot.lane.b32.xlu0 %v1196, 64
    %v1199 = vpop.permute.xlu0 %1198
    %v1201 = vmul.f32 %v1195, %v1199
    %1203 = vrot.lane.b32.xlu0 %v1201, 64
    %v1204 = vpop.permute.xlu0 %1203
    %v1206 = vadd.f32 %v1174, %v1204
    %v1207 = vtanh.pop %v1206
    %v1208 = vsub.f32 1.0, %v1195
    %1210 = vrot.lane.b32.xlu0 %v1207, 96
    %v1211 = vpop.permute.xlu0 %1210
    %v1213 = vmul.f32 %v1208, %v1211
    %v1214 = vmul.f32 %v1195, %v935
    %v1215 = vadd.f32 %v1213, %v1214
    %v1216 = vld [vmem:[#allocation2 + $0xe0] sm:$0xff]
    %v1217 = vld [vmem:[#allocation2 + $0xe8] sm:$0xff]
    %v1218 = vld [vmem:[#allocation2 + $0xf0] sm:$0xff]
    %v1219 = vld [vmem:[#allocation2 + $0xf8] sm:$0xff]
    %1221 = vrot.lane.b32.xlu0 %v1215, 96
    %v1222 = vpop.permute.xlu0 %1221
    %v1223 = vsel %vm189, %v1222, 0
    %1225 = vmatpush.msra.mxu0 0.0
    %1226 = vmatpush.msra.mxu0 0.0
    %1227 = vmatpush.msra.mxu0 0.0
    %1228 = vmatpush.msra.mxu0 0.0
    %1229 = vmatpush.msra.mxu0 0.0
    %1230 = vmatpush.msra.mxu0 0.0
    %1231 = vmatpush.msra.mxu0 0.0
    %1232 = vmatpush.msra.mxu0 0.0
    %1233 = vmatpush.msra.mxu0 0.0
    %1234 = vmatpush.msra.mxu0 0.0
    %1235 = vmatpush.msra.mxu0 0.0
    %1236 = vmatpush.msra.mxu0 0.0
    %1237 = vmatpush.msra.mxu0 %v1219
    %1238 = vmatpush.msra.mxu0 %v1218
    %1239 = vmatpush.msra.mxu0 %v1217
    %1240 = vmatpush.msra.mxu0 %v1216
    %1241 = vmatmul.f32.gmra.mxu0 %v1223
    %v1242 = vpop.f32.mrf.mxu0
    %v1243 = vadd.f32 %v184, %v1242
    %1244 = vdwg.mxu0
    %1245 = vst [vmem:[#allocation5 + $0x10] sm:$0xff] %v1243
    %v1246 = vld [vmem:[#allocation2 + $0x28] sm:$0xff]
    %v1247 = vld [vmem:[#allocation2 + $0x30] sm:$0xff]
    %v1248 = vld [vmem:[#allocation2 + $0x38] sm:$0xff]
    %v1249 = vld [vmem:[#allocation2 + $0x40] sm:$0xff]
    %1251 = vrot.lane.b32.xlu0 %v1095, 96
    %v1252 = vpop.permute.xlu0 %1251
    %v1253 = vsel %vm189, %v1252, 0
    %1255 = vmatpush.msra.mxu0 0.0
    %1256 = vmatpush.msra.mxu0 0.0
    %1257 = vmatpush.msra.mxu0 0.0
    %1258 = vmatpush.msra.mxu0 0.0
    %1259 = vmatpush.msra.mxu0 0.0
    %1260 = vmatpush.msra.mxu0 0.0
    %1261 = vmatpush.msra.mxu0 0.0
    %1262 = vmatpush.msra.mxu0 0.0
    %1263 = vmatpush.msra.mxu0 0.0
    %1264 = vmatpush.msra.mxu0 0.0
    %1265 = vmatpush.msra.mxu0 0.0
    %1266 = vmatpush.msra.mxu0 0.0
    %1267 = vmatpush.msra.mxu0 %v1249
    %1268 = vmatpush.msra.mxu0 %v1248
    %1269 = vmatpush.msra.mxu0 %v1247
    %1270 = vmatpush.msra.mxu0 %v1246
    %1271 = vmatmul.f32.gmra.mxu0 %v1253
    %v1272 = vpop.f32.mrf.mxu0
    %v1273 = vadd.f32 0.0, %v1272
    %1274 = vdwg.mxu0
    %v1275 = vld [vmem:[#allocation2 + $0x48] sm:$0xff]
    %v1276 = vld [vmem:[#allocation2 + $0x50] sm:$0xff]
    %v1277 = vld [vmem:[#allocation2 + $0x58] sm:$0xff]
    %v1278 = vld [vmem:[#allocation2 + $0x60] sm:$0xff]
    %v1279 = vld [vmem:[#allocation2 + $0x70] sm:$0xff]
    %v1280 = vld [vmem:[#allocation2 + $0x78] sm:$0xff]
    %v1281 = vld [vmem:[#allocation2 + $0x80] sm:$0xff]
    %v1282 = vld [vmem:[#allocation2 + $0x88] sm:$0xff]
    %1284 = vrot.lane.b32.xlu0 %v1155, 96
    %v1285 = vpop.permute.xlu0 %1284
    %v1286 = vsel %vm189, %v1285, 0
    %1288 = vmatpush.msra.mxu0 0.0
    %1289 = vmatpush.msra.mxu0 0.0
    %1290 = vmatpush.msra.mxu0 0.0
    %1291 = vmatpush.msra.mxu0 0.0
    %1292 = vmatpush.msra.mxu0 0.0
    %1293 = vmatpush.msra.mxu0 0.0
    %1294 = vmatpush.msra.mxu0 0.0
    %1295 = vmatpush.msra.mxu0 0.0
    %1296 = vmatpush.msra.mxu0 0.0
    %1297 = vmatpush.msra.mxu0 0.0
    %1298 = vmatpush.msra.mxu0 0.0
    %1299 = vmatpush.msra.mxu0 0.0
    %1300 = vmatpush.msra.mxu0 %v1282
    %1301 = vmatpush.msra.mxu0 %v1281
    %1302 = vmatpush.msra.mxu0 %v1280
    %1303 = vmatpush.msra.mxu0 %v1279
    %1304 = vmatmul.f32.gmra.mxu0 %v1286
    %v1305 = vpop.f32.mrf.mxu0
    %v1306 = vadd.f32 0.0, %v1305
    %1307 = vdwg.mxu0
    %v1308 = vld [vmem:[#allocation2 + $0x90] sm:$0xff]
    %v1309 = vld [vmem:[#allocation2 + $0x98] sm:$0xff]
    %v1310 = vld [vmem:[#allocation2 + $0xa0] sm:$0xff]
    %v1311 = vld [vmem:[#allocation2 + $0xa8] sm:$0xff]
    %v1312 = vld [vmem:[#allocation2 + $0xb8] sm:$0xff]
    %v1313 = vld [vmem:[#allocation2 + $0xc0] sm:$0xff]
    %v1314 = vld [vmem:[#allocation2 + $0xc8] sm:$0xff]
    %v1315 = vld [vmem:[#allocation2 + $0xd0] sm:$0xff]
    %1316 = vmatpush.msra.mxu0 0.0
    %1317 = vmatpush.msra.mxu0 0.0
    %1318 = vmatpush.msra.mxu0 0.0
    %1319 = vmatpush.msra.mxu0 0.0
    %1320 = vmatpush.msra.mxu0 0.0
    %1321 = vmatpush.msra.mxu0 0.0
    %1322 = vmatpush.msra.mxu0 0.0
    %1323 = vmatpush.msra.mxu0 0.0
    %1324 = vmatpush.msra.mxu0 0.0
    %1325 = vmatpush.msra.mxu0 0.0
    %1326 = vmatpush.msra.mxu0 0.0
    %1327 = vmatpush.msra.mxu0 0.0
    %1328 = vmatpush.msra.mxu0 %v1315
    %1329 = vmatpush.msra.mxu0 %v1314
    %1330 = vmatpush.msra.mxu0 %v1313
    %1331 = vmatpush.msra.mxu0 %v1312
    %1332 = vmatmul.f32.gmra.mxu0 %v1223
    %v1333 = vpop.f32.mrf.mxu0
    %v1334 = vadd.f32 0.0, %v1333
    %1335 = vdwg.mxu0
    %v1336 = vadd.f32 %v167, %v1273
    %v1337 = vxor.u32 %v1336, 2147483648
    %v1338 = vmul.f32 %v1337, 1.442695
    %v1339 = vpow.pop %v1338
    %v1340 = vadd.f32 %v1339, 1.0
    %v1341 = vrcp.pop %v1340
    %v1342 = vmul.f32 %v1340, %v1341
    %v1343 = vsub.f32 1.0, %v1342
    %v1344 = vmul.f32 %v1341, %v1343
    %v1345 = vadd.f32 %v1341, %v1344
    %vm1346 = vweird.f32 %v1340
    %vm1347 = vweird.f32 %v1341
    %vm1348 = vmor %vm1346, %vm1347
    %v1349 = vsel %vm1348, %v1341, %v1345
    %v1350 = vand.u32 2147483647, %v1340
    %vm1351 = vcmp.eq.f32.partialorder %v1350, 8.507059e+37
    %v1352 = vand.u32 %v1340, 2147483648
    %v1353 = vor.u32 1.1754944e-38, %v1352
    %v1354 = vsel %vm1351, %v1353, %v1349
    %v1355 = vmul.f32 1.0, %v1354
    %v1356 = vadd.f32 %v1273, %v235
    %1358 = vrot.lane.b32.xlu0 %v1356, 64
    %v1359 = vpop.permute.xlu0 %1358
    %v1361 = vmul.f32 %v1355, %v1359
    %1363 = vrot.lane.b32.xlu0 %v1361, 64
    %v1364 = vpop.permute.xlu0 %1363
    %v1366 = vadd.f32 %v167, %v1364
    %v1367 = vtanh.pop %v1366
    %v1368 = vsub.f32 1.0, %v1355
    %1370 = vrot.lane.b32.xlu0 %v1367, 96
    %v1371 = vpop.permute.xlu0 %1370
    %v1373 = vmul.f32 %v1368, %v1371
    %v1374 = vmul.f32 %v1355, %v1095
    %v1375 = vadd.f32 %v1373, %v1374
    %1376 = vmatpush.msra.mxu0 0.0
    %1377 = vmatpush.msra.mxu0 0.0
    %1378 = vmatpush.msra.mxu0 0.0
    %1379 = vmatpush.msra.mxu0 0.0
    %1380 = vmatpush.msra.mxu0 0.0
    %1381 = vmatpush.msra.mxu0 0.0
    %1382 = vmatpush.msra.mxu0 0.0
    %1383 = vmatpush.msra.mxu0 0.0
    %1384 = vmatpush.msra.mxu0 0.0
    %1385 = vmatpush.msra.mxu0 0.0
    %1386 = vmatpush.msra.mxu0 0.0
    %1387 = vmatpush.msra.mxu0 0.0
    %1388 = vmatpush.msra.mxu0 %v1278
    %1389 = vmatpush.msra.mxu0 %v1277
    %1390 = vmatpush.msra.mxu0 %v1276
    %1391 = vmatpush.msra.mxu0 %v1275
    %1392 = vmatmul.f32.gmra.mxu0 %v1253
    %v1393 = vpop.f32.mrf.mxu0
    %v1394 = vadd.f32 %v176, %v1393
    %1395 = vdwg.mxu0
    %v1396 = vadd.f32 %v1394, %v1306
    %v1397 = vxor.u32 %v1396, 2147483648
    %v1398 = vmul.f32 %v1397, 1.442695
    %v1399 = vpow.pop %v1398
    %v1400 = vadd.f32 %v1399, 1.0
    %v1401 = vrcp.pop %v1400
    %v1402 = vmul.f32 %v1400, %v1401
    %v1403 = vsub.f32 1.0, %v1402
    %v1404 = vmul.f32 %v1401, %v1403
    %v1405 = vadd.f32 %v1401, %v1404
    %vm1406 = vweird.f32 %v1400
    %vm1407 = vweird.f32 %v1401
    %vm1408 = vmor %vm1406, %vm1407
    %v1409 = vsel %vm1408, %v1401, %v1405
    %v1410 = vand.u32 2147483647, %v1400
    %vm1411 = vcmp.eq.f32.partialorder %v1410, 8.507059e+37
    %v1412 = vand.u32 %v1400, 2147483648
    %v1413 = vor.u32 1.1754944e-38, %v1412
    %v1414 = vsel %vm1411, %v1413, %v1409
    %v1415 = vmul.f32 1.0, %v1414
    %v1416 = vadd.f32 %v1306, %v392
    %1418 = vrot.lane.b32.xlu0 %v1416, 64
    %v1419 = vpop.permute.xlu0 %1418
    %v1421 = vmul.f32 %v1415, %v1419
    %1423 = vrot.lane.b32.xlu0 %v1421, 64
    %v1424 = vpop.permute.xlu0 %1423
    %v1426 = vadd.f32 %v1394, %v1424
    %v1427 = vtanh.pop %v1426
    %v1428 = vsub.f32 1.0, %v1415
    %1430 = vrot.lane.b32.xlu0 %v1427, 96
    %v1431 = vpop.permute.xlu0 %1430
    %v1433 = vmul.f32 %v1428, %v1431
    %v1434 = vmul.f32 %v1415, %v1155
    %v1435 = vadd.f32 %v1433, %v1434
    %1436 = vmatpush.msra.mxu0 0.0
    %1437 = vmatpush.msra.mxu0 0.0
    %1438 = vmatpush.msra.mxu0 0.0
    %1439 = vmatpush.msra.mxu0 0.0
    %1440 = vmatpush.msra.mxu0 0.0
    %1441 = vmatpush.msra.mxu0 0.0
    %1442 = vmatpush.msra.mxu0 0.0
    %1443 = vmatpush.msra.mxu0 0.0
    %1444 = vmatpush.msra.mxu0 0.0
    %1445 = vmatpush.msra.mxu0 0.0
    %1446 = vmatpush.msra.mxu0 0.0
    %1447 = vmatpush.msra.mxu0 0.0
    %1448 = vmatpush.msra.mxu0 %v1311
    %1449 = vmatpush.msra.mxu0 %v1310
    %1450 = vmatpush.msra.mxu0 %v1309
    %1451 = vmatpush.msra.mxu0 %v1308
    %1452 = vmatmul.f32.gmra.mxu0 %v1286
    %v1453 = vpop.f32.mrf.mxu0
    %v1454 = vadd.f32 %v178, %v1453
    %1455 = vdwg.mxu0
    %v1456 = vadd.f32 %v1454, %v1334
    %v1457 = vxor.u32 %v1456, 2147483648
    %v1458 = vmul.f32 %v1457, 1.442695
    %v1459 = vpow.pop %v1458
    %v1460 = vadd.f32 %v1459, 1.0
    %v1461 = vrcp.pop %v1460
    %v1462 = vmul.f32 %v1460, %v1461
    %v1463 = vsub.f32 1.0, %v1462
    %v1464 = vmul.f32 %v1461, %v1463
    %v1465 = vadd.f32 %v1461, %v1464
    %vm1466 = vweird.f32 %v1460
    %vm1467 = vweird.f32 %v1461
    %vm1468 = vmor %vm1466, %vm1467
    %v1469 = vsel %vm1468, %v1461, %v1465
    %v1470 = vand.u32 2147483647, %v1460
    %vm1471 = vcmp.eq.f32.partialorder %v1470, 8.507059e+37
    %v1472 = vand.u32 %v1460, 2147483648
    %v1473 = vor.u32 1.1754944e-38, %v1472
    %v1474 = vsel %vm1471, %v1473, %v1469
    %v1475 = vmul.f32 1.0, %v1474
    %v1476 = vadd.f32 %v1334, %v634
    %1478 = vrot.lane.b32.xlu0 %v1476, 64
    %v1479 = vpop.permute.xlu0 %1478
    %v1481 = vmul.f32 %v1475, %v1479
    %1483 = vrot.lane.b32.xlu0 %v1481, 64
    %v1484 = vpop.permute.xlu0 %1483
    %v1486 = vadd.f32 %v1454, %v1484
    %v1487 = vtanh.pop %v1486
    %v1488 = vsub.f32 1.0, %v1475
    %1490 = vrot.lane.b32.xlu0 %v1487, 96
    %v1491 = vpop.permute.xlu0 %1490
    %v1493 = vmul.f32 %v1488, %v1491
    %v1494 = vmul.f32 %v1475, %v1215
    %v1495 = vadd.f32 %v1493, %v1494
    %v1496 = vld [vmem:[#allocation2 + $0xe0] sm:$0xff]
    %v1497 = vld [vmem:[#allocation2 + $0xe8] sm:$0xff]
    %v1498 = vld [vmem:[#allocation2 + $0xf0] sm:$0xff]
    %v1499 = vld [vmem:[#allocation2 + $0xf8] sm:$0xff]
    %1501 = vrot.lane.b32.xlu0 %v1495, 96
    %v1502 = vpop.permute.xlu0 %1501
    %v1503 = vsel %vm189, %v1502, 0
    %1505 = vmatpush.msra.mxu0 0.0
    %1506 = vmatpush.msra.mxu0 0.0
    %1507 = vmatpush.msra.mxu0 0.0
    %1508 = vmatpush.msra.mxu0 0.0
    %1509 = vmatpush.msra.mxu0 0.0
    %1510 = vmatpush.msra.mxu0 0.0
    %1511 = vmatpush.msra.mxu0 0.0
    %1512 = vmatpush.msra.mxu0 0.0
    %1513 = vmatpush.msra.mxu0 0.0
    %1514 = vmatpush.msra.mxu0 0.0
    %1515 = vmatpush.msra.mxu0 0.0
    %1516 = vmatpush.msra.mxu0 0.0
    %1517 = vmatpush.msra.mxu0 %v1499
    %1518 = vmatpush.msra.mxu0 %v1498
    %1519 = vmatpush.msra.mxu0 %v1497
    %1520 = vmatpush.msra.mxu0 %v1496
    %1521 = vmatmul.f32.gmra.mxu0 %v1503
    %v1522 = vpop.f32.mrf.mxu0
    %v1523 = vadd.f32 %v184, %v1522
    %1524 = vdwg.mxu0
    %1525 = vst [vmem:[#allocation5 + $0x18] sm:$0xff] %v1523
    %v1526 = vld [vmem:[#allocation2 + $0x28] sm:$0xff]
    %v1527 = vld [vmem:[#allocation2 + $0x30] sm:$0xff]
    %v1528 = vld [vmem:[#allocation2 + $0x38] sm:$0xff]
    %v1529 = vld [vmem:[#allocation2 + $0x40] sm:$0xff]
    %1531 = vrot.lane.b32.xlu0 %v1375, 96
    %v1532 = vpop.permute.xlu0 %1531
    %v1533 = vsel %vm189, %v1532, 0
    %1535 = vmatpush.msra.mxu0 0.0
    %1536 = vmatpush.msra.mxu0 0.0
    %1537 = vmatpush.msra.mxu0 0.0
    %1538 = vmatpush.msra.mxu0 0.0
    %1539 = vmatpush.msra.mxu0 0.0
    %1540 = vmatpush.msra.mxu0 0.0
    %1541 = vmatpush.msra.mxu0 0.0
    %1542 = vmatpush.msra.mxu0 0.0
    %1543 = vmatpush.msra.mxu0 0.0
    %1544 = vmatpush.msra.mxu0 0.0
    %1545 = vmatpush.msra.mxu0 0.0
    %1546 = vmatpush.msra.mxu0 0.0
    %1547 = vmatpush.msra.mxu0 %v1529
    %1548 = vmatpush.msra.mxu0 %v1528
    %1549 = vmatpush.msra.mxu0 %v1527
    %1550 = vmatpush.msra.mxu0 %v1526
    %1551 = vmatmul.f32.gmra.mxu0 %v1533
    %v1552 = vpop.f32.mrf.mxu0
    %v1553 = vadd.f32 0.0, %v1552
    %1554 = vdwg.mxu0
    %v1555 = vld [vmem:[#allocation2 + $0x48] sm:$0xff]
    %v1556 = vld [vmem:[#allocation2 + $0x50] sm:$0xff]
    %v1557 = vld [vmem:[#allocation2 + $0x58] sm:$0xff]
    %v1558 = vld [vmem:[#allocation2 + $0x60] sm:$0xff]
    %v1559 = vld [vmem:[#allocation2 + $0x70] sm:$0xff]
    %v1560 = vld [vmem:[#allocation2 + $0x78] sm:$0xff]
    %v1561 = vld [vmem:[#allocation2 + $0x80] sm:$0xff]
    %v1562 = vld [vmem:[#allocation2 + $0x88] sm:$0xff]
    %1564 = vrot.lane.b32.xlu0 %v1435, 96
    %v1565 = vpop.permute.xlu0 %1564
    %v1566 = vsel %vm189, %v1565, 0
    %1568 = vmatpush.msra.mxu0 0.0
    %1569 = vmatpush.msra.mxu0 0.0
    %1570 = vmatpush.msra.mxu0 0.0
    %1571 = vmatpush.msra.mxu0 0.0
    %1572 = vmatpush.msra.mxu0 0.0
    %1573 = vmatpush.msra.mxu0 0.0
    %1574 = vmatpush.msra.mxu0 0.0
    %1575 = vmatpush.msra.mxu0 0.0
    %1576 = vmatpush.msra.mxu0 0.0
    %1577 = vmatpush.msra.mxu0 0.0
    %1578 = vmatpush.msra.mxu0 0.0
    %1579 = vmatpush.msra.mxu0 0.0
    %1580 = vmatpush.msra.mxu0 %v1562
    %1581 = vmatpush.msra.mxu0 %v1561
    %1582 = vmatpush.msra.mxu0 %v1560
    %1583 = vmatpush.msra.mxu0 %v1559
    %1584 = vmatmul.f32.gmra.mxu0 %v1566
    %v1585 = vpop.f32.mrf.mxu0
    %v1586 = vadd.f32 0.0, %v1585
    %1587 = vdwg.mxu0
    %v1588 = vld [vmem:[#allocation2 + $0x90] sm:$0xff]
    %v1589 = vld [vmem:[#allocation2 + $0x98] sm:$0xff]
    %v1590 = vld [vmem:[#allocation2 + $0xa0] sm:$0xff]
    %v1591 = vld [vmem:[#allocation2 + $0xa8] sm:$0xff]
    %v1592 = vld [vmem:[#allocation2 + $0xb8] sm:$0xff]
    %v1593 = vld [vmem:[#allocation2 + $0xc0] sm:$0xff]
    %v1594 = vld [vmem:[#allocation2 + $0xc8] sm:$0xff]
    %v1595 = vld [vmem:[#allocation2 + $0xd0] sm:$0xff]
    %1596 = vmatpush.msra.mxu0 0.0
    %1597 = vmatpush.msra.mxu0 0.0
    %1598 = vmatpush.msra.mxu0 0.0
    %1599 = vmatpush.msra.mxu0 0.0
    %1600 = vmatpush.msra.mxu0 0.0
    %1601 = vmatpush.msra.mxu0 0.0
    %1602 = vmatpush.msra.mxu0 0.0
    %1603 = vmatpush.msra.mxu0 0.0
    %1604 = vmatpush.msra.mxu0 0.0
    %1605 = vmatpush.msra.mxu0 0.0
    %1606 = vmatpush.msra.mxu0 0.0
    %1607 = vmatpush.msra.mxu0 0.0
    %1608 = vmatpush.msra.mxu0 %v1595
    %1609 = vmatpush.msra.mxu0 %v1594
    %1610 = vmatpush.msra.mxu0 %v1593
    %1611 = vmatpush.msra.mxu0 %v1592
    %1612 = vmatmul.f32.gmra.mxu0 %v1503
    %v1613 = vpop.f32.mrf.mxu0
    %v1614 = vadd.f32 0.0, %v1613
    %1615 = vdwg.mxu0
    %v1616 = vadd.f32 %v170, %v1553
    %v1617 = vxor.u32 %v1616, 2147483648
    %v1618 = vmul.f32 %v1617, 1.442695
    %v1619 = vpow.pop %v1618
    %v1620 = vadd.f32 %v1619, 1.0
    %v1621 = vrcp.pop %v1620
    %v1622 = vmul.f32 %v1620, %v1621
    %v1623 = vsub.f32 1.0, %v1622
    %v1624 = vmul.f32 %v1621, %v1623
    %v1625 = vadd.f32 %v1621, %v1624
    %vm1626 = vweird.f32 %v1620
    %vm1627 = vweird.f32 %v1621
    %vm1628 = vmor %vm1626, %vm1627
    %v1629 = vsel %vm1628, %v1621, %v1625
    %v1630 = vand.u32 2147483647, %v1620
    %vm1631 = vcmp.eq.f32.partialorder %v1630, 8.507059e+37
    %v1632 = vand.u32 %v1620, 2147483648
    %v1633 = vor.u32 1.1754944e-38, %v1632
    %v1634 = vsel %vm1631, %v1633, %v1629
    %v1635 = vmul.f32 1.0, %v1634
    %v1636 = vadd.f32 %v1553, %v235
    %1638 = vrot.lane.b32.xlu0 %v1636, 64
    %v1639 = vpop.permute.xlu0 %1638
    %v1641 = vmul.f32 %v1635, %v1639
    %1643 = vrot.lane.b32.xlu0 %v1641, 64
    %v1644 = vpop.permute.xlu0 %1643
    %v1646 = vadd.f32 %v170, %v1644
    %v1647 = vtanh.pop %v1646
    %v1648 = vsub.f32 1.0, %v1635
    %1650 = vrot.lane.b32.xlu0 %v1647, 96
    %v1651 = vpop.permute.xlu0 %1650
    %v1653 = vmul.f32 %v1648, %v1651
    %v1654 = vmul.f32 %v1635, %v1375
    %v1655 = vadd.f32 %v1653, %v1654
    %1656 = vmatpush.msra.mxu0 0.0
    %1657 = vmatpush.msra.mxu0 0.0
    %1658 = vmatpush.msra.mxu0 0.0
    %1659 = vmatpush.msra.mxu0 0.0
    %1660 = vmatpush.msra.mxu0 0.0
    %1661 = vmatpush.msra.mxu0 0.0
    %1662 = vmatpush.msra.mxu0 0.0
    %1663 = vmatpush.msra.mxu0 0.0
    %1664 = vmatpush.msra.mxu0 0.0
    %1665 = vmatpush.msra.mxu0 0.0
    %1666 = vmatpush.msra.mxu0 0.0
    %1667 = vmatpush.msra.mxu0 0.0
    %1668 = vmatpush.msra.mxu0 %v1558
    %1669 = vmatpush.msra.mxu0 %v1557
    %1670 = vmatpush.msra.mxu0 %v1556
    %1671 = vmatpush.msra.mxu0 %v1555
    %1672 = vmatmul.f32.gmra.mxu0 %v1533
    %v1673 = vpop.f32.mrf.mxu0
    %v1674 = vadd.f32 %v176, %v1673
    %1675 = vdwg.mxu0
    %v1676 = vadd.f32 %v1674, %v1586
    %v1677 = vxor.u32 %v1676, 2147483648
    %v1678 = vmul.f32 %v1677, 1.442695
    %v1679 = vpow.pop %v1678
    %v1680 = vadd.f32 %v1679, 1.0
    %v1681 = vrcp.pop %v1680
    %v1682 = vmul.f32 %v1680, %v1681
    %v1683 = vsub.f32 1.0, %v1682
    %v1684 = vmul.f32 %v1681, %v1683
    %v1685 = vadd.f32 %v1681, %v1684
    %vm1686 = vweird.f32 %v1680
    %vm1687 = vweird.f32 %v1681
    %vm1688 = vmor %vm1686, %vm1687
    %v1689 = vsel %vm1688, %v1681, %v1685
    %v1690 = vand.u32 2147483647, %v1680
    %vm1691 = vcmp.eq.f32.partialorder %v1690, 8.507059e+37
    %v1692 = vand.u32 %v1680, 2147483648
    %v1693 = vor.u32 1.1754944e-38, %v1692
    %v1694 = vsel %vm1691, %v1693, %v1689
    %v1695 = vmul.f32 1.0, %v1694
    %v1696 = vadd.f32 %v1586, %v392
    %1698 = vrot.lane.b32.xlu0 %v1696, 64
    %v1699 = vpop.permute.xlu0 %1698
    %v1701 = vmul.f32 %v1695, %v1699
    %1703 = vrot.lane.b32.xlu0 %v1701, 64
    %v1704 = vpop.permute.xlu0 %1703
    %v1706 = vadd.f32 %v1674, %v1704
    %v1707 = vtanh.pop %v1706
    %v1708 = vsub.f32 1.0, %v1695
    %1710 = vrot.lane.b32.xlu0 %v1707, 96
    %v1711 = vpop.permute.xlu0 %1710
    %v1713 = vmul.f32 %v1708, %v1711
    %v1714 = vmul.f32 %v1695, %v1435
    %v1715 = vadd.f32 %v1713, %v1714
    %1716 = vmatpush.msra.mxu0 0.0
    %1717 = vmatpush.msra.mxu0 0.0
    %1718 = vmatpush.msra.mxu0 0.0
    %1719 = vmatpush.msra.mxu0 0.0
    %1720 = vmatpush.msra.mxu0 0.0
    %1721 = vmatpush.msra.mxu0 0.0
    %1722 = vmatpush.msra.mxu0 0.0
    %1723 = vmatpush.msra.mxu0 0.0
    %1724 = vmatpush.msra.mxu0 0.0
    %1725 = vmatpush.msra.mxu0 0.0
    %1726 = vmatpush.msra.mxu0 0.0
    %1727 = vmatpush.msra.mxu0 0.0
    %1728 = vmatpush.msra.mxu0 %v1591
    %1729 = vmatpush.msra.mxu0 %v1590
    %1730 = vmatpush.msra.mxu0 %v1589
    %1731 = vmatpush.msra.mxu0 %v1588
    %1732 = vmatmul.f32.gmra.mxu0 %v1566
    %v1733 = vpop.f32.mrf.mxu0
    %v1734 = vadd.f32 %v178, %v1733
    %1735 = vdwg.mxu0
    %v1736 = vadd.f32 %v1734, %v1614
    %v1737 = vxor.u32 %v1736, 2147483648
    %v1738 = vmul.f32 %v1737, 1.442695
    %v1739 = vpow.pop %v1738
    %v1740 = vadd.f32 %v1739, 1.0
    %v1741 = vrcp.pop %v1740
    %v1742 = vmul.f32 %v1740, %v1741
    %v1743 = vsub.f32 1.0, %v1742
    %v1744 = vmul.f32 %v1741, %v1743
    %v1745 = vadd.f32 %v1741, %v1744
    %vm1746 = vweird.f32 %v1740
    %vm1747 = vweird.f32 %v1741
    %vm1748 = vmor %vm1746, %vm1747
    %v1749 = vsel %vm1748, %v1741, %v1745
    %v1750 = vand.u32 2147483647, %v1740
    %vm1751 = vcmp.eq.f32.partialorder %v1750, 8.507059e+37
    %v1752 = vand.u32 %v1740, 2147483648
    %v1753 = vor.u32 1.1754944e-38, %v1752
    %v1754 = vsel %vm1751, %v1753, %v1749
    %v1755 = vmul.f32 1.0, %v1754
    %v1756 = vadd.f32 %v1614, %v634
    %1758 = vrot.lane.b32.xlu0 %v1756, 64
    %v1759 = vpop.permute.xlu0 %1758
    %v1761 = vmul.f32 %v1755, %v1759
    %1763 = vrot.lane.b32.xlu0 %v1761, 64
    %v1764 = vpop.permute.xlu0 %1763
    %v1766 = vadd.f32 %v1734, %v1764
    %v1767 = vtanh.pop %v1766
    %v1768 = vsub.f32 1.0, %v1755
    %1770 = vrot.lane.b32.xlu0 %v1767, 96
    %v1771 = vpop.permute.xlu0 %1770
    %v1773 = vmul.f32 %v1768, %v1771
    %v1774 = vmul.f32 %v1755, %v1495
    %v1775 = vadd.f32 %v1773, %v1774
    %v1776 = vld [vmem:[#allocation2 + $0xe0] sm:$0xff]
    %v1777 = vld [vmem:[#allocation2 + $0xe8] sm:$0xff]
    %v1778 = vld [vmem:[#allocation2 + $0xf0] sm:$0xff]
    %v1779 = vld [vmem:[#allocation2 + $0xf8] sm:$0xff]
    %1781 = vrot.lane.b32.xlu0 %v1775, 96
    %v1782 = vpop.permute.xlu0 %1781
    %v1783 = vsel %vm189, %v1782, 0
    %1785 = vmatpush.msra.mxu0 0.0
    %1786 = vmatpush.msra.mxu0 0.0
    %1787 = vmatpush.msra.mxu0 0.0
    %1788 = vmatpush.msra.mxu0 0.0
    %1789 = vmatpush.msra.mxu0 0.0
    %1790 = vmatpush.msra.mxu0 0.0
    %1791 = vmatpush.msra.mxu0 0.0
    %1792 = vmatpush.msra.mxu0 0.0
    %1793 = vmatpush.msra.mxu0 0.0
    %1794 = vmatpush.msra.mxu0 0.0
    %1795 = vmatpush.msra.mxu0 0.0
    %1796 = vmatpush.msra.mxu0 0.0
    %1797 = vmatpush.msra.mxu0 %v1779
    %1798 = vmatpush.msra.mxu0 %v1778
    %1799 = vmatpush.msra.mxu0 %v1777
    %1800 = vmatpush.msra.mxu0 %v1776
    %1801 = vmatmul.f32.gmra.mxu0 %v1783
    %v1802 = vpop.f32.mrf.mxu0
    %v1803 = vadd.f32 %v184, %v1802
    %1804 = vdwg.mxu0
    %1805 = vst [vmem:[#allocation5 + $0x20] sm:$0xff] %v1803
    %v1806 = vld [vmem:[#allocation2 + $0x28] sm:$0xff]
    %v1807 = vld [vmem:[#allocation2 + $0x30] sm:$0xff]
    %v1808 = vld [vmem:[#allocation2 + $0x38] sm:$0xff]
    %v1809 = vld [vmem:[#allocation2 + $0x40] sm:$0xff]
    %1811 = vrot.lane.b32.xlu0 %v1655, 96
    %v1812 = vpop.permute.xlu0 %1811
    %v1813 = vsel %vm189, %v1812, 0
    %1815 = vmatpush.msra.mxu0 0.0
    %1816 = vmatpush.msra.mxu0 0.0
    %1817 = vmatpush.msra.mxu0 0.0
    %1818 = vmatpush.msra.mxu0 0.0
    %1819 = vmatpush.msra.mxu0 0.0
    %1820 = vmatpush.msra.mxu0 0.0
    %1821 = vmatpush.msra.mxu0 0.0
    %1822 = vmatpush.msra.mxu0 0.0
    %1823 = vmatpush.msra.mxu0 0.0
    %1824 = vmatpush.msra.mxu0 0.0
    %1825 = vmatpush.msra.mxu0 0.0
    %1826 = vmatpush.msra.mxu0 0.0
    %1827 = vmatpush.msra.mxu0 %v1809
    %1828 = vmatpush.msra.mxu0 %v1808
    %1829 = vmatpush.msra.mxu0 %v1807
    %1830 = vmatpush.msra.mxu0 %v1806
    %1831 = vmatmul.f32.gmra.mxu0 %v1813
    %v1832 = vpop.f32.mrf.mxu0
    %v1833 = vadd.f32 0.0, %v1832
    %1834 = vdwg.mxu0
    %v1835 = vld [vmem:[#allocation2 + $0x48] sm:$0xff]
    %v1836 = vld [vmem:[#allocation2 + $0x50] sm:$0xff]
    %v1837 = vld [vmem:[#allocation2 + $0x58] sm:$0xff]
    %v1838 = vld [vmem:[#allocation2 + $0x60] sm:$0xff]
    %v1839 = vld [vmem:[#allocation2 + $0x70] sm:$0xff]
    %v1840 = vld [vmem:[#allocation2 + $0x78] sm:$0xff]
    %v1841 = vld [vmem:[#allocation2 + $0x80] sm:$0xff]
    %v1842 = vld [vmem:[#allocation2 + $0x88] sm:$0xff]
    %1844 = vrot.lane.b32.xlu0 %v1715, 96
    %v1845 = vpop.permute.xlu0 %1844
    %v1846 = vsel %vm189, %v1845, 0
    %1848 = vmatpush.msra.mxu0 0.0
    %1849 = vmatpush.msra.mxu0 0.0
    %1850 = vmatpush.msra.mxu0 0.0
    %1851 = vmatpush.msra.mxu0 0.0
    %1852 = vmatpush.msra.mxu0 0.0
    %1853 = vmatpush.msra.mxu0 0.0
    %1854 = vmatpush.msra.mxu0 0.0
    %1855 = vmatpush.msra.mxu0 0.0
    %1856 = vmatpush.msra.mxu0 0.0
    %1857 = vmatpush.msra.mxu0 0.0
    %1858 = vmatpush.msra.mxu0 0.0
    %1859 = vmatpush.msra.mxu0 0.0
    %1860 = vmatpush.msra.mxu0 %v1842
    %1861 = vmatpush.msra.mxu0 %v1841
    %1862 = vmatpush.msra.mxu0 %v1840
    %1863 = vmatpush.msra.mxu0 %v1839
    %1864 = vmatmul.f32.gmra.mxu0 %v1846
    %v1865 = vpop.f32.mrf.mxu0
    %v1866 = vadd.f32 0.0, %v1865
    %1867 = vdwg.mxu0
    %v1868 = vld [vmem:[#allocation2 + $0x90] sm:$0xff]
    %v1869 = vld [vmem:[#allocation2 + $0x98] sm:$0xff]
    %v1870 = vld [vmem:[#allocation2 + $0xa0] sm:$0xff]
    %v1871 = vld [vmem:[#allocation2 + $0xa8] sm:$0xff]
    %v1872 = vld [vmem:[#allocation2 + $0xb8] sm:$0xff]
    %v1873 = vld [vmem:[#allocation2 + $0xc0] sm:$0xff]
    %v1874 = vld [vmem:[#allocation2 + $0xc8] sm:$0xff]
    %v1875 = vld [vmem:[#allocation2 + $0xd0] sm:$0xff]
    %1876 = vmatpush.msra.mxu0 0.0
    %1877 = vmatpush.msra.mxu0 0.0
    %1878 = vmatpush.msra.mxu0 0.0
    %1879 = vmatpush.msra.mxu0 0.0
    %1880 = vmatpush.msra.mxu0 0.0
    %1881 = vmatpush.msra.mxu0 0.0
    %1882 = vmatpush.msra.mxu0 0.0
    %1883 = vmatpush.msra.mxu0 0.0
    %1884 = vmatpush.msra.mxu0 0.0
    %1885 = vmatpush.msra.mxu0 0.0
    %1886 = vmatpush.msra.mxu0 0.0
    %1887 = vmatpush.msra.mxu0 0.0
    %1888 = vmatpush.msra.mxu0 %v1875
    %1889 = vmatpush.msra.mxu0 %v1874
    %1890 = vmatpush.msra.mxu0 %v1873
    %1891 = vmatpush.msra.mxu0 %v1872
    %1892 = vmatmul.f32.gmra.mxu0 %v1783
    %v1893 = vpop.f32.mrf.mxu0
    %v1894 = vadd.f32 0.0, %v1893
    %1895 = vdwg.mxu0
    %v1896 = vadd.f32 %v173, %v1833
    %v1897 = vxor.u32 %v1896, 2147483648
    %v1898 = vmul.f32 %v1897, 1.442695
    %v1899 = vpow.pop %v1898
    %v1900 = vadd.f32 %v1899, 1.0
    %v1901 = vrcp.pop %v1900
    %v1902 = vmul.f32 %v1900, %v1901
    %v1903 = vsub.f32 1.0, %v1902
    %v1904 = vmul.f32 %v1901, %v1903
    %v1905 = vadd.f32 %v1901, %v1904
    %vm1906 = vweird.f32 %v1900
    %vm1907 = vweird.f32 %v1901
    %vm1908 = vmor %vm1906, %vm1907
    %v1909 = vsel %vm1908, %v1901, %v1905
    %v1910 = vand.u32 2147483647, %v1900
    %vm1911 = vcmp.eq.f32.partialorder %v1910, 8.507059e+37
    %v1912 = vand.u32 %v1900, 2147483648
    %v1913 = vor.u32 1.1754944e-38, %v1912
    %v1914 = vsel %vm1911, %v1913, %v1909
    %v1915 = vmul.f32 1.0, %v1914
    %v1916 = vadd.f32 %v1833, %v235
    %1918 = vrot.lane.b32.xlu0 %v1916, 64
    %v1919 = vpop.permute.xlu0 %1918
    %v1921 = vmul.f32 %v1915, %v1919
    %1923 = vrot.lane.b32.xlu0 %v1921, 64
    %v1924 = vpop.permute.xlu0 %1923
    %v1926 = vadd.f32 %v173, %v1924
    %v1927 = vtanh.pop %v1926
    %v1928 = vsub.f32 1.0, %v1915
    %1930 = vrot.lane.b32.xlu0 %v1927, 96
    %v1931 = vpop.permute.xlu0 %1930
    %v1933 = vmul.f32 %v1928, %v1931
    %v1934 = vmul.f32 %v1915, %v1655
    %v1935 = vadd.f32 %v1933, %v1934
    %1936 = vmatpush.msra.mxu0 0.0
    %1937 = vmatpush.msra.mxu0 0.0
    %1938 = vmatpush.msra.mxu0 0.0
    %1939 = vmatpush.msra.mxu0 0.0
    %1940 = vmatpush.msra.mxu0 0.0
    %1941 = vmatpush.msra.mxu0 0.0
    %1942 = vmatpush.msra.mxu0 0.0
    %1943 = vmatpush.msra.mxu0 0.0
    %1944 = vmatpush.msra.mxu0 0.0
    %1945 = vmatpush.msra.mxu0 0.0
    %1946 = vmatpush.msra.mxu0 0.0
    %1947 = vmatpush.msra.mxu0 0.0
    %1948 = vmatpush.msra.mxu0 %v1838
    %1949 = vmatpush.msra.mxu0 %v1837
    %1950 = vmatpush.msra.mxu0 %v1836
    %1951 = vmatpush.msra.mxu0 %v1835
    %1952 = vmatmul.f32.gmra.mxu0 %v1813
    %v1953 = vpop.f32.mrf.mxu0
    %v1954 = vadd.f32 %v176, %v1953
    %1955 = vdwg.mxu0
    %v1956 = vadd.f32 %v1954, %v1866
    %v1957 = vxor.u32 %v1956, 2147483648
    %v1958 = vmul.f32 %v1957, 1.442695
    %v1959 = vpow.pop %v1958
    %v1960 = vadd.f32 %v1959, 1.0
    %v1961 = vrcp.pop %v1960
    %v1962 = vmul.f32 %v1960, %v1961
    %v1963 = vsub.f32 1.0, %v1962
    %v1964 = vmul.f32 %v1961, %v1963
    %v1965 = vadd.f32 %v1961, %v1964
    %vm1966 = vweird.f32 %v1960
    %vm1967 = vweird.f32 %v1961
    %vm1968 = vmor %vm1966, %vm1967
    %v1969 = vsel %vm1968, %v1961, %v1965
    %v1970 = vand.u32 2147483647, %v1960
    %vm1971 = vcmp.eq.f32.partialorder %v1970, 8.507059e+37
    %v1972 = vand.u32 %v1960, 2147483648
    %v1973 = vor.u32 1.1754944e-38, %v1972
    %v1974 = vsel %vm1971, %v1973, %v1969
    %v1975 = vmul.f32 1.0, %v1974
    %v1976 = vadd.f32 %v1866, %v392
    %1978 = vrot.lane.b32.xlu0 %v1976, 64
    %v1979 = vpop.permute.xlu0 %1978
    %v1981 = vmul.f32 %v1975, %v1979
    %1983 = vrot.lane.b32.xlu0 %v1981, 64
    %v1984 = vpop.permute.xlu0 %1983
    %v1986 = vadd.f32 %v1954, %v1984
    %v1987 = vtanh.pop %v1986
    %v1988 = vsub.f32 1.0, %v1975
    %1990 = vrot.lane.b32.xlu0 %v1987, 96
    %v1991 = vpop.permute.xlu0 %1990
    %v1993 = vmul.f32 %v1988, %v1991
    %v1994 = vmul.f32 %v1975, %v1715
    %v1995 = vadd.f32 %v1993, %v1994
    %1996 = vmatpush.msra.mxu0 0.0
    %1997 = vmatpush.msra.mxu0 0.0
    %1998 = vmatpush.msra.mxu0 0.0
    %1999 = vmatpush.msra.mxu0 0.0
    %2000 = vmatpush.msra.mxu0 0.0
    %2001 = vmatpush.msra.mxu0 0.0
    %2002 = vmatpush.msra.mxu0 0.0
    %2003 = vmatpush.msra.mxu0 0.0
    %2004 = vmatpush.msra.mxu0 0.0
    %2005 = vmatpush.msra.mxu0 0.0
    %2006 = vmatpush.msra.mxu0 0.0
    %2007 = vmatpush.msra.mxu0 0.0
    %2008 = vmatpush.msra.mxu0 %v1871
    %2009 = vmatpush.msra.mxu0 %v1870
    %2010 = vmatpush.msra.mxu0 %v1869
    %2011 = vmatpush.msra.mxu0 %v1868
    %2012 = vmatmul.f32.gmra.mxu0 %v1846
    %v2013 = vpop.f32.mrf.mxu0
    %v2014 = vadd.f32 %v178, %v2013
    %2015 = vdwg.mxu0
    %v2016 = vadd.f32 %v2014, %v1894
    %v2017 = vxor.u32 %v2016, 2147483648
    %v2018 = vmul.f32 %v2017, 1.442695
    %v2019 = vpow.pop %v2018
    %v2020 = vadd.f32 %v2019, 1.0
    %v2021 = vrcp.pop %v2020
    %v2022 = vmul.f32 %v2020, %v2021
    %v2023 = vsub.f32 1.0, %v2022
    %v2024 = vmul.f32 %v2021, %v2023
    %v2025 = vadd.f32 %v2021, %v2024
    %vm2026 = vweird.f32 %v2020
    %vm2027 = vweird.f32 %v2021
    %vm2028 = vmor %vm2026, %vm2027
    %v2029 = vsel %vm2028, %v2021, %v2025
    %v2030 = vand.u32 2147483647, %v2020
    %vm2031 = vcmp.eq.f32.partialorder %v2030, 8.507059e+37
    %v2032 = vand.u32 %v2020, 2147483648
    %v2033 = vor.u32 1.1754944e-38, %v2032
    %v2034 = vsel %vm2031, %v2033, %v2029
    %v2035 = vmul.f32 1.0, %v2034
    %v2036 = vadd.f32 %v1894, %v634
    %2038 = vrot.lane.b32.xlu0 %v2036, 64
    %v2039 = vpop.permute.xlu0 %2038
    %v2041 = vmul.f32 %v2035, %v2039
    %2043 = vrot.lane.b32.xlu0 %v2041, 64
    %v2044 = vpop.permute.xlu0 %2043
    %v2046 = vadd.f32 %v2014, %v2044
    %v2047 = vtanh.pop %v2046
    %v2048 = vsub.f32 1.0, %v2035
    %2050 = vrot.lane.b32.xlu0 %v2047, 96
    %v2051 = vpop.permute.xlu0 %2050
    %v2053 = vmul.f32 %v2048, %v2051
    %v2054 = vmul.f32 %v2035, %v1775
    %v2055 = vadd.f32 %v2053, %v2054
    %v2056 = vld [vmem:[#allocation2 + $0xe0] sm:$0xff]
    %v2057 = vld [vmem:[#allocation2 + $0xe8] sm:$0xff]
    %v2058 = vld [vmem:[#allocation2 + $0xf0] sm:$0xff]
    %v2059 = vld [vmem:[#allocation2 + $0xf8] sm:$0xff]
    %2061 = vrot.lane.b32.xlu0 %v2055, 96
    %v2062 = vpop.permute.xlu0 %2061
    %v2063 = vsel %vm189, %v2062, 0
    %2065 = vmatpush.msra.mxu0 0.0
    %2066 = vmatpush.msra.mxu0 0.0
    %2067 = vmatpush.msra.mxu0 0.0
    %2068 = vmatpush.msra.mxu0 0.0
    %2069 = vmatpush.msra.mxu0 0.0
    %2070 = vmatpush.msra.mxu0 0.0
    %2071 = vmatpush.msra.mxu0 0.0
    %2072 = vmatpush.msra.mxu0 0.0
    %2073 = vmatpush.msra.mxu0 0.0
    %2074 = vmatpush.msra.mxu0 0.0
    %2075 = vmatpush.msra.mxu0 0.0
    %2076 = vmatpush.msra.mxu0 0.0
    %2077 = vmatpush.msra.mxu0 %v2059
    %2078 = vmatpush.msra.mxu0 %v2058
    %2079 = vmatpush.msra.mxu0 %v2057
    %2080 = vmatpush.msra.mxu0 %v2056
    %2081 = vmatmul.f32.gmra.mxu0 %v2063
    %v2082 = vpop.f32.mrf.mxu0
    %v2083 = vadd.f32 %v184, %v2082
    %2084 = vdwg.mxu0
    %2085 = vst [vmem:[#allocation5 + $0x28] sm:$0xff] %v2083
    %v2086 = vld [vmem:[#allocation2 + $0x48] sm:$0xff]
    %v2087 = vld [vmem:[#allocation2 + $0x50] sm:$0xff]
    %v2088 = vld [vmem:[#allocation2 + $0x58] sm:$0xff]
    %v2089 = vld [vmem:[#allocation2 + $0x60] sm:$0xff]
    %v2090 = vld [vmem:[#allocation2 + $0x70] sm:$0xff]
    %v2091 = vld [vmem:[#allocation2 + $0x78] sm:$0xff]
    %v2092 = vld [vmem:[#allocation2 + $0x80] sm:$0xff]
    %v2093 = vld [vmem:[#allocation2 + $0x88] sm:$0xff]
    %2095 = vrot.lane.b32.xlu0 %v1995, 96
    %v2096 = vpop.permute.xlu0 %2095
    %v2097 = vsel %vm189, %v2096, 0
    %2099 = vmatpush.msra.mxu0 0.0
    %2100 = vmatpush.msra.mxu0 0.0
    %2101 = vmatpush.msra.mxu0 0.0
    %2102 = vmatpush.msra.mxu0 0.0
    %2103 = vmatpush.msra.mxu0 0.0
    %2104 = vmatpush.msra.mxu0 0.0
    %2105 = vmatpush.msra.mxu0 0.0
    %2106 = vmatpush.msra.mxu0 0.0
    %2107 = vmatpush.msra.mxu0 0.0
    %2108 = vmatpush.msra.mxu0 0.0
    %2109 = vmatpush.msra.mxu0 0.0
    %2110 = vmatpush.msra.mxu0 0.0
    %2111 = vmatpush.msra.mxu0 %v2093
    %2112 = vmatpush.msra.mxu0 %v2092
    %2113 = vmatpush.msra.mxu0 %v2091
    %2114 = vmatpush.msra.mxu0 %v2090
    %2115 = vmatmul.f32.gmra.mxu0 %v2097
    %v2116 = vpop.f32.mrf.mxu0
    %v2117 = vadd.f32 0.0, %v2116
    %2118 = vdwg.mxu0
    %v2119 = vld [vmem:[#allocation2 + $0x90] sm:$0xff]
    %v2120 = vld [vmem:[#allocation2 + $0x98] sm:$0xff]
    %v2121 = vld [vmem:[#allocation2 + $0xa0] sm:$0xff]
    %v2122 = vld [vmem:[#allocation2 + $0xa8] sm:$0xff]
    %v2123 = vld [vmem:[#allocation2 + $0xb8] sm:$0xff]
    %v2124 = vld [vmem:[#allocation2 + $0xc0] sm:$0xff]
    %v2125 = vld [vmem:[#allocation2 + $0xc8] sm:$0xff]
    %v2126 = vld [vmem:[#allocation2 + $0xd0] sm:$0xff]
    %2127 = vmatpush.msra.mxu0 0.0
    %2128 = vmatpush.msra.mxu0 0.0
    %2129 = vmatpush.msra.mxu0 0.0
    %2130 = vmatpush.msra.mxu0 0.0
    %2131 = vmatpush.msra.mxu0 0.0
    %2132 = vmatpush.msra.mxu0 0.0
    %2133 = vmatpush.msra.mxu0 0.0
    %2134 = vmatpush.msra.mxu0 0.0
    %2135 = vmatpush.msra.mxu0 0.0
    %2136 = vmatpush.msra.mxu0 0.0
    %2137 = vmatpush.msra.mxu0 0.0
    %2138 = vmatpush.msra.mxu0 0.0
    %2139 = vmatpush.msra.mxu0 %v2126
    %2140 = vmatpush.msra.mxu0 %v2125
    %2141 = vmatpush.msra.mxu0 %v2124
    %2142 = vmatpush.msra.mxu0 %v2123
    %2143 = vmatmul.f32.gmra.mxu0 %v2063
    %v2144 = vpop.f32.mrf.mxu0
    %v2145 = vadd.f32 0.0, %v2144
    %2146 = vdwg.mxu0
    %2148 = vrot.lane.b32.xlu0 %v1935, 96
    %v2149 = vpop.permute.xlu0 %2148
    %v2150 = vsel %vm189, %v2149, 0
    %2152 = vmatpush.msra.mxu0 0.0
    %2153 = vmatpush.msra.mxu0 0.0
    %2154 = vmatpush.msra.mxu0 0.0
    %2155 = vmatpush.msra.mxu0 0.0
    %2156 = vmatpush.msra.mxu0 0.0
    %2157 = vmatpush.msra.mxu0 0.0
    %2158 = vmatpush.msra.mxu0 0.0
    %2159 = vmatpush.msra.mxu0 0.0
    %2160 = vmatpush.msra.mxu0 0.0
    %2161 = vmatpush.msra.mxu0 0.0
    %2162 = vmatpush.msra.mxu0 0.0
    %2163 = vmatpush.msra.mxu0 0.0
    %2164 = vmatpush.msra.mxu0 %v2089
    %2165 = vmatpush.msra.mxu0 %v2088
    %2166 = vmatpush.msra.mxu0 %v2087
    %2167 = vmatpush.msra.mxu0 %v2086
    %2168 = vmatmul.f32.gmra.mxu0 %v2150
    %v2169 = vpop.f32.mrf.mxu0
    %v2170 = vadd.f32 %v176, %v2169
    %2171 = vdwg.mxu0
    %v2172 = vadd.f32 %v2170, %v2117
    %v2173 = vxor.u32 %v2172, 2147483648
    %v2174 = vmul.f32 %v2173, 1.442695
    %v2175 = vpow.pop %v2174
    %v2176 = vadd.f32 %v2175, 1.0
    %v2177 = vrcp.pop %v2176
    %v2178 = vmul.f32 %v2176, %v2177
    %v2179 = vsub.f32 1.0, %v2178
    %v2180 = vmul.f32 %v2177, %v2179
    %v2181 = vadd.f32 %v2177, %v2180
    %vm2182 = vweird.f32 %v2176
    %vm2183 = vweird.f32 %v2177
    %vm2184 = vmor %vm2182, %vm2183
    %v2185 = vsel %vm2184, %v2177, %v2181
    %v2186 = vand.u32 2147483647, %v2176
    %vm2187 = vcmp.eq.f32.partialorder %v2186, 8.507059e+37
    %v2188 = vand.u32 %v2176, 2147483648
    %v2189 = vor.u32 1.1754944e-38, %v2188
    %v2190 = vsel %vm2187, %v2189, %v2185
    %v2191 = vmul.f32 1.0, %v2190
    %v2192 = vadd.f32 %v2117, %v392
    %2194 = vrot.lane.b32.xlu0 %v2192, 64
    %v2195 = vpop.permute.xlu0 %2194
    %v2197 = vmul.f32 %v2191, %v2195
    %2199 = vrot.lane.b32.xlu0 %v2197, 64
    %v2200 = vpop.permute.xlu0 %2199
    %v2202 = vadd.f32 %v2170, %v2200
    %v2203 = vtanh.pop %v2202
    %v2204 = vsub.f32 1.0, %v2191
    %2206 = vrot.lane.b32.xlu0 %v2203, 96
    %v2207 = vpop.permute.xlu0 %2206
    %v2209 = vmul.f32 %v2204, %v2207
    %v2210 = vmul.f32 %v2191, %v1995
    %v2211 = vadd.f32 %v2209, %v2210
    %2212 = vmatpush.msra.mxu0 0.0
    %2213 = vmatpush.msra.mxu0 0.0
    %2214 = vmatpush.msra.mxu0 0.0
    %2215 = vmatpush.msra.mxu0 0.0
    %2216 = vmatpush.msra.mxu0 0.0
    %2217 = vmatpush.msra.mxu0 0.0
    %2218 = vmatpush.msra.mxu0 0.0
    %2219 = vmatpush.msra.mxu0 0.0
    %2220 = vmatpush.msra.mxu0 0.0
    %2221 = vmatpush.msra.mxu0 0.0
    %2222 = vmatpush.msra.mxu0 0.0
    %2223 = vmatpush.msra.mxu0 0.0
    %2224 = vmatpush.msra.mxu0 %v2122
    %2225 = vmatpush.msra.mxu0 %v2121
    %2226 = vmatpush.msra.mxu0 %v2120
    %2227 = vmatpush.msra.mxu0 %v2119
    %2228 = vmatmul.f32.gmra.mxu0 %v2097
    %v2229 = vpop.f32.mrf.mxu0
    %v2230 = vadd.f32 %v178, %v2229
    %2231 = vdwg.mxu0
    %v2232 = vadd.f32 %v2230, %v2145
    %v2233 = vxor.u32 %v2232, 2147483648
    %v2234 = vmul.f32 %v2233, 1.442695
    %v2235 = vpow.pop %v2234
    %v2236 = vadd.f32 %v2235, 1.0
    %v2237 = vrcp.pop %v2236
    %v2238 = vmul.f32 %v2236, %v2237
    %v2239 = vsub.f32 1.0, %v2238
    %v2240 = vmul.f32 %v2237, %v2239
    %v2241 = vadd.f32 %v2237, %v2240
    %vm2242 = vweird.f32 %v2236
    %vm2243 = vweird.f32 %v2237
    %vm2244 = vmor %vm2242, %vm2243
    %v2245 = vsel %vm2244, %v2237, %v2241
    %v2246 = vand.u32 2147483647, %v2236
    %vm2247 = vcmp.eq.f32.partialorder %v2246, 8.507059e+37
    %v2248 = vand.u32 %v2236, 2147483648
    %v2249 = vor.u32 1.1754944e-38, %v2248
    %v2250 = vsel %vm2247, %v2249, %v2245
    %v2251 = vmul.f32 1.0, %v2250
    %v2252 = vadd.f32 %v2145, %v634
    %2254 = vrot.lane.b32.xlu0 %v2252, 64
    %v2255 = vpop.permute.xlu0 %2254
    %v2257 = vmul.f32 %v2251, %v2255
    %2259 = vrot.lane.b32.xlu0 %v2257, 64
    %v2260 = vpop.permute.xlu0 %2259
    %v2262 = vadd.f32 %v2230, %v2260
    %v2263 = vtanh.pop %v2262
    %v2264 = vsub.f32 1.0, %v2251
    %2266 = vrot.lane.b32.xlu0 %v2263, 96
    %v2267 = vpop.permute.xlu0 %2266
    %v2269 = vmul.f32 %v2264, %v2267
    %v2270 = vmul.f32 %v2251, %v2055
    %v2271 = vadd.f32 %v2269, %v2270
    %v2272 = vld [vmem:[#allocation2 + $0xe0] sm:$0xff]
    %v2273 = vld [vmem:[#allocation2 + $0xe8] sm:$0xff]
    %v2274 = vld [vmem:[#allocation2 + $0xf0] sm:$0xff]
    %v2275 = vld [vmem:[#allocation2 + $0xf8] sm:$0xff]
    %2277 = vrot.lane.b32.xlu0 %v2271, 96
    %v2278 = vpop.permute.xlu0 %2277
    %v2279 = vsel %vm189, %v2278, 0
    %2281 = vmatpush.msra.mxu0 0.0
    %2282 = vmatpush.msra.mxu0 0.0
    %2283 = vmatpush.msra.mxu0 0.0
    %2284 = vmatpush.msra.mxu0 0.0
    %2285 = vmatpush.msra.mxu0 0.0
    %2286 = vmatpush.msra.mxu0 0.0
    %2287 = vmatpush.msra.mxu0 0.0
    %2288 = vmatpush.msra.mxu0 0.0
    %2289 = vmatpush.msra.mxu0 0.0
    %2290 = vmatpush.msra.mxu0 0.0
    %2291 = vmatpush.msra.mxu0 0.0
    %2292 = vmatpush.msra.mxu0 0.0
    %2293 = vmatpush.msra.mxu0 %v2275
    %2294 = vmatpush.msra.mxu0 %v2274
    %2295 = vmatpush.msra.mxu0 %v2273
    %2296 = vmatpush.msra.mxu0 %v2272
    %2297 = vmatmul.f32.gmra.mxu0 %v2279
    %v2298 = vpop.f32.mrf.mxu0
    %v2299 = vadd.f32 %v184, %v2298
    %2300 = vdwg.mxu0
    %2301 = vst [vmem:[#allocation5 + $0x30] sm:$0xff] %v2299
    %v2302 = vld [vmem:[#allocation2 + $0x90] sm:$0xff]
    %v2303 = vld [vmem:[#allocation2 + $0x98] sm:$0xff]
    %v2304 = vld [vmem:[#allocation2 + $0xa0] sm:$0xff]
    %v2305 = vld [vmem:[#allocation2 + $0xa8] sm:$0xff]
    %v2306 = vld [vmem:[#allocation2 + $0xb8] sm:$0xff]
    %v2307 = vld [vmem:[#allocation2 + $0xc0] sm:$0xff]
    %v2308 = vld [vmem:[#allocation2 + $0xc8] sm:$0xff]
    %v2309 = vld [vmem:[#allocation2 + $0xd0] sm:$0xff]
    %2310 = vmatpush.msra.mxu0 0.0
    %2311 = vmatpush.msra.mxu0 0.0
    %2312 = vmatpush.msra.mxu0 0.0
    %2313 = vmatpush.msra.mxu0 0.0
    %2314 = vmatpush.msra.mxu0 0.0
    %2315 = vmatpush.msra.mxu0 0.0
    %2316 = vmatpush.msra.mxu0 0.0
    %2317 = vmatpush.msra.mxu0 0.0
    %2318 = vmatpush.msra.mxu0 0.0
    %2319 = vmatpush.msra.mxu0 0.0
    %2320 = vmatpush.msra.mxu0 0.0
    %2321 = vmatpush.msra.mxu0 0.0
    %2322 = vmatpush.msra.mxu0 %v2309
    %2323 = vmatpush.msra.mxu0 %v2308
    %2324 = vmatpush.msra.mxu0 %v2307
    %2325 = vmatpush.msra.mxu0 %v2306
    %2326 = vmatmul.f32.gmra.mxu0 %v2279
    %v2327 = vpop.f32.mrf.mxu0
    %v2328 = vadd.f32 0.0, %v2327
    %2329 = vdwg.mxu0
    %2331 = vrot.lane.b32.xlu0 %v2211, 96
    %v2332 = vpop.permute.xlu0 %2331
    %v2333 = vsel %vm189, %v2332, 0
    %2335 = vmatpush.msra.mxu0 0.0
    %2336 = vmatpush.msra.mxu0 0.0
    %2337 = vmatpush.msra.mxu0 0.0
    %2338 = vmatpush.msra.mxu0 0.0
    %2339 = vmatpush.msra.mxu0 0.0
    %2340 = vmatpush.msra.mxu0 0.0
    %2341 = vmatpush.msra.mxu0 0.0
    %2342 = vmatpush.msra.mxu0 0.0
    %2343 = vmatpush.msra.mxu0 0.0
    %2344 = vmatpush.msra.mxu0 0.0
    %2345 = vmatpush.msra.mxu0 0.0
    %2346 = vmatpush.msra.mxu0 0.0
    %2347 = vmatpush.msra.mxu0 %v2305
    %2348 = vmatpush.msra.mxu0 %v2304
    %2349 = vmatpush.msra.mxu0 %v2303
    %2350 = vmatpush.msra.mxu0 %v2302
    %2351 = vmatmul.f32.gmra.mxu0 %v2333
    %v2352 = vpop.f32.mrf.mxu0
    %v2353 = vadd.f32 %v178, %v2352
    %2354 = vdwg.mxu0
    %v2355 = vadd.f32 %v2353, %v2328
    %v2356 = vxor.u32 %v2355, 2147483648
    %v2357 = vmul.f32 %v2356, 1.442695
    %v2358 = vpow.pop %v2357
    %v2359 = vadd.f32 %v2358, 1.0
    %v2360 = vrcp.pop %v2359
    %v2361 = vmul.f32 %v2359, %v2360
    %v2362 = vsub.f32 1.0, %v2361
    %v2363 = vmul.f32 %v2360, %v2362
    %v2364 = vadd.f32 %v2360, %v2363
    %vm2365 = vweird.f32 %v2359
    %vm2366 = vweird.f32 %v2360
    %vm2367 = vmor %vm2365, %vm2366
    %v2368 = vsel %vm2367, %v2360, %v2364
    %v2369 = vand.u32 2147483647, %v2359
    %vm2370 = vcmp.eq.f32.partialorder %v2369, 8.507059e+37
    %v2371 = vand.u32 %v2359, 2147483648
    %v2372 = vor.u32 1.1754944e-38, %v2371
    %v2373 = vsel %vm2370, %v2372, %v2368
    %v2374 = vmul.f32 1.0, %v2373
    %v2375 = vadd.f32 %v2328, %v634
    %2377 = vrot.lane.b32.xlu0 %v2375, 64
    %v2378 = vpop.permute.xlu0 %2377
    %v2380 = vmul.f32 %v2374, %v2378
    %2382 = vrot.lane.b32.xlu0 %v2380, 64
    %v2383 = vpop.permute.xlu0 %2382
    %v2385 = vadd.f32 %v2353, %v2383
    %v2386 = vtanh.pop %v2385
    %v2387 = vsub.f32 1.0, %v2374
    %2389 = vrot.lane.b32.xlu0 %v2386, 96
    %v2390 = vpop.permute.xlu0 %2389
    %v2392 = vmul.f32 %v2387, %v2390
    %v2393 = vmul.f32 %v2374, %v2271
    %v2394 = vadd.f32 %v2392, %v2393
    %v2395 = vld [vmem:[#allocation2 + $0xe0] sm:$0xff]
    %v2396 = vld [vmem:[#allocation2 + $0xe8] sm:$0xff]
    %v2397 = vld [vmem:[#allocation2 + $0xf0] sm:$0xff]
    %v2398 = vld [vmem:[#allocation2 + $0xf8] sm:$0xff]
    %2400 = vrot.lane.b32.xlu0 %v2394, 96
    %v2401 = vpop.permute.xlu0 %2400
    %v2402 = vsel %vm189, %v2401, 0
    %2404 = vmatpush.msra.mxu0 0.0
    %2405 = vmatpush.msra.mxu0 0.0
    %2406 = vmatpush.msra.mxu0 0.0
    %2407 = vmatpush.msra.mxu0 0.0
    %2408 = vmatpush.msra.mxu0 0.0
    %2409 = vmatpush.msra.mxu0 0.0
    %2410 = vmatpush.msra.mxu0 0.0
    %2411 = vmatpush.msra.mxu0 0.0
    %2412 = vmatpush.msra.mxu0 0.0
    %2413 = vmatpush.msra.mxu0 0.0
    %2414 = vmatpush.msra.mxu0 0.0
    %2415 = vmatpush.msra.mxu0 0.0
    %2416 = vmatpush.msra.mxu0 %v2398
    %2417 = vmatpush.msra.mxu0 %v2397
    %2418 = vmatpush.msra.mxu0 %v2396
    %2419 = vmatpush.msra.mxu0 %v2395
    %2420 = vmatmul.f32.gmra.mxu0 %v2402
    %v2421 = vpop.f32.mrf.mxu0
    %v2422 = vadd.f32 %v184, %v2421
    %2423 = vdwg.mxu0
    %2424 = vst [vmem:[#allocation5 + $0x38] sm:$0xff] %v2422
    // Predicated region
    $region14: #{tpu_custom_call.1} parent=1 // pred_check
      _
    $region15: #{tpu_custom_call.1} parent=1 // pred_check_branch
      %2426 = sbr.rel (0) target = $region17
    $region16: #{tpu_custom_call.1} parent=1 // pred_region
      %2428 = vsyncadd [#allocation4], 0
      %s2429 = sshll.u32 [#allocation5], 4
      %s2430 = int_to_ptr.vmem [resolvable:$true] %s2429
      %s2431 = sshll.u32 %s2, 4
      %s2432 = int_to_ptr.hbm [resolvable:$true] %s2431
      %2437 = dma.vmem_to_hbm [thread:$0]  %s2430, 1024, %s2432, [#allocation4], 128, 128, 8
    $region17: #{tpu_custom_call.1} parent=1 // pred_fallthru
      _
    // Predicated region
    $region18: #{tpu_custom_call.1} parent=1 // pred_check
      _
    $region19: #{tpu_custom_call.1} parent=1 // pred_check_branch
      %2439 = sbr.rel (0) target = $region21
    $region20: #{tpu_custom_call.1} parent=1 // pred_region
      %2441 = dma.done [#allocation4], 1024
    $region21: #{tpu_custom_call.1} parent=1 // pred_fallthru
      _
    %2442 = vsyncpa [#allocation3], 1
    %2443 = vsyncpa [#allocation4], 1

</llo_original>
